<compile_context>
chip_gen: v5e
topology: v5e:2x2
jax: 0.10.0
libtpu: 0.0.40
codegen_flags: <defaults>
</compile_context>

<pallas_src>
import math

import jax
import jax.numpy as jnp
from jax import lax
from jax.experimental import pallas as pl
from jax.experimental.pallas import tpu as pltpu


# ----------------------------------------------------------------------------
# One LSTM cell update (gate order i, f, o, g; x-side pre-activation given).
# ----------------------------------------------------------------------------
def _gate_step(pre_x, h_b16, c, wh_b16, H):
    """pre_x: (B,4H) f32  = x@Wx + b_ih + b_hh  (precomputed)
       h_b16: (B,H) bf16, c: (B,H) f32, wh_b16: (H,4H) bf16."""
    pre = pre_x + jnp.dot(h_b16, wh_b16, preferred_element_type=jnp.float32)
    ifo = jax.nn.sigmoid(pre[:, :3 * H])          # i, f, o in one EUP pass
    g = jnp.tanh(pre[:, 3 * H:])
    i_g = ifo[:, :H]
    f_g = ifo[:, H:2 * H]
    o_g = ifo[:, 2 * H:]
    c_new = f_g * c + i_g * g
    h_new = o_g * jnp.tanh(c_new)
    return h_new, c_new


# ----------------------------------------------------------------------------
# Pallas kernel: multi-layer LSTM recurrence + Linear over the time axis.
# ----------------------------------------------------------------------------
def _lstm_linear_kernel(data_ref,   # (T*B, H)   f32  time-major rows (t major, b minor)
                        wx32_ref,   # (L, H, 4H) f32  fused x->gate weights (precompute)
                        wxb_ref,    # (L, H, 4H) bf16 fused x->gate weights (per-step)
                        whb_ref,    # (L, H, 4H) bf16 fused h->gate weights
                        b_ref,      # (L, 1, 4H) f32  combined gate bias (b_ih + b_hh)
                        wlin_ref,   # (T, OP)    f32  Linear weight W.T, lane padded
                        blin_ref,   # (1, OP)    f32  Linear bias, lane padded
                        out_ref,    # (B, H, OP) f32  output (pre final slice/transpose)
                        xp_ref,     # scratch (T*B, 4H) f32: layer-0 x-side pre-acts
                        seq_ref):   # scratch (T, B, H) f32: last-layer hidden sequence
    T, B, H = seq_ref.shape
    L = whb_ref.shape[0]
    G = 4 * H
    U = 4 if T % 4 == 0 else (2 if T % 2 == 0 else 1)   # unroll / wavefront lag
    nblk = T // U

    zeros_b16 = jnp.zeros((B, H), jnp.bfloat16)
    zeros_f32 = jnp.zeros((B, H), jnp.float32)

    # ---- Layer-0 x-side pre-activation hoisted out of the recurrence:
    # one (T*B, H) @ (H, 4H) matmul + bias, written once to VMEM. ----
    xp_ref[...] = (jnp.dot(data_ref[...], wx32_ref[0],
                           preferred_element_type=jnp.float32) + b_ref[0])

    wh0 = whb_ref[0]                                   # (H, 4H) bf16, hoisted

    if L == 2:
        # ------------------------------------------------------------------
        # Wavefront: layer 1 trails layer 0 by U timesteps.  Both recurrence
        # chains live in the same unrolled loop body and interleave in the
        # VLIW bundles; layer-0 h is passed through registers (hist tuple).
        # ------------------------------------------------------------------
        wx1 = wxb_ref[1]                               # (H, 4H) bf16
        wh1 = whb_ref[1]                               # (H, 4H) bf16
        bias1 = jnp.broadcast_to(b_ref[1], (B, G))     # hoisted broadcast

        def l1_step(x1b, h1b, c1):
            prex = (jnp.dot(x1b, wx1, preferred_element_type=jnp.float32)
                    + bias1)
            h1f, c1 = _gate_step(prex, h1b, c1, wh1, H)
            return h1f, h1f.astype(jnp.bfloat16), c1

        # prologue: layer 0, block 0 (timesteps 0..U-1)
        xp_blk0 = xp_ref[pl.ds(0, U * B), :]           # (U*B, 4H) f32
        h0b, c0 = zeros_b16, zeros_f32
        hist = []
        for u in range(U):
            h0f, c0 = _gate_step(xp_blk0[u * B:(u + 1) * B, :], h0b, c0, wh0, H)
            h0b = h0f.astype(jnp.bfloat16)
            hist.append(h0b)
        hist = tuple(hist)

        def body(tt, carry):
            h0b, c0, h1b, c1, hist = carry
            base = tt * U
            row0 = pl.multiple_of(base * B, U * B)
            xp_blk = xp_ref[pl.ds(row0, U * B), :]     # one aligned block load
            new_hist = []
            for u in range(U):
                # layer 0 @ timestep base + u
                h0f, c0 = _gate_step(xp_blk[u * B:(u + 1) * B, :],
                                     h0b, c0, wh0, H)
                h0b = h0f.astype(jnp.bfloat16)
                new_hist.append(h0b)
                # layer 1 @ timestep base + u - U (input = layer-0 h, prev block)
                h1f, h1b, c1 = l1_step(hist[u], h1b, c1)
                seq_ref[base - U + u] = h1f
            return (h0b, c0, h1b, c1, tuple(new_hist))

        carry = lax.fori_loop(1, nblk, body,
                              (h0b, c0, zeros_b16, zeros_f32, hist))
        h0b, c0, h1b, c1, hist = carry

        # epilogue: layer 1 for the last U timesteps
        for u in range(U):
            h1f, h1b, c1 = l1_step(hist[u], h1b, c1)
            seq_ref[T - U + u] = h1f
    else:
        # ------------------------------------------------------------------
        # Sequential fallback for L != 2 (layer 0 still uses the hoisted
        # x-side pre-activation; deeper layers run the classic per-step form).
        # ------------------------------------------------------------------
        def body0(tt, carry):
            hb, c = carry
            row0 = pl.multiple_of(tt * U * B, U * B)
            xp_blk = xp_ref[pl.ds(row0, U * B), :]
            for u in range(U):
                hf, c = _gate_step(xp_blk[u * B:(u + 1) * B, :], hb, c, wh0, H)
                seq_ref[tt * U + u] = hf
                hb = hf.astype(jnp.bfloat16)
            return (hb, c)

        lax.fori_loop(0, nblk, body0, (zeros_b16, zeros_f32))

        for layer in range(1, L):
            wx_l = wxb_ref[layer]
            wh_l = whb_ref[layer]
            bias_l = jnp.broadcast_to(b_ref[layer], (B, G))

            def body_l(tt, carry, wx_l=wx_l, wh_l=wh_l, bias_l=bias_l):
                hb, c = carry
                for u in range(U):
                    t = tt * U + u
                    xb = seq_ref[t].astype(jnp.bfloat16)
                    prex = (jnp.dot(xb, wx_l,
                                    preferred_element_type=jnp.float32)
                            + bias_l)
                    hf, c = _gate_step(prex, hb, c, wh_l, H)
                    seq_ref[t] = hf
                    hb = hf.astype(jnp.bfloat16)
                return (hb, c)

            lax.fori_loop(0, nblk, body_l, (zeros_b16, zeros_f32))

    # ---- Linear(480, 120) applied over the time axis (lanes padded to OP):
    #   out[b, h, o] = sum_t seq[t, b, h] * wlin[t, o] + blin[o]
    wlin = wlin_ref[...]            # (T, OP)
    blin = blin_ref[...]            # (1, OP)
    for b in range(B):              # static python loop over the (small) batch
        xb = seq_ref[:, b, :]       # (T, H)
        rb = lax.dot_general(xb, wlin,
                             dimension_numbers=(((0,), (0,)), ((), ())),
                             preferred_element_type=jnp.float32)   # (H, OP)
        out_ref[b] = rb + blin      # lane-dense store (OP is a multiple of 128)


# ----------------------------------------------------------------------------
# Wrapper: parameter repacking + pallas_call.
# ----------------------------------------------------------------------------
def _round_up(x, m):
    return (x + m - 1) // m * m


@jax.jit
def mylstm_forward(data, params):
    """data: (B, T, I) float32 (batch_first, like the PyTorch module).
    Returns (B, 120, I), matching myLSTM.forward.  Requires T == 480."""
    W_ih, W_hh, b_ih, b_hh, W_lin, b_lin = params
    B, T, I = data.shape
    L = W_ih.shape[0]
    H = I                      # nn.LSTM(hidden_size=input_dim)
    O = W_lin.shape[0]         # 120
    OP = _round_up(O, 128)     # pad output lanes to 128 for unmasked stores

    # Repack weights (glue, plain JAX). PyTorch gate order (i,f,g,o) -> (i,f,o,g),
    # fused per side into (in_dim, 4H) so gate matmuls are plain x @ W.
    order = jnp.array([0, 1, 3, 2])
    wx = jnp.transpose(W_ih.reshape(L, 4, H, I)[:, order],
                       (0, 3, 1, 2)).reshape(L, I, 4 * H).astype(jnp.float32)
    wh = jnp.transpose(W_hh.reshape(L, 4, H, H)[:, order],
                       (0, 3, 1, 2)).reshape(L, H, 4 * H).astype(jnp.float32)
    bias = (b_ih + b_hh).reshape(L, 4, H)[:, order].reshape(
        L, 1, 4 * H).astype(jnp.float32)                                 # (L,1,4H)
    wlin_k = jnp.zeros((T, OP), jnp.float32).at[:, :O].set(
        W_lin.T.astype(jnp.float32))                                     # (T, OP)
    blin_k = jnp.zeros((1, OP), jnp.float32).at[:, :O].set(
        b_lin.astype(jnp.float32))                                       # (1, OP)
    # time-major, batch-minor rows: row t*B + b  ==  data[b, t, :]
    data_k = jnp.transpose(data, (1, 0, 2)).reshape(T * B, I).astype(jnp.float32)

    vmem = pl.BlockSpec(memory_space=pltpu.MemorySpace.VMEM)
    out = pl.pallas_call(
        _lstm_linear_kernel,
        out_shape=jax.ShapeDtypeStruct((B, H, OP), jnp.float32),
        in_specs=[vmem] * 7,
        out_specs=vmem,
        scratch_shapes=[
            pltpu.VMEM((T * B, 4 * H), jnp.float32),   # layer-0 x-side pre-acts
            pltpu.VMEM((T, B, H), jnp.float32),        # last-layer hidden sequence
        ],
    )(data_k, wx, wx.astype(jnp.bfloat16), wh.astype(jnp.bfloat16),
      bias, wlin_k, blin_k)

    # (B, H=I, OP) -> drop padding -> (B, 120, I), matching final .transpose(1, 2).
    return jnp.swapaxes(out[:, :, :O], 1, 2)


# ----------------------------------------------------------------------------
# Pure-JAX reference (mirrors the PyTorch forward) for a sanity check.
# ----------------------------------------------------------------------------
def forward_ref(data, params):
    W_ih, W_hh, b_ih, b_hh, W_lin, b_lin = params
    B, T, I = data.shape
    L = W_ih.shape[0]
    x = data
    for l in range(L):
        h0 = jnp.zeros((B, I), jnp.float32)
        c0 = jnp.zeros((B, I), jnp.float32)

        def step(carry, x_t, l=l):
            h, c = carry
            gates = (jnp.dot(x_t, W_ih[l].T, precision=lax.Precision.HIGHEST)
                     + b_ih[l]
                     + jnp.dot(h, W_hh[l].T, precision=lax.Precision.HIGHEST)
                     + b_hh[l])
            i_g = jax.nn.sigmoid(gates[:, 0 * I:1 * I])
            f_g = jax.nn.sigmoid(gates[:, 1 * I:2 * I])
            g_g = jnp.tanh(gates[:, 2 * I:3 * I])
            o_g = jax.nn.sigmoid(gates[:, 3 * I:4 * I])
            c = f_g * c + i_g * g_g
            h = o_g * jnp.tanh(c)
            return (h, c), h

        _, ys = lax.scan(step, (h0, c0), jnp.swapaxes(x, 0, 1))
        x = jnp.swapaxes(ys, 0, 1)                       # (B, T, I)
    out = jnp.swapaxes(x, 1, 2)                          # (B, I, T)
    out = jnp.dot(out, W_lin.T, precision=lax.Precision.HIGHEST) + b_lin
    return jnp.swapaxes(out, 1, 2)                       # (B, 120, I)


# ----------------------------------------------------------------------------
# Deterministic parameter init (uniform(-1/sqrt(fan), 1/sqrt(fan)), like torch).
# ----------------------------------------------------------------------------
def init_params(key, input_dim, num_layers, lin_in=480, lin_out=120):
    H = input_dim
    k = 1.0 / jnp.sqrt(jnp.float32(H))
    keys = jax.random.split(key, 6)
    W_ih = jax.random.uniform(keys[0], (num_layers, 4 * H, input_dim),
                              jnp.float32, -k, k)
    W_hh = jax.random.uniform(keys[1], (num_layers, 4 * H, H),
                              jnp.float32, -k, k)
    b_ih = jax.random.uniform(keys[2], (num_layers, 4 * H), jnp.float32, -k, k)
    b_hh = jax.random.uniform(keys[3], (num_layers, 4 * H), jnp.float32, -k, k)
    kl = 1.0 / jnp.sqrt(jnp.float32(lin_in))
    W_lin = jax.random.uniform(keys[4], (lin_out, lin_in), jnp.float32, -kl, kl)
    b_lin = jax.random.uniform(keys[5], (lin_out,), jnp.float32, -kl, kl)
    return (W_ih, W_hh, b_ih, b_hh, W_lin, b_lin)


if __name__ == "__main__":
    # Shapes implied by the module: seq length must be 480 (Linear(480, 120)).
    B, T, INPUT_DIM, NUM_LAYERS = 2, 480, 8, 2
    HIDDEN_DIM = 32  # stored by the module but unused in its forward pass

    key = jax.random.PRNGKey(0)
    k_data, k_params = jax.random.split(key)
    data = jax.random.normal(k_data, (B, T, INPUT_DIM), jnp.float32)
    params = init_params(k_params, INPUT_DIM, NUM_LAYERS)

    out = jax.block_until_ready(mylstm_forward(data, params))
    assert out.shape == (B, 120, INPUT_DIM), out.shape

    ref = jax.block_until_ready(forward_ref(data, params))
    max_err = float(jnp.max(jnp.abs(out - ref)))
    # Recurrent matmuls use bf16 operands (f32 accumulate); allow a small slack
    # over the f32-HIGHEST reference.  Real bugs show up as errors >> 0.1.
    if not (max_err < 2e-2):
        raise AssertionError(f"kernel/reference mismatch, max abs err {max_err}")

    print("KERNEL_OK")
</pallas_src>

<mosaic_0001>
module attributes {stable_mosaic.version = 11 : i64} {
  func.func @_lstm_linear_kernel(%arg0: memref<960x8xf32, #tpu.memory_space<vmem>>, %arg1: memref<2x8x32xf32, #tpu.memory_space<vmem>>, %arg2: memref<2x8x32xbf16, #tpu.memory_space<vmem>>, %arg3: memref<2x8x32xbf16, #tpu.memory_space<vmem>>, %arg4: memref<2x1x32xf32, #tpu.memory_space<vmem>>, %arg5: memref<480x128xf32, #tpu.memory_space<vmem>>, %arg6: memref<1x128xf32, #tpu.memory_space<vmem>>, %arg7: memref<2x8x128xf32, #tpu.memory_space<vmem>>, %arg8: memref<960x32xf32, #tpu.memory_space<vmem>>, %arg9: memref<480x2x8xf32, #tpu.memory_space<vmem>>) attributes {dimension_semantics = [], scalar_prefetch = 0 : i64, scratch_operands = 2 : i64, tpu.core_type = #tpu.core_type<tc>} {
    %cst = arith.constant 0.000000e+00 : bf16
    %0 = vector.broadcast %cst : bf16 to vector<2x8xbf16>
    %cst_0 = arith.constant 0.000000e+00 : f32
    %1 = vector.broadcast %cst_0 : f32 to vector<2x8xf32>
    %c0 = arith.constant 0 : index
    %c0_1 = arith.constant 0 : index
    %2 = vector.load %arg0[%c0, %c0_1] : memref<960x8xf32, #tpu.memory_space<vmem>>, vector<960x8xf32>
    %c0_2 = arith.constant 0 : index
    %c0_3 = arith.constant 0 : index
    %c0_4 = arith.constant 0 : index
    %3 = vector.load %arg1[%c0_2, %c0_3, %c0_4] : memref<2x8x32xf32, #tpu.memory_space<vmem>>, vector<1x8x32xf32>
    %4 = vector.shape_cast %3 : vector<1x8x32xf32> to vector<8x32xf32>
    %cst_5 = arith.constant dense<0.000000e+00> : vector<960x32xf32>
    %5 = tpu.matmul %2, %4, %cst_5 {dimension_numbers = #tpu.dot_dimension_numbers<[1], [0], [0], [1], [0, 0, 1, 1], [], []>} : vector<960x8xf32>, vector<8x32xf32>, vector<960x32xf32> -> vector<960x32xf32>
    %c0_6 = arith.constant 0 : index
    %c0_7 = arith.constant 0 : index
    %c0_8 = arith.constant 0 : index
    %6 = vector.load %arg4[%c0_6, %c0_7, %c0_8] : memref<2x1x32xf32, #tpu.memory_space<vmem>>, vector<1x1x32xf32>
    %7 = vector.shape_cast %6 : vector<1x1x32xf32> to vector<1x32xf32>
    %8 = vector.broadcast %7 : vector<1x32xf32> to vector<960x32xf32>
    %9 = arith.addf %5, %8 : vector<960x32xf32>
    %c0_9 = arith.constant 0 : index
    %c0_10 = arith.constant 0 : index
    %10 = vector.load %arg8[%c0_9, %c0_10] : memref<960x32xf32, #tpu.memory_space<vmem>>, vector<960x32xf32>
    tpu.vector_store %arg8[%c0_9, %c0_10], %9 {strides = array<i32>} : memref<960x32xf32, #tpu.memory_space<vmem>>, vector<960x32xf32>,
    %c0_11 = arith.constant 0 : index
    %c0_12 = arith.constant 0 : index
    %c0_13 = arith.constant 0 : index
    %11 = vector.load %arg3[%c0_11, %c0_12, %c0_13] : memref<2x8x32xbf16, #tpu.memory_space<vmem>>, vector<1x8x32xbf16>
    %12 = vector.shape_cast %11 : vector<1x8x32xbf16> to vector<8x32xbf16>
    %c1 = arith.constant 1 : index
    %c0_14 = arith.constant 0 : index
    %c0_15 = arith.constant 0 : index
    %13 = vector.load %arg2[%c1, %c0_14, %c0_15] : memref<2x8x32xbf16, #tpu.memory_space<vmem>>, vector<1x8x32xbf16>
    %14 = vector.shape_cast %13 : vector<1x8x32xbf16> to vector<8x32xbf16>
    %c1_16 = arith.constant 1 : index
    %c0_17 = arith.constant 0 : index
    %c0_18 = arith.constant 0 : index
    %15 = vector.load %arg3[%c1_16, %c0_17, %c0_18] : memref<2x8x32xbf16, #tpu.memory_space<vmem>>, vector<1x8x32xbf16>
    %16 = vector.shape_cast %15 : vector<1x8x32xbf16> to vector<8x32xbf16>
    %c1_19 = arith.constant 1 : index
    %c0_20 = arith.constant 0 : index
    %c0_21 = arith.constant 0 : index
    %17 = vector.load %arg4[%c1_19, %c0_20, %c0_21] : memref<2x1x32xf32, #tpu.memory_space<vmem>>, vector<1x1x32xf32>
    %18 = vector.shape_cast %17 : vector<1x1x32xf32> to vector<1x32xf32>
    %19 = vector.shape_cast %18 : vector<1x32xf32> to vector<1x32xf32>
    %20 = vector.broadcast %19 : vector<1x32xf32> to vector<2x32xf32>
    %c0_22 = arith.constant 0 : index
    %c0_23 = arith.constant 0 : index
    %21 = vector.load %arg8[%c0_22, %c0_23] : memref<960x32xf32, #tpu.memory_space<vmem>>, vector<8x32xf32>
    %22 = vector.extract_strided_slice %21 {offsets = [0, 0], sizes = [2, 32], strides = [1, 1]} : vector<8x32xf32> to vector<2x32xf32>
    %cst_24 = arith.constant dense<0.000000e+00> : vector<2x32xf32>
    %23 = tpu.matmul %0, %12, %cst_24 {dimension_numbers = #tpu.dot_dimension_numbers<[1], [0], [0], [1], [0, 0, 1, 1], [], []>} : vector<2x8xbf16>, vector<8x32xbf16>, vector<2x32xf32> -> vector<2x32xf32>
    %24 = arith.addf %22, %23 : vector<2x32xf32>
    %25 = vector.extract_strided_slice %24 {offsets = [0, 0], sizes = [2, 24], strides = [1, 1]} : vector<2x32xf32> to vector<2x24xf32>
    %26 = arith.negf %25 : vector<2x24xf32>
    %27 = math.exp %26 : vector<2x24xf32>
    %cst_25 = arith.constant 1.000000e+00 : f32
    %28 = vector.broadcast %cst_25 : f32 to vector<2x24xf32>
    %29 = arith.addf %28, %27 : vector<2x24xf32>
    %30 = arith.divf %28, %29 : vector<2x24xf32>
    %31 = vector.extract_strided_slice %24 {offsets = [0, 24], sizes = [2, 8], strides = [1, 1]} : vector<2x32xf32> to vector<2x8xf32>
    %32 = math.tanh %31 : vector<2x8xf32>
    %33 = vector.extract_strided_slice %30 {offsets = [0, 0], sizes = [2, 8], strides = [1, 1]} : vector<2x24xf32> to vector<2x8xf32>
    %34 = vector.extract_strided_slice %30 {offsets = [0, 8], sizes = [2, 8], strides = [1, 1]} : vector<2x24xf32> to vector<2x8xf32>
    %35 = vector.extract_strided_slice %30 {offsets = [0, 16], sizes = [2, 8], strides = [1, 1]} : vector<2x24xf32> to vector<2x8xf32>
    %36 = arith.mulf %34, %1 : vector<2x8xf32>
    %37 = arith.mulf %33, %32 : vector<2x8xf32>
    %38 = arith.addf %36, %37 : vector<2x8xf32>
    %39 = math.tanh %38 : vector<2x8xf32>
    %40 = arith.mulf %35, %39 : vector<2x8xf32>
    %41 = arith.truncf %40 : vector<2x8xf32> to vector<2x8xbf16>
    %42 = vector.extract_strided_slice %21 {offsets = [2, 0], sizes = [2, 32], strides = [1, 1]} : vector<8x32xf32> to vector<2x32xf32>
    %cst_26 = arith.constant dense<0.000000e+00> : vector<2x32xf32>
    %43 = tpu.matmul %41, %12, %cst_26 {dimension_numbers = #tpu.dot_dimension_numbers<[1], [0], [0], [1], [0, 0, 1, 1], [], []>} : vector<2x8xbf16>, vector<8x32xbf16>, vector<2x32xf32> -> vector<2x32xf32>
    %44 = arith.addf %42, %43 : vector<2x32xf32>
    %45 = vector.extract_strided_slice %44 {offsets = [0, 0], sizes = [2, 24], strides = [1, 1]} : vector<2x32xf32> to vector<2x24xf32>
    %46 = arith.negf %45 : vector<2x24xf32>
    %47 = math.exp %46 : vector<2x24xf32>
    %cst_27 = arith.constant 1.000000e+00 : f32
    %48 = vector.broadcast %cst_27 : f32 to vector<2x24xf32>
    %49 = arith.addf %48, %47 : vector<2x24xf32>
    %50 = arith.divf %48, %49 : vector<2x24xf32>
    %51 = vector.extract_strided_slice %44 {offsets = [0, 24], sizes = [2, 8], strides = [1, 1]} : vector<2x32xf32> to vector<2x8xf32>
    %52 = math.tanh %51 : vector<2x8xf32>
    %53 = vector.extract_strided_slice %50 {offsets = [0, 0], sizes = [2, 8], strides = [1, 1]} : vector<2x24xf32> to vector<2x8xf32>
    %54 = vector.extract_strided_slice %50 {offsets = [0, 8], sizes = [2, 8], strides = [1, 1]} : vector<2x24xf32> to vector<2x8xf32>
    %55 = vector.extract_strided_slice %50 {offsets = [0, 16], sizes = [2, 8], strides = [1, 1]} : vector<2x24xf32> to vector<2x8xf32>
    %56 = arith.mulf %54, %38 : vector<2x8xf32>
    %57 = arith.mulf %53, %52 : vector<2x8xf32>
    %58 = arith.addf %56, %57 : vector<2x8xf32>
    %59 = math.tanh %58 : vector<2x8xf32>
    %60 = arith.mulf %55, %59 : vector<2x8xf32>
    %61 = arith.truncf %60 : vector<2x8xf32> to vector<2x8xbf16>
    %62 = vector.extract_strided_slice %21 {offsets = [4, 0], sizes = [2, 32], strides = [1, 1]} : vector<8x32xf32> to vector<2x32xf32>
    %cst_28 = arith.constant dense<0.000000e+00> : vector<2x32xf32>
    %63 = tpu.matmul %61, %12, %cst_28 {dimension_numbers = #tpu.dot_dimension_numbers<[1], [0], [0], [1], [0, 0, 1, 1], [], []>} : vector<2x8xbf16>, vector<8x32xbf16>, vector<2x32xf32> -> vector<2x32xf32>
    %64 = arith.addf %62, %63 : vector<2x32xf32>
    %65 = vector.extract_strided_slice %64 {offsets = [0, 0], sizes = [2, 24], strides = [1, 1]} : vector<2x32xf32> to vector<2x24xf32>
    %66 = arith.negf %65 : vector<2x24xf32>
    %67 = math.exp %66 : vector<2x24xf32>
    %cst_29 = arith.constant 1.000000e+00 : f32
    %68 = vector.broadcast %cst_29 : f32 to vector<2x24xf32>
    %69 = arith.addf %68, %67 : vector<2x24xf32>
    %70 = arith.divf %68, %69 : vector<2x24xf32>
    %71 = vector.extract_strided_slice %64 {offsets = [0, 24], sizes = [2, 8], strides = [1, 1]} : vector<2x32xf32> to vector<2x8xf32>
    %72 = math.tanh %71 : vector<2x8xf32>
    %73 = vector.extract_strided_slice %70 {offsets = [0, 0], sizes = [2, 8], strides = [1, 1]} : vector<2x24xf32> to vector<2x8xf32>
    %74 = vector.extract_strided_slice %70 {offsets = [0, 8], sizes = [2, 8], strides = [1, 1]} : vector<2x24xf32> to vector<2x8xf32>
    %75 = vector.extract_strided_slice %70 {offsets = [0, 16], sizes = [2, 8], strides = [1, 1]} : vector<2x24xf32> to vector<2x8xf32>
    %76 = arith.mulf %74, %58 : vector<2x8xf32>
    %77 = arith.mulf %73, %72 : vector<2x8xf32>
    %78 = arith.addf %76, %77 : vector<2x8xf32>
    %79 = math.tanh %78 : vector<2x8xf32>
    %80 = arith.mulf %75, %79 : vector<2x8xf32>
    %81 = arith.truncf %80 : vector<2x8xf32> to vector<2x8xbf16>
    %82 = vector.extract_strided_slice %21 {offsets = [6, 0], sizes = [2, 32], strides = [1, 1]} : vector<8x32xf32> to vector<2x32xf32>
    %cst_30 = arith.constant dense<0.000000e+00> : vector<2x32xf32>
    %83 = tpu.matmul %81, %12, %cst_30 {dimension_numbers = #tpu.dot_dimension_numbers<[1], [0], [0], [1], [0, 0, 1, 1], [], []>} : vector<2x8xbf16>, vector<8x32xbf16>, vector<2x32xf32> -> vector<2x32xf32>
    %84 = arith.addf %82, %83 : vector<2x32xf32>
    %85 = vector.extract_strided_slice %84 {offsets = [0, 0], sizes = [2, 24], strides = [1, 1]} : vector<2x32xf32> to vector<2x24xf32>
    %86 = arith.negf %85 : vector<2x24xf32>
    %87 = math.exp %86 : vector<2x24xf32>
    %cst_31 = arith.constant 1.000000e+00 : f32
    %88 = vector.broadcast %cst_31 : f32 to vector<2x24xf32>
    %89 = arith.addf %88, %87 : vector<2x24xf32>
    %90 = arith.divf %88, %89 : vector<2x24xf32>
    %91 = vector.extract_strided_slice %84 {offsets = [0, 24], sizes = [2, 8], strides = [1, 1]} : vector<2x32xf32> to vector<2x8xf32>
    %92 = math.tanh %91 : vector<2x8xf32>
    %93 = vector.extract_strided_slice %90 {offsets = [0, 0], sizes = [2, 8], strides = [1, 1]} : vector<2x24xf32> to vector<2x8xf32>
    %94 = vector.extract_strided_slice %90 {offsets = [0, 8], sizes = [2, 8], strides = [1, 1]} : vector<2x24xf32> to vector<2x8xf32>
    %95 = vector.extract_strided_slice %90 {offsets = [0, 16], sizes = [2, 8], strides = [1, 1]} : vector<2x24xf32> to vector<2x8xf32>
    %96 = arith.mulf %94, %78 : vector<2x8xf32>
    %97 = arith.mulf %93, %92 : vector<2x8xf32>
    %98 = arith.addf %96, %97 : vector<2x8xf32>
    %99 = math.tanh %98 : vector<2x8xf32>
    %100 = arith.mulf %95, %99 : vector<2x8xf32>
    %101 = arith.truncf %100 : vector<2x8xf32> to vector<2x8xbf16>
    %c1_i32 = arith.constant 1 : i32
    %c119_i32 = arith.constant 119 : i32
    %102 = arith.addi %c1_i32, %c119_i32 : i32
    %c1_i32_32 = arith.constant 1 : i32
    %103:8 = scf.for %arg10 = %c1_i32 to %102 step %c1_i32_32 iter_args(%arg11 = %101, %arg12 = %98, %arg13 = %0, %arg14 = %1, %arg15 = %41, %arg16 = %61, %arg17 = %81, %arg18 = %101) -> (vector<2x8xbf16>, vector<2x8xf32>, vector<2x8xbf16>, vector<2x8xf32>, vector<2x8xbf16>, vector<2x8xbf16>, vector<2x8xbf16>, vector<2x8xbf16>)  : i32 {
      %c4_i32 = arith.constant 4 : i32
      %217 = arith.muli %arg10, %c4_i32 : i32
      %c2_i32 = arith.constant 2 : i32
      %218 = arith.muli %217, %c2_i32 : i32
      %219 = tpu.assume_multiple %218, 8 : i32
      %220 = arith.index_cast %219 : i32 to index
      %c0_72 = arith.constant 0 : index
      %221 = vector.load %arg8[%220, %c0_72] : memref<960x32xf32, #tpu.memory_space<vmem>>, vector<8x32xf32>
      %222 = vector.extract_strided_slice %221 {offsets = [0, 0], sizes = [2, 32], strides = [1, 1]} : vector<8x32xf32> to vector<2x32xf32>
      %cst_73 = arith.constant dense<0.000000e+00> : vector<2x32xf32>
      %223 = tpu.matmul %arg11, %12, %cst_73 {dimension_numbers = #tpu.dot_dimension_numbers<[1], [0], [0], [1], [0, 0, 1, 1], [], []>} : vector<2x8xbf16>, vector<8x32xbf16>, vector<2x32xf32> -> vector<2x32xf32>
      %224 = arith.addf %222, %223 : vector<2x32xf32>
      %225 = vector.extract_strided_slice %224 {offsets = [0, 0], sizes = [2, 24], strides = [1, 1]} : vector<2x32xf32> to vector<2x24xf32>
      %226 = arith.negf %225 : vector<2x24xf32>
      %227 = math.exp %226 : vector<2x24xf32>
      %cst_74 = arith.constant 1.000000e+00 : f32
      %228 = vector.broadcast %cst_74 : f32 to vector<2x24xf32>
      %229 = arith.addf %228, %227 : vector<2x24xf32>
      %230 = arith.divf %228, %229 : vector<2x24xf32>
      %231 = vector.extract_strided_slice %224 {offsets = [0, 24], sizes = [2, 8], strides = [1, 1]} : vector<2x32xf32> to vector<2x8xf32>
      %232 = math.tanh %231 : vector<2x8xf32>
      %233 = vector.extract_strided_slice %230 {offsets = [0, 0], sizes = [2, 8], strides = [1, 1]} : vector<2x24xf32> to vector<2x8xf32>
      %234 = vector.extract_strided_slice %230 {offsets = [0, 8], sizes = [2, 8], strides = [1, 1]} : vector<2x24xf32> to vector<2x8xf32>
      %235 = vector.extract_strided_slice %230 {offsets = [0, 16], sizes = [2, 8], strides = [1, 1]} : vector<2x24xf32> to vector<2x8xf32>
      %236 = arith.mulf %234, %arg12 : vector<2x8xf32>
      %237 = arith.mulf %233, %232 : vector<2x8xf32>
      %238 = arith.addf %236, %237 : vector<2x8xf32>
      %239 = math.tanh %238 : vector<2x8xf32>
      %240 = arith.mulf %235, %239 : vector<2x8xf32>
      %241 = arith.truncf %240 : vector<2x8xf32> to vector<2x8xbf16>
      %cst_75 = arith.constant dense<0.000000e+00> : vector<2x32xf32>
      %242 = tpu.matmul %arg15, %14, %cst_75 {dimension_numbers = #tpu.dot_dimension_numbers<[1], [0], [0], [1], [0, 0, 1, 1], [], []>} : vector<2x8xbf16>, vector<8x32xbf16>, vector<2x32xf32> -> vector<2x32xf32>
      %243 = arith.addf %242, %20 : vector<2x32xf32>
      %cst_76 = arith.constant dense<0.000000e+00> : vector<2x32xf32>
      %244 = tpu.matmul %arg13, %16, %cst_76 {dimension_numbers = #tpu.dot_dimension_numbers<[1], [0], [0], [1], [0, 0, 1, 1], [], []>} : vector<2x8xbf16>, vector<8x32xbf16>, vector<2x32xf32> -> vector<2x32xf32>
      %245 = arith.addf %243, %244 : vector<2x32xf32>
      %246 = vector.extract_strided_slice %245 {offsets = [0, 0], sizes = [2, 24], strides = [1, 1]} : vector<2x32xf32> to vector<2x24xf32>
      %247 = arith.negf %246 : vector<2x24xf32>
      %248 = math.exp %247 : vector<2x24xf32>
      %cst_77 = arith.constant 1.000000e+00 : f32
      %249 = vector.broadcast %cst_77 : f32 to vector<2x24xf32>
      %250 = arith.addf %249, %248 : vector<2x24xf32>
      %251 = arith.divf %249, %250 : vector<2x24xf32>
      %252 = vector.extract_strided_slice %245 {offsets = [0, 24], sizes = [2, 8], strides = [1, 1]} : vector<2x32xf32> to vector<2x8xf32>
      %253 = math.tanh %252 : vector<2x8xf32>
      %254 = vector.extract_strided_slice %251 {offsets = [0, 0], sizes = [2, 8], strides = [1, 1]} : vector<2x24xf32> to vector<2x8xf32>
      %255 = vector.extract_strided_slice %251 {offsets = [0, 8], sizes = [2, 8], strides = [1, 1]} : vector<2x24xf32> to vector<2x8xf32>
      %256 = vector.extract_strided_slice %251 {offsets = [0, 16], sizes = [2, 8], strides = [1, 1]} : vector<2x24xf32> to vector<2x8xf32>
      %257 = arith.mulf %255, %arg14 : vector<2x8xf32>
      %258 = arith.mulf %254, %253 : vector<2x8xf32>
      %259 = arith.addf %257, %258 : vector<2x8xf32>
      %260 = math.tanh %259 : vector<2x8xf32>
      %261 = arith.mulf %256, %260 : vector<2x8xf32>
      %262 = arith.truncf %261 : vector<2x8xf32> to vector<2x8xbf16>
      %c4_i32_78 = arith.constant 4 : i32
      %263 = arith.subi %217, %c4_i32_78 : i32
      %c0_i32 = arith.constant 0 : i32
      %264 = arith.addi %263, %c0_i32 : i32
      %265 = arith.index_cast %264 : i32 to index
      %c0_79 = arith.constant 0 : index
      %c0_80 = arith.constant 0 : index
      %266 = vector.load %arg9[%265, %c0_79, %c0_80] : memref<480x2x8xf32, #tpu.memory_space<vmem>>, vector<1x2x8xf32>
      %267 = vector.shape_cast %266 : vector<1x2x8xf32> to vector<2x8xf32>
      %268 = vector.shape_cast %261 : vector<2x8xf32> to vector<1x2x8xf32>
      tpu.vector_store %arg9[%265, %c0_79, %c0_80], %268 {strides = array<i32>} : memref<480x2x8xf32, #tpu.memory_space<vmem>>, vector<1x2x8xf32>,
      %269 = vector.extract_strided_slice %221 {offsets = [2, 0], sizes = [2, 32], strides = [1, 1]} : vector<8x32xf32> to vector<2x32xf32>
      %cst_81 = arith.constant dense<0.000000e+00> : vector<2x32xf32>
      %270 = tpu.matmul %241, %12, %cst_81 {dimension_numbers = #tpu.dot_dimension_numbers<[1], [0], [0], [1], [0, 0, 1, 1], [], []>} : vector<2x8xbf16>, vector<8x32xbf16>, vector<2x32xf32> -> vector<2x32xf32>
      %271 = arith.addf %269, %270 : vector<2x32xf32>
      %272 = vector.extract_strided_slice %271 {offsets = [0, 0], sizes = [2, 24], strides = [1, 1]} : vector<2x32xf32> to vector<2x24xf32>
      %273 = arith.negf %272 : vector<2x24xf32>
      %274 = math.exp %273 : vector<2x24xf32>
      %cst_82 = arith.constant 1.000000e+00 : f32
      %275 = vector.broadcast %cst_82 : f32 to vector<2x24xf32>
      %276 = arith.addf %275, %274 : vector<2x24xf32>
      %277 = arith.divf %275, %276 : vector<2x24xf32>
      %278 = vector.extract_strided_slice %271 {offsets = [0, 24], sizes = [2, 8], strides = [1, 1]} : vector<2x32xf32> to vector<2x8xf32>
      %279 = math.tanh %278 : vector<2x8xf32>
      %280 = vector.extract_strided_slice %277 {offsets = [0, 0], sizes = [2, 8], strides = [1, 1]} : vector<2x24xf32> to vector<2x8xf32>
      %281 = vector.extract_strided_slice %277 {offsets = [0, 8], sizes = [2, 8], strides = [1, 1]} : vector<2x24xf32> to vector<2x8xf32>
      %282 = vector.extract_strided_slice %277 {offsets = [0, 16], sizes = [2, 8], strides = [1, 1]} : vector<2x24xf32> to vector<2x8xf32>
      %283 = arith.mulf %281, %238 : vector<2x8xf32>
      %284 = arith.mulf %280, %279 : vector<2x8xf32>
      %285 = arith.addf %283, %284 : vector<2x8xf32>
      %286 = math.tanh %285 : vector<2x8xf32>
      %287 = arith.mulf %282, %286 : vector<2x8xf32>
      %288 = arith.truncf %287 : vector<2x8xf32> to vector<2x8xbf16>
      %cst_83 = arith.constant dense<0.000000e+00> : vector<2x32xf32>
      %289 = tpu.matmul %arg16, %14, %cst_83 {dimension_numbers = #tpu.dot_dimension_numbers<[1], [0], [0], [1], [0, 0, 1, 1], [], []>} : vector<2x8xbf16>, vector<8x32xbf16>, vector<2x32xf32> -> vector<2x32xf32>
      %290 = arith.addf %289, %20 : vector<2x32xf32>
      %cst_84 = arith.constant dense<0.000000e+00> : vector<2x32xf32>
      %291 = tpu.matmul %262, %16, %cst_84 {dimension_numbers = #tpu.dot_dimension_numbers<[1], [0], [0], [1], [0, 0, 1, 1], [], []>} : vector<2x8xbf16>, vector<8x32xbf16>, vector<2x32xf32> -> vector<2x32xf32>
      %292 = arith.addf %290, %291 : vector<2x32xf32>
      %293 = vector.extract_strided_slice %292 {offsets = [0, 0], sizes = [2, 24], strides = [1, 1]} : vector<2x32xf32> to vector<2x24xf32>
      %294 = arith.negf %293 : vector<2x24xf32>
      %295 = math.exp %294 : vector<2x24xf32>
      %cst_85 = arith.constant 1.000000e+00 : f32
      %296 = vector.broadcast %cst_85 : f32 to vector<2x24xf32>
      %297 = arith.addf %296, %295 : vector<2x24xf32>
      %298 = arith.divf %296, %297 : vector<2x24xf32>
      %299 = vector.extract_strided_slice %292 {offsets = [0, 24], sizes = [2, 8], strides = [1, 1]} : vector<2x32xf32> to vector<2x8xf32>
      %300 = math.tanh %299 : vector<2x8xf32>
      %301 = vector.extract_strided_slice %298 {offsets = [0, 0], sizes = [2, 8], strides = [1, 1]} : vector<2x24xf32> to vector<2x8xf32>
      %302 = vector.extract_strided_slice %298 {offsets = [0, 8], sizes = [2, 8], strides = [1, 1]} : vector<2x24xf32> to vector<2x8xf32>
      %303 = vector.extract_strided_slice %298 {offsets = [0, 16], sizes = [2, 8], strides = [1, 1]} : vector<2x24xf32> to vector<2x8xf32>
      %304 = arith.mulf %302, %259 : vector<2x8xf32>
      %305 = arith.mulf %301, %300 : vector<2x8xf32>
      %306 = arith.addf %304, %305 : vector<2x8xf32>
      %307 = math.tanh %306 : vector<2x8xf32>
      %308 = arith.mulf %303, %307 : vector<2x8xf32>
      %309 = arith.truncf %308 : vector<2x8xf32> to vector<2x8xbf16>
      %c4_i32_86 = arith.constant 4 : i32
      %310 = arith.subi %217, %c4_i32_86 : i32
      %c1_i32_87 = arith.constant 1 : i32
      %311 = arith.addi %310, %c1_i32_87 : i32
      %312 = arith.index_cast %311 : i32 to index
      %c0_88 = arith.constant 0 : index
      %c0_89 = arith.constant 0 : index
      %313 = vector.load %arg9[%312, %c0_88, %c0_89] : memref<480x2x8xf32, #tpu.memory_space<vmem>>, vector<1x2x8xf32>
      %314 = vector.shape_cast %313 : vector<1x2x8xf32> to vector<2x8xf32>
      %315 = vector.shape_cast %308 : vector<2x8xf32> to vector<1x2x8xf32>
      tpu.vector_store %arg9[%312, %c0_88, %c0_89], %315 {strides = array<i32>} : memref<480x2x8xf32, #tpu.memory_space<vmem>>, vector<1x2x8xf32>,
      %316 = vector.extract_strided_slice %221 {offsets = [4, 0], sizes = [2, 32], strides = [1, 1]} : vector<8x32xf32> to vector<2x32xf32>
      %cst_90 = arith.constant dense<0.000000e+00> : vector<2x32xf32>
      %317 = tpu.matmul %288, %12, %cst_90 {dimension_numbers = #tpu.dot_dimension_numbers<[1], [0], [0], [1], [0, 0, 1, 1], [], []>} : vector<2x8xbf16>, vector<8x32xbf16>, vector<2x32xf32> -> vector<2x32xf32>
      %318 = arith.addf %316, %317 : vector<2x32xf32>
      %319 = vector.extract_strided_slice %318 {offsets = [0, 0], sizes = [2, 24], strides = [1, 1]} : vector<2x32xf32> to vector<2x24xf32>
      %320 = arith.negf %319 : vector<2x24xf32>
      %321 = math.exp %320 : vector<2x24xf32>
      %cst_91 = arith.constant 1.000000e+00 : f32
      %322 = vector.broadcast %cst_91 : f32 to vector<2x24xf32>
      %323 = arith.addf %322, %321 : vector<2x24xf32>
      %324 = arith.divf %322, %323 : vector<2x24xf32>
      %325 = vector.extract_strided_slice %318 {offsets = [0, 24], sizes = [2, 8], strides = [1, 1]} : vector<2x32xf32> to vector<2x8xf32>
      %326 = math.tanh %325 : vector<2x8xf32>
      %327 = vector.extract_strided_slice %324 {offsets = [0, 0], sizes = [2, 8], strides = [1, 1]} : vector<2x24xf32> to vector<2x8xf32>
      %328 = vector.extract_strided_slice %324 {offsets = [0, 8], sizes = [2, 8], strides = [1, 1]} : vector<2x24xf32> to vector<2x8xf32>
      %329 = vector.extract_strided_slice %324 {offsets = [0, 16], sizes = [2, 8], strides = [1, 1]} : vector<2x24xf32> to vector<2x8xf32>
      %330 = arith.mulf %328, %285 : vector<2x8xf32>
      %331 = arith.mulf %327, %326 : vector<2x8xf32>
      %332 = arith.addf %330, %331 : vector<2x8xf32>
      %333 = math.tanh %332 : vector<2x8xf32>
      %334 = arith.mulf %329, %333 : vector<2x8xf32>
      %335 = arith.truncf %334 : vector<2x8xf32> to vector<2x8xbf16>
      %cst_92 = arith.constant dense<0.000000e+00> : vector<2x32xf32>
      %336 = tpu.matmul %arg17, %14, %cst_92 {dimension_numbers = #tpu.dot_dimension_numbers<[1], [0], [0], [1], [0, 0, 1, 1], [], []>} : vector<2x8xbf16>, vector<8x32xbf16>, vector<2x32xf32> -> vector<2x32xf32>
      %337 = arith.addf %336, %20 : vector<2x32xf32>
      %cst_93 = arith.constant dense<0.000000e+00> : vector<2x32xf32>
      %338 = tpu.matmul %309, %16, %cst_93 {dimension_numbers = #tpu.dot_dimension_numbers<[1], [0], [0], [1], [0, 0, 1, 1], [], []>} : vector<2x8xbf16>, vector<8x32xbf16>, vector<2x32xf32> -> vector<2x32xf32>
      %339 = arith.addf %337, %338 : vector<2x32xf32>
      %340 = vector.extract_strided_slice %339 {offsets = [0, 0], sizes = [2, 24], strides = [1, 1]} : vector<2x32xf32> to vector<2x24xf32>
      %341 = arith.negf %340 : vector<2x24xf32>
      %342 = math.exp %341 : vector<2x24xf32>
      %cst_94 = arith.constant 1.000000e+00 : f32
      %343 = vector.broadcast %cst_94 : f32 to vector<2x24xf32>
      %344 = arith.addf %343, %342 : vector<2x24xf32>
      %345 = arith.divf %343, %344 : vector<2x24xf32>
      %346 = vector.extract_strided_slice %339 {offsets = [0, 24], sizes = [2, 8], strides = [1, 1]} : vector<2x32xf32> to vector<2x8xf32>
      %347 = math.tanh %346 : vector<2x8xf32>
      %348 = vector.extract_strided_slice %345 {offsets = [0, 0], sizes = [2, 8], strides = [1, 1]} : vector<2x24xf32> to vector<2x8xf32>
      %349 = vector.extract_strided_slice %345 {offsets = [0, 8], sizes = [2, 8], strides = [1, 1]} : vector<2x24xf32> to vector<2x8xf32>
      %350 = vector.extract_strided_slice %345 {offsets = [0, 16], sizes = [2, 8], strides = [1, 1]} : vector<2x24xf32> to vector<2x8xf32>
      %351 = arith.mulf %349, %306 : vector<2x8xf32>
      %352 = arith.mulf %348, %347 : vector<2x8xf32>
      %353 = arith.addf %351, %352 : vector<2x8xf32>
      %354 = math.tanh %353 : vector<2x8xf32>
      %355 = arith.mulf %350, %354 : vector<2x8xf32>
      %356 = arith.truncf %355 : vector<2x8xf32> to vector<2x8xbf16>
      %c4_i32_95 = arith.constant 4 : i32
      %357 = arith.subi %217, %c4_i32_95 : i32
      %c2_i32_96 = arith.constant 2 : i32
      %358 = arith.addi %357, %c2_i32_96 : i32
      %359 = arith.index_cast %358 : i32 to index
      %c0_97 = arith.constant 0 : index
      %c0_98 = arith.constant 0 : index
      %360 = vector.load %arg9[%359, %c0_97, %c0_98] : memref<480x2x8xf32, #tpu.memory_space<vmem>>, vector<1x2x8xf32>
      %361 = vector.shape_cast %360 : vector<1x2x8xf32> to vector<2x8xf32>
      %362 = vector.shape_cast %355 : vector<2x8xf32> to vector<1x2x8xf32>
      tpu.vector_store %arg9[%359, %c0_97, %c0_98], %362 {strides = array<i32>} : memref<480x2x8xf32, #tpu.memory_space<vmem>>, vector<1x2x8xf32>,
      %363 = vector.extract_strided_slice %221 {offsets = [6, 0], sizes = [2, 32], strides = [1, 1]} : vector<8x32xf32> to vector<2x32xf32>
      %cst_99 = arith.constant dense<0.000000e+00> : vector<2x32xf32>
      %364 = tpu.matmul %335, %12, %cst_99 {dimension_numbers = #tpu.dot_dimension_numbers<[1], [0], [0], [1], [0, 0, 1, 1], [], []>} : vector<2x8xbf16>, vector<8x32xbf16>, vector<2x32xf32> -> vector<2x32xf32>
      %365 = arith.addf %363, %364 : vector<2x32xf32>
      %366 = vector.extract_strided_slice %365 {offsets = [0, 0], sizes = [2, 24], strides = [1, 1]} : vector<2x32xf32> to vector<2x24xf32>
      %367 = arith.negf %366 : vector<2x24xf32>
      %368 = math.exp %367 : vector<2x24xf32>
      %cst_100 = arith.constant 1.000000e+00 : f32
      %369 = vector.broadcast %cst_100 : f32 to vector<2x24xf32>
      %370 = arith.addf %369, %368 : vector<2x24xf32>
      %371 = arith.divf %369, %370 : vector<2x24xf32>
      %372 = vector.extract_strided_slice %365 {offsets = [0, 24], sizes = [2, 8], strides = [1, 1]} : vector<2x32xf32> to vector<2x8xf32>
      %373 = math.tanh %372 : vector<2x8xf32>
      %374 = vector.extract_strided_slice %371 {offsets = [0, 0], sizes = [2, 8], strides = [1, 1]} : vector<2x24xf32> to vector<2x8xf32>
      %375 = vector.extract_strided_slice %371 {offsets = [0, 8], sizes = [2, 8], strides = [1, 1]} : vector<2x24xf32> to vector<2x8xf32>
      %376 = vector.extract_strided_slice %371 {offsets = [0, 16], sizes = [2, 8], strides = [1, 1]} : vector<2x24xf32> to vector<2x8xf32>
      %377 = arith.mulf %375, %332 : vector<2x8xf32>
      %378 = arith.mulf %374, %373 : vector<2x8xf32>
      %379 = arith.addf %377, %378 : vector<2x8xf32>
      %380 = math.tanh %379 : vector<2x8xf32>
      %381 = arith.mulf %376, %380 : vector<2x8xf32>
      %382 = arith.truncf %381 : vector<2x8xf32> to vector<2x8xbf16>
      %cst_101 = arith.constant dense<0.000000e+00> : vector<2x32xf32>
      %383 = tpu.matmul %arg18, %14, %cst_101 {dimension_numbers = #tpu.dot_dimension_numbers<[1], [0], [0], [1], [0, 0, 1, 1], [], []>} : vector<2x8xbf16>, vector<8x32xbf16>, vector<2x32xf32> -> vector<2x32xf32>
      %384 = arith.addf %383, %20 : vector<2x32xf32>
      %cst_102 = arith.constant dense<0.000000e+00> : vector<2x32xf32>
      %385 = tpu.matmul %356, %16, %cst_102 {dimension_numbers = #tpu.dot_dimension_numbers<[1], [0], [0], [1], [0, 0, 1, 1], [], []>} : vector<2x8xbf16>, vector<8x32xbf16>, vector<2x32xf32> -> vector<2x32xf32>
      %386 = arith.addf %384, %385 : vector<2x32xf32>
      %387 = vector.extract_strided_slice %386 {offsets = [0, 0], sizes = [2, 24], strides = [1, 1]} : vector<2x32xf32> to vector<2x24xf32>
      %388 = arith.negf %387 : vector<2x24xf32>
      %389 = math.exp %388 : vector<2x24xf32>
      %cst_103 = arith.constant 1.000000e+00 : f32
      %390 = vector.broadcast %cst_103 : f32 to vector<2x24xf32>
      %391 = arith.addf %390, %389 : vector<2x24xf32>
      %392 = arith.divf %390, %391 : vector<2x24xf32>
      %393 = vector.extract_strided_slice %386 {offsets = [0, 24], sizes = [2, 8], strides = [1, 1]} : vector<2x32xf32> to vector<2x8xf32>
      %394 = math.tanh %393 : vector<2x8xf32>
      %395 = vector.extract_strided_slice %392 {offsets = [0, 0], sizes = [2, 8], strides = [1, 1]} : vector<2x24xf32> to vector<2x8xf32>
      %396 = vector.extract_strided_slice %392 {offsets = [0, 8], sizes = [2, 8], strides = [1, 1]} : vector<2x24xf32> to vector<2x8xf32>
      %397 = vector.extract_strided_slice %392 {offsets = [0, 16], sizes = [2, 8], strides = [1, 1]} : vector<2x24xf32> to vector<2x8xf32>
      %398 = arith.mulf %396, %353 : vector<2x8xf32>
      %399 = arith.mulf %395, %394 : vector<2x8xf32>
      %400 = arith.addf %398, %399 : vector<2x8xf32>
      %401 = math.tanh %400 : vector<2x8xf32>
      %402 = arith.mulf %397, %401 : vector<2x8xf32>
      %403 = arith.truncf %402 : vector<2x8xf32> to vector<2x8xbf16>
      %c4_i32_104 = arith.constant 4 : i32
      %404 = arith.subi %217, %c4_i32_104 : i32
      %c3_i32 = arith.constant 3 : i32
      %405 = arith.addi %404, %c3_i32 : i32
      %406 = arith.index_cast %405 : i32 to index
      %c0_105 = arith.constant 0 : index
      %c0_106 = arith.constant 0 : index
      %407 = vector.load %arg9[%406, %c0_105, %c0_106] : memref<480x2x8xf32, #tpu.memory_space<vmem>>, vector<1x2x8xf32>
      %408 = vector.shape_cast %407 : vector<1x2x8xf32> to vector<2x8xf32>
      %409 = vector.shape_cast %402 : vector<2x8xf32> to vector<1x2x8xf32>
      tpu.vector_store %arg9[%406, %c0_105, %c0_106], %409 {strides = array<i32>} : memref<480x2x8xf32, #tpu.memory_space<vmem>>, vector<1x2x8xf32>,
      scf.yield %382, %379, %403, %400, %241, %288, %335, %382 : vector<2x8xbf16>, vector<2x8xf32>, vector<2x8xbf16>, vector<2x8xf32>, vector<2x8xbf16>, vector<2x8xbf16>, vector<2x8xbf16>, vector<2x8xbf16>
    }
    %c119_i32_33 = arith.constant 119 : i32
    %cst_34 = arith.constant dense<0.000000e+00> : vector<2x32xf32>
    %104 = tpu.matmul %103#4, %14, %cst_34 {dimension_numbers = #tpu.dot_dimension_numbers<[1], [0], [0], [1], [0, 0, 1, 1], [], []>} : vector<2x8xbf16>, vector<8x32xbf16>, vector<2x32xf32> -> vector<2x32xf32>
    %105 = arith.addf %104, %20 : vector<2x32xf32>
    %cst_35 = arith.constant dense<0.000000e+00> : vector<2x32xf32>
    %106 = tpu.matmul %103#2, %16, %cst_35 {dimension_numbers = #tpu.dot_dimension_numbers<[1], [0], [0], [1], [0, 0, 1, 1], [], []>} : vector<2x8xbf16>, vector<8x32xbf16>, vector<2x32xf32> -> vector<2x32xf32>
    %107 = arith.addf %105, %106 : vector<2x32xf32>
    %108 = vector.extract_strided_slice %107 {offsets = [0, 0], sizes = [2, 24], strides = [1, 1]} : vector<2x32xf32> to vector<2x24xf32>
    %109 = arith.negf %108 : vector<2x24xf32>
    %110 = math.exp %109 : vector<2x24xf32>
    %cst_36 = arith.constant 1.000000e+00 : f32
    %111 = vector.broadcast %cst_36 : f32 to vector<2x24xf32>
    %112 = arith.addf %111, %110 : vector<2x24xf32>
    %113 = arith.divf %111, %112 : vector<2x24xf32>
    %114 = vector.extract_strided_slice %107 {offsets = [0, 24], sizes = [2, 8], strides = [1, 1]} : vector<2x32xf32> to vector<2x8xf32>
    %115 = math.tanh %114 : vector<2x8xf32>
    %116 = vector.extract_strided_slice %113 {offsets = [0, 0], sizes = [2, 8], strides = [1, 1]} : vector<2x24xf32> to vector<2x8xf32>
    %117 = vector.extract_strided_slice %113 {offsets = [0, 8], sizes = [2, 8], strides = [1, 1]} : vector<2x24xf32> to vector<2x8xf32>
    %118 = vector.extract_strided_slice %113 {offsets = [0, 16], sizes = [2, 8], strides = [1, 1]} : vector<2x24xf32> to vector<2x8xf32>
    %119 = arith.mulf %117, %103#3 : vector<2x8xf32>
    %120 = arith.mulf %116, %115 : vector<2x8xf32>
    %121 = arith.addf %119, %120 : vector<2x8xf32>
    %122 = math.tanh %121 : vector<2x8xf32>
    %123 = arith.mulf %118, %122 : vector<2x8xf32>
    %124 = arith.truncf %123 : vector<2x8xf32> to vector<2x8xbf16>
    %c476 = arith.constant 476 : index
    %c0_37 = arith.constant 0 : index
    %c0_38 = arith.constant 0 : index
    %125 = vector.load %arg9[%c476, %c0_37, %c0_38] : memref<480x2x8xf32, #tpu.memory_space<vmem>>, vector<1x2x8xf32>
    %126 = vector.shape_cast %125 : vector<1x2x8xf32> to vector<2x8xf32>
    %127 = vector.shape_cast %123 : vector<2x8xf32> to vector<1x2x8xf32>
    tpu.vector_store %arg9[%c476, %c0_37, %c0_38], %127 {strides = array<i32>} : memref<480x2x8xf32, #tpu.memory_space<vmem>>, vector<1x2x8xf32>,
    %cst_39 = arith.constant dense<0.000000e+00> : vector<2x32xf32>
    %128 = tpu.matmul %103#5, %14, %cst_39 {dimension_numbers = #tpu.dot_dimension_numbers<[1], [0], [0], [1], [0, 0, 1, 1], [], []>} : vector<2x8xbf16>, vector<8x32xbf16>, vector<2x32xf32> -> vector<2x32xf32>
    %129 = arith.addf %128, %20 : vector<2x32xf32>
    %cst_40 = arith.constant dense<0.000000e+00> : vector<2x32xf32>
    %130 = tpu.matmul %124, %16, %cst_40 {dimension_numbers = #tpu.dot_dimension_numbers<[1], [0], [0], [1], [0, 0, 1, 1], [], []>} : vector<2x8xbf16>, vector<8x32xbf16>, vector<2x32xf32> -> vector<2x32xf32>
    %131 = arith.addf %129, %130 : vector<2x32xf32>
    %132 = vector.extract_strided_slice %131 {offsets = [0, 0], sizes = [2, 24], strides = [1, 1]} : vector<2x32xf32> to vector<2x24xf32>
    %133 = arith.negf %132 : vector<2x24xf32>
    %134 = math.exp %133 : vector<2x24xf32>
    %cst_41 = arith.constant 1.000000e+00 : f32
    %135 = vector.broadcast %cst_41 : f32 to vector<2x24xf32>
    %136 = arith.addf %135, %134 : vector<2x24xf32>
    %137 = arith.divf %135, %136 : vector<2x24xf32>
    %138 = vector.extract_strided_slice %131 {offsets = [0, 24], sizes = [2, 8], strides = [1, 1]} : vector<2x32xf32> to vector<2x8xf32>
    %139 = math.tanh %138 : vector<2x8xf32>
    %140 = vector.extract_strided_slice %137 {offsets = [0, 0], sizes = [2, 8], strides = [1, 1]} : vector<2x24xf32> to vector<2x8xf32>
    %141 = vector.extract_strided_slice %137 {offsets = [0, 8], sizes = [2, 8], strides = [1, 1]} : vector<2x24xf32> to vector<2x8xf32>
    %142 = vector.extract_strided_slice %137 {offsets = [0, 16], sizes = [2, 8], strides = [1, 1]} : vector<2x24xf32> to vector<2x8xf32>
    %143 = arith.mulf %141, %121 : vector<2x8xf32>
    %144 = arith.mulf %140, %139 : vector<2x8xf32>
    %145 = arith.addf %143, %144 : vector<2x8xf32>
    %146 = math.tanh %145 : vector<2x8xf32>
    %147 = arith.mulf %142, %146 : vector<2x8xf32>
    %148 = arith.truncf %147 : vector<2x8xf32> to vector<2x8xbf16>
    %c477 = arith.constant 477 : index
    %c0_42 = arith.constant 0 : index
    %c0_43 = arith.constant 0 : index
    %149 = vector.load %arg9[%c477, %c0_42, %c0_43] : memref<480x2x8xf32, #tpu.memory_space<vmem>>, vector<1x2x8xf32>
    %150 = vector.shape_cast %149 : vector<1x2x8xf32> to vector<2x8xf32>
    %151 = vector.shape_cast %147 : vector<2x8xf32> to vector<1x2x8xf32>
    tpu.vector_store %arg9[%c477, %c0_42, %c0_43], %151 {strides = array<i32>} : memref<480x2x8xf32, #tpu.memory_space<vmem>>, vector<1x2x8xf32>,
    %cst_44 = arith.constant dense<0.000000e+00> : vector<2x32xf32>
    %152 = tpu.matmul %103#6, %14, %cst_44 {dimension_numbers = #tpu.dot_dimension_numbers<[1], [0], [0], [1], [0, 0, 1, 1], [], []>} : vector<2x8xbf16>, vector<8x32xbf16>, vector<2x32xf32> -> vector<2x32xf32>
    %153 = arith.addf %152, %20 : vector<2x32xf32>
    %cst_45 = arith.constant dense<0.000000e+00> : vector<2x32xf32>
    %154 = tpu.matmul %148, %16, %cst_45 {dimension_numbers = #tpu.dot_dimension_numbers<[1], [0], [0], [1], [0, 0, 1, 1], [], []>} : vector<2x8xbf16>, vector<8x32xbf16>, vector<2x32xf32> -> vector<2x32xf32>
    %155 = arith.addf %153, %154 : vector<2x32xf32>
    %156 = vector.extract_strided_slice %155 {offsets = [0, 0], sizes = [2, 24], strides = [1, 1]} : vector<2x32xf32> to vector<2x24xf32>
    %157 = arith.negf %156 : vector<2x24xf32>
    %158 = math.exp %157 : vector<2x24xf32>
    %cst_46 = arith.constant 1.000000e+00 : f32
    %159 = vector.broadcast %cst_46 : f32 to vector<2x24xf32>
    %160 = arith.addf %159, %158 : vector<2x24xf32>
    %161 = arith.divf %159, %160 : vector<2x24xf32>
    %162 = vector.extract_strided_slice %155 {offsets = [0, 24], sizes = [2, 8], strides = [1, 1]} : vector<2x32xf32> to vector<2x8xf32>
    %163 = math.tanh %162 : vector<2x8xf32>
    %164 = vector.extract_strided_slice %161 {offsets = [0, 0], sizes = [2, 8], strides = [1, 1]} : vector<2x24xf32> to vector<2x8xf32>
    %165 = vector.extract_strided_slice %161 {offsets = [0, 8], sizes = [2, 8], strides = [1, 1]} : vector<2x24xf32> to vector<2x8xf32>
    %166 = vector.extract_strided_slice %161 {offsets = [0, 16], sizes = [2, 8], strides = [1, 1]} : vector<2x24xf32> to vector<2x8xf32>
    %167 = arith.mulf %165, %145 : vector<2x8xf32>
    %168 = arith.mulf %164, %163 : vector<2x8xf32>
    %169 = arith.addf %167, %168 : vector<2x8xf32>
    %170 = math.tanh %169 : vector<2x8xf32>
    %171 = arith.mulf %166, %170 : vector<2x8xf32>
    %172 = arith.truncf %171 : vector<2x8xf32> to vector<2x8xbf16>
    %c478 = arith.constant 478 : index
    %c0_47 = arith.constant 0 : index
    %c0_48 = arith.constant 0 : index
    %173 = vector.load %arg9[%c478, %c0_47, %c0_48] : memref<480x2x8xf32, #tpu.memory_space<vmem>>, vector<1x2x8xf32>
    %174 = vector.shape_cast %173 : vector<1x2x8xf32> to vector<2x8xf32>
    %175 = vector.shape_cast %171 : vector<2x8xf32> to vector<1x2x8xf32>
    tpu.vector_store %arg9[%c478, %c0_47, %c0_48], %175 {strides = array<i32>} : memref<480x2x8xf32, #tpu.memory_space<vmem>>, vector<1x2x8xf32>,
    %cst_49 = arith.constant dense<0.000000e+00> : vector<2x32xf32>
    %176 = tpu.matmul %103#7, %14, %cst_49 {dimension_numbers = #tpu.dot_dimension_numbers<[1], [0], [0], [1], [0, 0, 1, 1], [], []>} : vector<2x8xbf16>, vector<8x32xbf16>, vector<2x32xf32> -> vector<2x32xf32>
    %177 = arith.addf %176, %20 : vector<2x32xf32>
    %cst_50 = arith.constant dense<0.000000e+00> : vector<2x32xf32>
    %178 = tpu.matmul %172, %16, %cst_50 {dimension_numbers = #tpu.dot_dimension_numbers<[1], [0], [0], [1], [0, 0, 1, 1], [], []>} : vector<2x8xbf16>, vector<8x32xbf16>, vector<2x32xf32> -> vector<2x32xf32>
    %179 = arith.addf %177, %178 : vector<2x32xf32>
    %180 = vector.extract_strided_slice %179 {offsets = [0, 0], sizes = [2, 24], strides = [1, 1]} : vector<2x32xf32> to vector<2x24xf32>
    %181 = arith.negf %180 : vector<2x24xf32>
    %182 = math.exp %181 : vector<2x24xf32>
    %cst_51 = arith.constant 1.000000e+00 : f32
    %183 = vector.broadcast %cst_51 : f32 to vector<2x24xf32>
    %184 = arith.addf %183, %182 : vector<2x24xf32>
    %185 = arith.divf %183, %184 : vector<2x24xf32>
    %186 = vector.extract_strided_slice %179 {offsets = [0, 24], sizes = [2, 8], strides = [1, 1]} : vector<2x32xf32> to vector<2x8xf32>
    %187 = math.tanh %186 : vector<2x8xf32>
    %188 = vector.extract_strided_slice %185 {offsets = [0, 0], sizes = [2, 8], strides = [1, 1]} : vector<2x24xf32> to vector<2x8xf32>
    %189 = vector.extract_strided_slice %185 {offsets = [0, 8], sizes = [2, 8], strides = [1, 1]} : vector<2x24xf32> to vector<2x8xf32>
    %190 = vector.extract_strided_slice %185 {offsets = [0, 16], sizes = [2, 8], strides = [1, 1]} : vector<2x24xf32> to vector<2x8xf32>
    %191 = arith.mulf %189, %169 : vector<2x8xf32>
    %192 = arith.mulf %188, %187 : vector<2x8xf32>
    %193 = arith.addf %191, %192 : vector<2x8xf32>
    %194 = math.tanh %193 : vector<2x8xf32>
    %195 = arith.mulf %190, %194 : vector<2x8xf32>
    %c479 = arith.constant 479 : index
    %c0_52 = arith.constant 0 : index
    %c0_53 = arith.constant 0 : index
    %196 = vector.load %arg9[%c479, %c0_52, %c0_53] : memref<480x2x8xf32, #tpu.memory_space<vmem>>, vector<1x2x8xf32>
    %197 = vector.shape_cast %196 : vector<1x2x8xf32> to vector<2x8xf32>
    %198 = vector.shape_cast %195 : vector<2x8xf32> to vector<1x2x8xf32>
    tpu.vector_store %arg9[%c479, %c0_52, %c0_53], %198 {strides = array<i32>} : memref<480x2x8xf32, #tpu.memory_space<vmem>>, vector<1x2x8xf32>,
    %c0_54 = arith.constant 0 : index
    %c0_55 = arith.constant 0 : index
    %199 = vector.load %arg5[%c0_54, %c0_55] : memref<480x128xf32, #tpu.memory_space<vmem>>, vector<480x128xf32>
    %c0_56 = arith.constant 0 : index
    %c0_57 = arith.constant 0 : index
    %200 = vector.load %arg6[%c0_56, %c0_57] : memref<1x128xf32, #tpu.memory_space<vmem>>, vector<1x128xf32>
    %c0_58 = arith.constant 0 : index
    %c0_59 = arith.constant 0 : index
    %c0_60 = arith.constant 0 : index
    %201 = vector.load %arg9[%c0_58, %c0_59, %c0_60] : memref<480x2x8xf32, #tpu.memory_space<vmem>>, vector<480x1x8xf32>
    %202 = vector.shape_cast %201 : vector<480x1x8xf32> to vector<480x8xf32>
    %cst_61 = arith.constant dense<0.000000e+00> : vector<8x128xf32>
    %203 = tpu.matmul %202, %199, %cst_61 {dimension_numbers = #tpu.dot_dimension_numbers<[0], [0], [1], [1], [0, 1, 1, 1], [], []>} : vector<480x8xf32>, vector<480x128xf32>, vector<8x128xf32> -> vector<8x128xf32>
    %204 = vector.broadcast %200 : vector<1x128xf32> to vector<8x128xf32>
    %205 = arith.addf %203, %204 : vector<8x128xf32>
    %c0_62 = arith.constant 0 : index
    %c0_63 = arith.constant 0 : index
    %c0_64 = arith.constant 0 : index
    %206 = vector.load %arg7[%c0_62, %c0_63, %c0_64] : memref<2x8x128xf32, #tpu.memory_space<vmem>>, vector<1x8x128xf32>
    %207 = vector.shape_cast %206 : vector<1x8x128xf32> to vector<8x128xf32>
    %208 = vector.shape_cast %205 : vector<8x128xf32> to vector<1x8x128xf32>
    tpu.vector_store %arg7[%c0_62, %c0_63, %c0_64], %208 {strides = array<i32>} : memref<2x8x128xf32, #tpu.memory_space<vmem>>, vector<1x8x128xf32>,
    %c0_65 = arith.constant 0 : index
    %c1_66 = arith.constant 1 : index
    %c0_67 = arith.constant 0 : index
    %209 = vector.load %arg9[%c0_65, %c1_66, %c0_67] : memref<480x2x8xf32, #tpu.memory_space<vmem>>, vector<480x1x8xf32>
    %210 = vector.shape_cast %209 : vector<480x1x8xf32> to vector<480x8xf32>
    %cst_68 = arith.constant dense<0.000000e+00> : vector<8x128xf32>
    %211 = tpu.matmul %210, %199, %cst_68 {dimension_numbers = #tpu.dot_dimension_numbers<[0], [0], [1], [1], [0, 1, 1, 1], [], []>} : vector<480x8xf32>, vector<480x128xf32>, vector<8x128xf32> -> vector<8x128xf32>
    %212 = vector.broadcast %200 : vector<1x128xf32> to vector<8x128xf32>
    %213 = arith.addf %211, %212 : vector<8x128xf32>
    %c1_69 = arith.constant 1 : index
    %c0_70 = arith.constant 0 : index
    %c0_71 = arith.constant 0 : index
    %214 = vector.load %arg7[%c1_69, %c0_70, %c0_71] : memref<2x8x128xf32, #tpu.memory_space<vmem>>, vector<1x8x128xf32>
    %215 = vector.shape_cast %214 : vector<1x8x128xf32> to vector<8x128xf32>
    %216 = vector.shape_cast %213 : vector<8x128xf32> to vector<1x8x128xf32>
    tpu.vector_store %arg7[%c1_69, %c0_70, %c0_71], %216 {strides = array<i32>} : memref<2x8x128xf32, #tpu.memory_space<vmem>>, vector<1x8x128xf32>,
    return
  }
}

</mosaic_0001>

<llo_original>
// kernel: mylstm_forward.1
$region0: #{mylstm_forward.1}
  #allocation0 [shape = 'u32[]', space=smem, size = 0x4, offset = 0x4, fixed_abs, tag = 'smem constant byte address 0x4 - core index']
  #allocation1 [shape = 'u32[72,128]{1,0:T(1,128)}', space=vmem, size = 0x9000, scoped, tag = 'internal scratch']
  #allocation2 [shape = 'f32[960,32]{1,0:T(8,128)}', space=vmem, size = 0x78000, scoped, tag = 'scratch operand']
  #allocation3 [shape = 'f32[480,2,8]{2,1,0:T(2,128)}', space=vmem, size = 0x78000, scoped, tag = 'scratch operand']
  %s0 = inlined_call_operand.vmem [shape: f32[960,8], index: 0, kind: input, shape index: {}]
  %s1 = inlined_call_operand.vmem [shape: f32[2,8,32], index: 1, kind: input, shape index: {}]
  %s2 = inlined_call_operand.vmem [shape: bf16[2,8,32], index: 2, kind: input, shape index: {}]
  %s3 = inlined_call_operand.vmem [shape: bf16[2,8,32], index: 3, kind: input, shape index: {}]
  %s4 = inlined_call_operand.vmem [shape: f32[2,1,32], index: 4, kind: input, shape index: {}]
  %s5 = inlined_call_operand.vmem [shape: f32[480,128], index: 5, kind: input, shape index: {}]
  %s6 = inlined_call_operand.vmem [shape: f32[1,128], index: 6, kind: input, shape index: {}]
  %s7 = inlined_call_operand.vmem [shape: f32[2,8,128], index: 7, kind: output, shape index: {}]
  %s8 = sld [smem:[#allocation0]]
  $region45: #{mylstm_forward.1} parent=0
    _
  %s10 = ssub.s32 1, %s8
  %s11 = scalar_select 0, %s10, %s8
  // Predicated region
  $region2: #{mylstm_forward.1} parent=0 // pred_check
    _
  $region3: #{mylstm_forward.1} parent=0 // pred_check_branch
    %13 = sbr.rel (0) target = $region5
  $region4: #{mylstm_forward.1} parent=0 // pred_region
    _
  $region5: #{mylstm_forward.1} parent=0 // pred_fallthru
    _
  // Predicated region
  $region6: #{mylstm_forward.1} parent=0 // pred_check
    _
  $region7: #{mylstm_forward.1} parent=0 // pred_check_branch
    %15 = sbr.rel (0) target = $region9
  $region8: #{mylstm_forward.1} parent=0 // pred_region
    _
  $region9: #{mylstm_forward.1} parent=0 // pred_fallthru
    _
  // Predicated region
  $region10: #{mylstm_forward.1} parent=0 // pred_check
    _
  $region11: #{mylstm_forward.1} parent=0 // pred_check_branch
    %17 = sbr.rel (0) target = $region13
  $region12: #{mylstm_forward.1} parent=0 // pred_region
    _
  $region13: #{mylstm_forward.1} parent=0 // pred_fallthru
    _
  // Predicated region
  $region14: #{mylstm_forward.1} parent=0 // pred_check
    _
  $region15: #{mylstm_forward.1} parent=0 // pred_check_branch
    %19 = sbr.rel (0) target = $region17
  $region16: #{mylstm_forward.1} parent=0 // pred_region
    _
  $region17: #{mylstm_forward.1} parent=0 // pred_fallthru
    _
  // Predicated region
  $region18: #{mylstm_forward.1} parent=0 // pred_check
    _
  $region19: #{mylstm_forward.1} parent=0 // pred_check_branch
    %21 = sbr.rel (0) target = $region21
  $region20: #{mylstm_forward.1} parent=0 // pred_region
    _
  $region21: #{mylstm_forward.1} parent=0 // pred_fallthru
    _
  // Predicated region
  $region22: #{mylstm_forward.1} parent=0 // pred_check
    _
  $region23: #{mylstm_forward.1} parent=0 // pred_check_branch
    %23 = sbr.rel (0) target = $region25
  $region24: #{mylstm_forward.1} parent=0 // pred_region
    _
  $region25: #{mylstm_forward.1} parent=0 // pred_fallthru
    _
  // Predicated region
  $region26: #{mylstm_forward.1} parent=0 // pred_check
    _
  $region27: #{mylstm_forward.1} parent=0 // pred_check_branch
    %25 = sbr.rel (0) target = $region29
  $region28: #{mylstm_forward.1} parent=0 // pred_region
    _
  $region29: #{mylstm_forward.1} parent=0 // pred_fallthru
    _
  %v27 = vld [vmem:[%s0] sm:$0xff]
  %v28 = vld [vmem:[%s0 + $0x8] sm:$0xff]
  %v29 = vld [vmem:[%s0 + $0x10] sm:$0xff]
  %v30 = vld [vmem:[%s0 + $0x18] sm:$0xff]
  %v31 = vld [vmem:[%s0 + $0x20] sm:$0xff]
  %v32 = vld [vmem:[%s0 + $0x28] sm:$0xff]
  %v33 = vld [vmem:[%s0 + $0x30] sm:$0xff]
  %v34 = vld [vmem:[%s0 + $0x38] sm:$0xff]
  %v35 = vld [vmem:[%s0 + $0x40] sm:$0xff]
  %v36 = vld [vmem:[%s0 + $0x48] sm:$0xff]
  %v37 = vld [vmem:[%s0 + $0x50] sm:$0xff]
  %v38 = vld [vmem:[%s0 + $0x58] sm:$0xff]
  %v39 = vld [vmem:[%s0 + $0x60] sm:$0xff]
  %v40 = vld [vmem:[%s0 + $0x68] sm:$0xff]
  %v41 = vld [vmem:[%s0 + $0x70] sm:$0xff]
  %v42 = vld [vmem:[%s0 + $0x78] sm:$0xff]
  %v43 = vld [vmem:[%s0 + $0x80] sm:$0xff]
  %v44 = vld [vmem:[%s0 + $0x88] sm:$0xff]
  %v45 = vld [vmem:[%s0 + $0x90] sm:$0xff]
  %v46 = vld [vmem:[%s0 + $0x98] sm:$0xff]
  %v47 = vld [vmem:[%s0 + $0xa0] sm:$0xff]
  %v48 = vld [vmem:[%s0 + $0xa8] sm:$0xff]
  %v49 = vld [vmem:[%s0 + $0xb0] sm:$0xff]
  %v50 = vld [vmem:[%s0 + $0xb8] sm:$0xff]
  %v51 = vld [vmem:[%s0 + $0xc0] sm:$0xff]
  %v52 = vld [vmem:[%s0 + $0xc8] sm:$0xff]
  %v53 = vld [vmem:[%s0 + $0xd0] sm:$0xff]
  %v54 = vld [vmem:[%s0 + $0xd8] sm:$0xff]
  %v55 = vld [vmem:[%s0 + $0xe0] sm:$0xff]
  %v56 = vld [vmem:[%s0 + $0xe8] sm:$0xff]
  %v57 = vld [vmem:[%s0 + $0xf0] sm:$0xff]
  %v58 = vld [vmem:[%s0 + $0xf8] sm:$0xff]
  %v59 = vld [vmem:[%s0 + $0x100] sm:$0xff]
  %v60 = vld [vmem:[%s0 + $0x108] sm:$0xff]
  %v61 = vld [vmem:[%s0 + $0x110] sm:$0xff]
  %v62 = vld [vmem:[%s0 + $0x118] sm:$0xff]
  %v63 = vld [vmem:[%s0 + $0x120] sm:$0xff]
  %v64 = vld [vmem:[%s0 + $0x128] sm:$0xff]
  %v65 = vld [vmem:[%s0 + $0x130] sm:$0xff]
  %v66 = vld [vmem:[%s0 + $0x138] sm:$0xff]
  %v67 = vld [vmem:[%s0 + $0x140] sm:$0xff]
  %v68 = vld [vmem:[%s0 + $0x148] sm:$0xff]
  %v69 = vld [vmem:[%s0 + $0x150] sm:$0xff]
  %v70 = vld [vmem:[%s0 + $0x158] sm:$0xff]
  %v71 = vld [vmem:[%s0 + $0x160] sm:$0xff]
  %v72 = vld [vmem:[%s0 + $0x168] sm:$0xff]
  %v73 = vld [vmem:[%s0 + $0x170] sm:$0xff]
  %v74 = vld [vmem:[%s0 + $0x178] sm:$0xff]
  %v75 = vld [vmem:[%s0 + $0x180] sm:$0xff]
  %v76 = vld [vmem:[%s0 + $0x188] sm:$0xff]
  %v77 = vld [vmem:[%s0 + $0x190] sm:$0xff]
  %v78 = vld [vmem:[%s0 + $0x198] sm:$0xff]
  %v79 = vld [vmem:[%s0 + $0x1a0] sm:$0xff]
  %v80 = vld [vmem:[%s0 + $0x1a8] sm:$0xff]
  %v81 = vld [vmem:[%s0 + $0x1b0] sm:$0xff]
  %v82 = vld [vmem:[%s0 + $0x1b8] sm:$0xff]
  %v83 = vld [vmem:[%s0 + $0x1c0] sm:$0xff]
  %v84 = vld [vmem:[%s0 + $0x1c8] sm:$0xff]
  %v85 = vld [vmem:[%s0 + $0x1d0] sm:$0xff]
  %v86 = vld [vmem:[%s0 + $0x1d8] sm:$0xff]
  %v87 = vld [vmem:[%s0 + $0x1e0] sm:$0xff]
  %v88 = vld [vmem:[%s0 + $0x1e8] sm:$0xff]
  %v89 = vld [vmem:[%s0 + $0x1f0] sm:$0xff]
  %v90 = vld [vmem:[%s0 + $0x1f8] sm:$0xff]
  %v91 = vld [vmem:[%s0 + $0x200] sm:$0xff]
  %v92 = vld [vmem:[%s0 + $0x208] sm:$0xff]
  %v93 = vld [vmem:[%s0 + $0x210] sm:$0xff]
  %v94 = vld [vmem:[%s0 + $0x218] sm:$0xff]
  %v95 = vld [vmem:[%s0 + $0x220] sm:$0xff]
  %v96 = vld [vmem:[%s0 + $0x228] sm:$0xff]
  %v97 = vld [vmem:[%s0 + $0x230] sm:$0xff]
  %v98 = vld [vmem:[%s0 + $0x238] sm:$0xff]
  %v99 = vld [vmem:[%s0 + $0x240] sm:$0xff]
  %v100 = vld [vmem:[%s0 + $0x248] sm:$0xff]
  %v101 = vld [vmem:[%s0 + $0x250] sm:$0xff]
  %v102 = vld [vmem:[%s0 + $0x258] sm:$0xff]
  %v103 = vld [vmem:[%s0 + $0x260] sm:$0xff]
  %v104 = vld [vmem:[%s0 + $0x268] sm:$0xff]
  %v105 = vld [vmem:[%s0 + $0x270] sm:$0xff]
  %v106 = vld [vmem:[%s0 + $0x278] sm:$0xff]
  %v107 = vld [vmem:[%s0 + $0x280] sm:$0xff]
  %v108 = vld [vmem:[%s0 + $0x288] sm:$0xff]
  %v109 = vld [vmem:[%s0 + $0x290] sm:$0xff]
  %v110 = vld [vmem:[%s0 + $0x298] sm:$0xff]
  %v111 = vld [vmem:[%s0 + $0x2a0] sm:$0xff]
  %v112 = vld [vmem:[%s0 + $0x2a8] sm:$0xff]
  %v113 = vld [vmem:[%s0 + $0x2b0] sm:$0xff]
  %v114 = vld [vmem:[%s0 + $0x2b8] sm:$0xff]
  %v115 = vld [vmem:[%s0 + $0x2c0] sm:$0xff]
  %v116 = vld [vmem:[%s0 + $0x2c8] sm:$0xff]
  %v117 = vld [vmem:[%s0 + $0x2d0] sm:$0xff]
  %v118 = vld [vmem:[%s0 + $0x2d8] sm:$0xff]
  %v119 = vld [vmem:[%s0 + $0x2e0] sm:$0xff]
  %v120 = vld [vmem:[%s0 + $0x2e8] sm:$0xff]
  %v121 = vld [vmem:[%s0 + $0x2f0] sm:$0xff]
  %v122 = vld [vmem:[%s0 + $0x2f8] sm:$0xff]
  %v123 = vld [vmem:[%s0 + $0x300] sm:$0xff]
  %v124 = vld [vmem:[%s0 + $0x308] sm:$0xff]
  %v125 = vld [vmem:[%s0 + $0x310] sm:$0xff]
  %v126 = vld [vmem:[%s0 + $0x318] sm:$0xff]
  %v127 = vld [vmem:[%s0 + $0x320] sm:$0xff]
  %v128 = vld [vmem:[%s0 + $0x328] sm:$0xff]
  %v129 = vld [vmem:[%s0 + $0x330] sm:$0xff]
  %v130 = vld [vmem:[%s0 + $0x338] sm:$0xff]
  %v131 = vld [vmem:[%s0 + $0x340] sm:$0xff]
  %v132 = vld [vmem:[%s0 + $0x348] sm:$0xff]
  %v133 = vld [vmem:[%s0 + $0x350] sm:$0xff]
  %v134 = vld [vmem:[%s0 + $0x358] sm:$0xff]
  %v135 = vld [vmem:[%s0 + $0x360] sm:$0xff]
  %v136 = vld [vmem:[%s0 + $0x368] sm:$0xff]
  %v137 = vld [vmem:[%s0 + $0x370] sm:$0xff]
  %v138 = vld [vmem:[%s0 + $0x378] sm:$0xff]
  %v139 = vld [vmem:[%s0 + $0x380] sm:$0xff]
  %v140 = vld [vmem:[%s0 + $0x388] sm:$0xff]
  %v141 = vld [vmem:[%s0 + $0x390] sm:$0xff]
  %v142 = vld [vmem:[%s0 + $0x398] sm:$0xff]
  %v143 = vld [vmem:[%s0 + $0x3a0] sm:$0xff]
  %v144 = vld [vmem:[%s0 + $0x3a8] sm:$0xff]
  %v145 = vld [vmem:[%s0 + $0x3b0] sm:$0xff]
  %v146 = vld [vmem:[%s0 + $0x3b8] sm:$0xff]
  %v147 = vld [vmem:[%s1] sm:$0xff]
  %v148 = vld [vmem:[%s4] sm:$0x1]
  %v150 = vperm.slane %v148, 0
  %vm152 = vcmask 64512
  %v154 = vsel %vm152, %v27, 0
  %v157 = vsel %vm152, %v28, 0
  %v160 = vsel %vm152, %v29, 0
  %v163 = vsel %vm152, %v30, 0
  %v166 = vsel %vm152, %v31, 0
  %v169 = vsel %vm152, %v32, 0
  %v172 = vsel %vm152, %v33, 0
  %v175 = vsel %vm152, %v34, 0
  %v178 = vsel %vm152, %v35, 0
  %v181 = vsel %vm152, %v36, 0
  %v184 = vsel %vm152, %v37, 0
  %v187 = vsel %vm152, %v38, 0
  %v190 = vsel %vm152, %v39, 0
  %v193 = vsel %vm152, %v40, 0
  %v196 = vsel %vm152, %v41, 0
  %v199 = vsel %vm152, %v42, 0
  %v202 = vsel %vm152, %v43, 0
  %v205 = vsel %vm152, %v44, 0
  %v208 = vsel %vm152, %v45, 0
  %v211 = vsel %vm152, %v46, 0
  %v214 = vsel %vm152, %v47, 0
  %v217 = vsel %vm152, %v48, 0
  %v220 = vsel %vm152, %v49, 0
  %v223 = vsel %vm152, %v50, 0
  %v226 = vsel %vm152, %v51, 0
  %v229 = vsel %vm152, %v52, 0
  %v232 = vsel %vm152, %v53, 0
  %v235 = vsel %vm152, %v54, 0
  %v238 = vsel %vm152, %v55, 0
  %v241 = vsel %vm152, %v56, 0
  %v244 = vsel %vm152, %v57, 0
  %v247 = vsel %vm152, %v58, 0
  %v250 = vsel %vm152, %v59, 0
  %v253 = vsel %vm152, %v60, 0
  %v256 = vsel %vm152, %v61, 0
  %v259 = vsel %vm152, %v62, 0
  %v262 = vsel %vm152, %v63, 0
  %v265 = vsel %vm152, %v64, 0
  %v268 = vsel %vm152, %v65, 0
  %v271 = vsel %vm152, %v66, 0
  %v274 = vsel %vm152, %v67, 0
  %v277 = vsel %vm152, %v68, 0
  %v280 = vsel %vm152, %v69, 0
  %v283 = vsel %vm152, %v70, 0
  %v286 = vsel %vm152, %v71, 0
  %v289 = vsel %vm152, %v72, 0
  %v292 = vsel %vm152, %v73, 0
  %v295 = vsel %vm152, %v74, 0
  %v298 = vsel %vm152, %v75, 0
  %v301 = vsel %vm152, %v76, 0
  %v304 = vsel %vm152, %v77, 0
  %v307 = vsel %vm152, %v78, 0
  %v310 = vsel %vm152, %v79, 0
  %v313 = vsel %vm152, %v80, 0
  %v316 = vsel %vm152, %v81, 0
  %v319 = vsel %vm152, %v82, 0
  %v322 = vsel %vm152, %v83, 0
  %v325 = vsel %vm152, %v84, 0
  %v328 = vsel %vm152, %v85, 0
  %v331 = vsel %vm152, %v86, 0
  %v334 = vsel %vm152, %v87, 0
  %v337 = vsel %vm152, %v88, 0
  %v340 = vsel %vm152, %v89, 0
  %v343 = vsel %vm152, %v90, 0
  %v346 = vsel %vm152, %v91, 0
  %v349 = vsel %vm152, %v92, 0
  %v352 = vsel %vm152, %v93, 0
  %v355 = vsel %vm152, %v94, 0
  %v358 = vsel %vm152, %v95, 0
  %v361 = vsel %vm152, %v96, 0
  %v364 = vsel %vm152, %v97, 0
  %v367 = vsel %vm152, %v98, 0
  %v370 = vsel %vm152, %v99, 0
  %v373 = vsel %vm152, %v100, 0
  %v376 = vsel %vm152, %v101, 0
  %v379 = vsel %vm152, %v102, 0
  %v382 = vsel %vm152, %v103, 0
  %v385 = vsel %vm152, %v104, 0
  %v388 = vsel %vm152, %v105, 0
  %v391 = vsel %vm152, %v106, 0
  %v394 = vsel %vm152, %v107, 0
  %v397 = vsel %vm152, %v108, 0
  %v400 = vsel %vm152, %v109, 0
  %v403 = vsel %vm152, %v110, 0
  %v406 = vsel %vm152, %v111, 0
  %v409 = vsel %vm152, %v112, 0
  %v412 = vsel %vm152, %v113, 0
  %v415 = vsel %vm152, %v114, 0
  %v418 = vsel %vm152, %v115, 0
  %v421 = vsel %vm152, %v116, 0
  %v424 = vsel %vm152, %v117, 0
  %v427 = vsel %vm152, %v118, 0
  %v430 = vsel %vm152, %v119, 0
  %v433 = vsel %vm152, %v120, 0
  %v436 = vsel %vm152, %v121, 0
  %v439 = vsel %vm152, %v122, 0
  %v442 = vsel %vm152, %v123, 0
  %v445 = vsel %vm152, %v124, 0
  %v448 = vsel %vm152, %v125, 0
  %v451 = vsel %vm152, %v126, 0
  %v454 = vsel %vm152, %v127, 0
  %v457 = vsel %vm152, %v128, 0
  %v460 = vsel %vm152, %v129, 0
  %v463 = vsel %vm152, %v130, 0
  %v466 = vsel %vm152, %v131, 0
  %v469 = vsel %vm152, %v132, 0
  %v472 = vsel %vm152, %v133, 0
  %v475 = vsel %vm152, %v134, 0
  %v478 = vsel %vm152, %v135, 0
  %v481 = vsel %vm152, %v136, 0
  %v484 = vsel %vm152, %v137, 0
  %v487 = vsel %vm152, %v138, 0
  %v490 = vsel %vm152, %v139, 0
  %v493 = vsel %vm152, %v140, 0
  %v496 = vsel %vm152, %v141, 0
  %v499 = vsel %vm152, %v142, 0
  %v502 = vsel %vm152, %v143, 0
  %v505 = vsel %vm152, %v144, 0
  %v508 = vsel %vm152, %v145, 0
  %v511 = vsel %vm152, %v146, 0
  %513 = vmatpush.msra.mxu0 0.0
  %514 = vmatpush.msra.mxu0 0.0
  %515 = vmatpush.msra.mxu0 0.0
  %516 = vmatpush.msra.mxu0 0.0
  %517 = vmatpush.msra.mxu0 0.0
  %518 = vmatpush.msra.mxu0 0.0
  %519 = vmatpush.msra.mxu0 0.0
  %520 = vmatpush.msra.mxu0 0.0
  %521 = vmatpush.msra.mxu0 0.0
  %522 = vmatpush.msra.mxu0 0.0
  %523 = vmatpush.msra.mxu0 0.0
  %524 = vmatpush.msra.mxu0 0.0
  %525 = vmatpush.msra.mxu0 0.0
  %526 = vmatpush.msra.mxu0 0.0
  %527 = vmatpush.msra.mxu0 0.0
  %528 = vmatpush.msra.mxu0 %v147
  %529 = vmatmul.f32.gmra.mxu0 %v154
  %v530 = vpop.f32.mrf.mxu0
  %v531 = vadd.f32 %v150, %v530
  %532 = vmatmul.f32.gmra.mxu0 %v157
  %v533 = vpop.f32.mrf.mxu0
  %v534 = vadd.f32 %v150, %v533
  %535 = vmatmul.f32.gmra.mxu0 %v160
  %v536 = vpop.f32.mrf.mxu0
  %v537 = vadd.f32 %v150, %v536
  %538 = vmatmul.f32.gmra.mxu0 %v163
  %v539 = vpop.f32.mrf.mxu0
  %v540 = vadd.f32 %v150, %v539
  %541 = vmatmul.f32.gmra.mxu0 %v166
  %v542 = vpop.f32.mrf.mxu0
  %v543 = vadd.f32 %v150, %v542
  %544 = vmatmul.f32.gmra.mxu0 %v169
  %v545 = vpop.f32.mrf.mxu0
  %v546 = vadd.f32 %v150, %v545
  %547 = vmatmul.f32.gmra.mxu0 %v172
  %v548 = vpop.f32.mrf.mxu0
  %v549 = vadd.f32 %v150, %v548
  %550 = vmatmul.f32.gmra.mxu0 %v175
  %v551 = vpop.f32.mrf.mxu0
  %v552 = vadd.f32 %v150, %v551
  %553 = vmatmul.f32.gmra.mxu0 %v178
  %v554 = vpop.f32.mrf.mxu0
  %v555 = vadd.f32 %v150, %v554
  %556 = vmatmul.f32.gmra.mxu0 %v181
  %v557 = vpop.f32.mrf.mxu0
  %v558 = vadd.f32 %v150, %v557
  %559 = vmatmul.f32.gmra.mxu0 %v184
  %v560 = vpop.f32.mrf.mxu0
  %v561 = vadd.f32 %v150, %v560
  %562 = vmatmul.f32.gmra.mxu0 %v187
  %v563 = vpop.f32.mrf.mxu0
  %v564 = vadd.f32 %v150, %v563
  %565 = vmatmul.f32.gmra.mxu0 %v190
  %v566 = vpop.f32.mrf.mxu0
  %v567 = vadd.f32 %v150, %v566
  %568 = vmatmul.f32.gmra.mxu0 %v193
  %v569 = vpop.f32.mrf.mxu0
  %v570 = vadd.f32 %v150, %v569
  %571 = vmatmul.f32.gmra.mxu0 %v196
  %v572 = vpop.f32.mrf.mxu0
  %v573 = vadd.f32 %v150, %v572
  %574 = vmatmul.f32.gmra.mxu0 %v199
  %v575 = vpop.f32.mrf.mxu0
  %v576 = vadd.f32 %v150, %v575
  %577 = vmatmul.f32.gmra.mxu0 %v202
  %v578 = vpop.f32.mrf.mxu0
  %v579 = vadd.f32 %v150, %v578
  %580 = vmatmul.f32.gmra.mxu0 %v205
  %v581 = vpop.f32.mrf.mxu0
  %v582 = vadd.f32 %v150, %v581
  %583 = vmatmul.f32.gmra.mxu0 %v208
  %v584 = vpop.f32.mrf.mxu0
  %v585 = vadd.f32 %v150, %v584
  %586 = vmatmul.f32.gmra.mxu0 %v211
  %v587 = vpop.f32.mrf.mxu0
  %v588 = vadd.f32 %v150, %v587
  %589 = vmatmul.f32.gmra.mxu0 %v214
  %v590 = vpop.f32.mrf.mxu0
  %v591 = vadd.f32 %v150, %v590
  %592 = vmatmul.f32.gmra.mxu0 %v217
  %v593 = vpop.f32.mrf.mxu0
  %v594 = vadd.f32 %v150, %v593
  %595 = vmatmul.f32.gmra.mxu0 %v220
  %v596 = vpop.f32.mrf.mxu0
  %v597 = vadd.f32 %v150, %v596
  %598 = vmatmul.f32.gmra.mxu0 %v223
  %v599 = vpop.f32.mrf.mxu0
  %v600 = vadd.f32 %v150, %v599
  %601 = vmatmul.f32.gmra.mxu0 %v226
  %v602 = vpop.f32.mrf.mxu0
  %v603 = vadd.f32 %v150, %v602
  %604 = vmatmul.f32.gmra.mxu0 %v229
  %v605 = vpop.f32.mrf.mxu0
  %v606 = vadd.f32 %v150, %v605
  %607 = vmatmul.f32.gmra.mxu0 %v232
  %v608 = vpop.f32.mrf.mxu0
  %v609 = vadd.f32 %v150, %v608
  %610 = vmatmul.f32.gmra.mxu0 %v235
  %v611 = vpop.f32.mrf.mxu0
  %v612 = vadd.f32 %v150, %v611
  %613 = vmatmul.f32.gmra.mxu0 %v238
  %v614 = vpop.f32.mrf.mxu0
  %v615 = vadd.f32 %v150, %v614
  %616 = vmatmul.f32.gmra.mxu0 %v241
  %v617 = vpop.f32.mrf.mxu0
  %v618 = vadd.f32 %v150, %v617
  %619 = vmatmul.f32.gmra.mxu0 %v244
  %v620 = vpop.f32.mrf.mxu0
  %v621 = vadd.f32 %v150, %v620
  %622 = vmatmul.f32.gmra.mxu0 %v247
  %v623 = vpop.f32.mrf.mxu0
  %v624 = vadd.f32 %v150, %v623
  %625 = vmatmul.f32.gmra.mxu0 %v250
  %v626 = vpop.f32.mrf.mxu0
  %v627 = vadd.f32 %v150, %v626
  %628 = vmatmul.f32.gmra.mxu0 %v253
  %v629 = vpop.f32.mrf.mxu0
  %v630 = vadd.f32 %v150, %v629
  %631 = vmatmul.f32.gmra.mxu0 %v256
  %v632 = vpop.f32.mrf.mxu0
  %v633 = vadd.f32 %v150, %v632
  %634 = vmatmul.f32.gmra.mxu0 %v259
  %v635 = vpop.f32.mrf.mxu0
  %v636 = vadd.f32 %v150, %v635
  %637 = vmatmul.f32.gmra.mxu0 %v262
  %v638 = vpop.f32.mrf.mxu0
  %v639 = vadd.f32 %v150, %v638
  %640 = vmatmul.f32.gmra.mxu0 %v265
  %v641 = vpop.f32.mrf.mxu0
  %v642 = vadd.f32 %v150, %v641
  %643 = vmatmul.f32.gmra.mxu0 %v268
  %v644 = vpop.f32.mrf.mxu0
  %v645 = vadd.f32 %v150, %v644
  %646 = vmatmul.f32.gmra.mxu0 %v271
  %v647 = vpop.f32.mrf.mxu0
  %v648 = vadd.f32 %v150, %v647
  %649 = vmatmul.f32.gmra.mxu0 %v274
  %v650 = vpop.f32.mrf.mxu0
  %v651 = vadd.f32 %v150, %v650
  %652 = vmatmul.f32.gmra.mxu0 %v277
  %v653 = vpop.f32.mrf.mxu0
  %v654 = vadd.f32 %v150, %v653
  %655 = vmatmul.f32.gmra.mxu0 %v280
  %v656 = vpop.f32.mrf.mxu0
  %v657 = vadd.f32 %v150, %v656
  %658 = vmatmul.f32.gmra.mxu0 %v283
  %v659 = vpop.f32.mrf.mxu0
  %v660 = vadd.f32 %v150, %v659
  %661 = vmatmul.f32.gmra.mxu0 %v286
  %v662 = vpop.f32.mrf.mxu0
  %v663 = vadd.f32 %v150, %v662
  %664 = vmatmul.f32.gmra.mxu0 %v289
  %v665 = vpop.f32.mrf.mxu0
  %v666 = vadd.f32 %v150, %v665
  %667 = vmatmul.f32.gmra.mxu0 %v292
  %v668 = vpop.f32.mrf.mxu0
  %v669 = vadd.f32 %v150, %v668
  %670 = vmatmul.f32.gmra.mxu0 %v295
  %v671 = vpop.f32.mrf.mxu0
  %v672 = vadd.f32 %v150, %v671
  %673 = vmatmul.f32.gmra.mxu0 %v298
  %v674 = vpop.f32.mrf.mxu0
  %v675 = vadd.f32 %v150, %v674
  %676 = vmatmul.f32.gmra.mxu0 %v301
  %v677 = vpop.f32.mrf.mxu0
  %v678 = vadd.f32 %v150, %v677
  %679 = vmatmul.f32.gmra.mxu0 %v304
  %v680 = vpop.f32.mrf.mxu0
  %v681 = vadd.f32 %v150, %v680
  %682 = vmatmul.f32.gmra.mxu0 %v307
  %v683 = vpop.f32.mrf.mxu0
  %v684 = vadd.f32 %v150, %v683
  %685 = vmatmul.f32.gmra.mxu0 %v310
  %v686 = vpop.f32.mrf.mxu0
  %v687 = vadd.f32 %v150, %v686
  %688 = vmatmul.f32.gmra.mxu0 %v313
  %v689 = vpop.f32.mrf.mxu0
  %v690 = vadd.f32 %v150, %v689
  %691 = vmatmul.f32.gmra.mxu0 %v316
  %v692 = vpop.f32.mrf.mxu0
  %v693 = vadd.f32 %v150, %v692
  %694 = vmatmul.f32.gmra.mxu0 %v319
  %v695 = vpop.f32.mrf.mxu0
  %v696 = vadd.f32 %v150, %v695
  %697 = vmatmul.f32.gmra.mxu0 %v322
  %v698 = vpop.f32.mrf.mxu0
  %v699 = vadd.f32 %v150, %v698
  %700 = vmatmul.f32.gmra.mxu0 %v325
  %v701 = vpop.f32.mrf.mxu0
  %v702 = vadd.f32 %v150, %v701
  %703 = vmatmul.f32.gmra.mxu0 %v328
  %v704 = vpop.f32.mrf.mxu0
  %v705 = vadd.f32 %v150, %v704
  %706 = vmatmul.f32.gmra.mxu0 %v331
  %v707 = vpop.f32.mrf.mxu0
  %v708 = vadd.f32 %v150, %v707
  %709 = vmatmul.f32.gmra.mxu0 %v334
  %v710 = vpop.f32.mrf.mxu0
  %v711 = vadd.f32 %v150, %v710
  %712 = vmatmul.f32.gmra.mxu0 %v337
  %v713 = vpop.f32.mrf.mxu0
  %v714 = vadd.f32 %v150, %v713
  %715 = vmatmul.f32.gmra.mxu0 %v340
  %v716 = vpop.f32.mrf.mxu0
  %v717 = vadd.f32 %v150, %v716
  %718 = vmatmul.f32.gmra.mxu0 %v343
  %v719 = vpop.f32.mrf.mxu0
  %v720 = vadd.f32 %v150, %v719
  %721 = vmatmul.f32.gmra.mxu0 %v346
  %v722 = vpop.f32.mrf.mxu0
  %v723 = vadd.f32 %v150, %v722
  %724 = vmatmul.f32.gmra.mxu0 %v349
  %v725 = vpop.f32.mrf.mxu0
  %v726 = vadd.f32 %v150, %v725
  %727 = vmatmul.f32.gmra.mxu0 %v352
  %v728 = vpop.f32.mrf.mxu0
  %v729 = vadd.f32 %v150, %v728
  %730 = vmatmul.f32.gmra.mxu0 %v355
  %v731 = vpop.f32.mrf.mxu0
  %v732 = vadd.f32 %v150, %v731
  %733 = vmatmul.f32.gmra.mxu0 %v358
  %v734 = vpop.f32.mrf.mxu0
  %v735 = vadd.f32 %v150, %v734
  %736 = vmatmul.f32.gmra.mxu0 %v361
  %v737 = vpop.f32.mrf.mxu0
  %v738 = vadd.f32 %v150, %v737
  %739 = vmatmul.f32.gmra.mxu0 %v364
  %v740 = vpop.f32.mrf.mxu0
  %v741 = vadd.f32 %v150, %v740
  %742 = vmatmul.f32.gmra.mxu0 %v367
  %v743 = vpop.f32.mrf.mxu0
  %v744 = vadd.f32 %v150, %v743
  %745 = vmatmul.f32.gmra.mxu0 %v370
  %v746 = vpop.f32.mrf.mxu0
  %v747 = vadd.f32 %v150, %v746
  %748 = vmatmul.f32.gmra.mxu0 %v373
  %v749 = vpop.f32.mrf.mxu0
  %v750 = vadd.f32 %v150, %v749
  %751 = vmatmul.f32.gmra.mxu0 %v376
  %v752 = vpop.f32.mrf.mxu0
  %v753 = vadd.f32 %v150, %v752
  %754 = vmatmul.f32.gmra.mxu0 %v379
  %v755 = vpop.f32.mrf.mxu0
  %v756 = vadd.f32 %v150, %v755
  %757 = vmatmul.f32.gmra.mxu0 %v382
  %v758 = vpop.f32.mrf.mxu0
  %v759 = vadd.f32 %v150, %v758
  %760 = vmatmul.f32.gmra.mxu0 %v385
  %v761 = vpop.f32.mrf.mxu0
  %v762 = vadd.f32 %v150, %v761
  %763 = vmatmul.f32.gmra.mxu0 %v388
  %v764 = vpop.f32.mrf.mxu0
  %v765 = vadd.f32 %v150, %v764
  %766 = vmatmul.f32.gmra.mxu0 %v391
  %v767 = vpop.f32.mrf.mxu0
  %v768 = vadd.f32 %v150, %v767
  %769 = vmatmul.f32.gmra.mxu0 %v394
  %v770 = vpop.f32.mrf.mxu0
  %v771 = vadd.f32 %v150, %v770
  %772 = vmatmul.f32.gmra.mxu0 %v397
  %v773 = vpop.f32.mrf.mxu0
  %v774 = vadd.f32 %v150, %v773
  %775 = vmatmul.f32.gmra.mxu0 %v400
  %v776 = vpop.f32.mrf.mxu0
  %v777 = vadd.f32 %v150, %v776
  %778 = vmatmul.f32.gmra.mxu0 %v403
  %v779 = vpop.f32.mrf.mxu0
  %v780 = vadd.f32 %v150, %v779
  %781 = vmatmul.f32.gmra.mxu0 %v406
  %v782 = vpop.f32.mrf.mxu0
  %v783 = vadd.f32 %v150, %v782
  %784 = vmatmul.f32.gmra.mxu0 %v409
  %v785 = vpop.f32.mrf.mxu0
  %v786 = vadd.f32 %v150, %v785
  %787 = vmatmul.f32.gmra.mxu0 %v412
  %v788 = vpop.f32.mrf.mxu0
  %v789 = vadd.f32 %v150, %v788
  %790 = vmatmul.f32.gmra.mxu0 %v415
  %v791 = vpop.f32.mrf.mxu0
  %v792 = vadd.f32 %v150, %v791
  %793 = vmatmul.f32.gmra.mxu0 %v418
  %v794 = vpop.f32.mrf.mxu0
  %v795 = vadd.f32 %v150, %v794
  %796 = vmatmul.f32.gmra.mxu0 %v421
  %v797 = vpop.f32.mrf.mxu0
  %v798 = vadd.f32 %v150, %v797
  %799 = vmatmul.f32.gmra.mxu0 %v424
  %v800 = vpop.f32.mrf.mxu0
  %v801 = vadd.f32 %v150, %v800
  %802 = vmatmul.f32.gmra.mxu0 %v427
  %v803 = vpop.f32.mrf.mxu0
  %v804 = vadd.f32 %v150, %v803
  %805 = vmatmul.f32.gmra.mxu0 %v430
  %v806 = vpop.f32.mrf.mxu0
  %v807 = vadd.f32 %v150, %v806
  %808 = vmatmul.f32.gmra.mxu0 %v433
  %v809 = vpop.f32.mrf.mxu0
  %v810 = vadd.f32 %v150, %v809
  %811 = vmatmul.f32.gmra.mxu0 %v436
  %v812 = vpop.f32.mrf.mxu0
  %v813 = vadd.f32 %v150, %v812
  %814 = vmatmul.f32.gmra.mxu0 %v439
  %v815 = vpop.f32.mrf.mxu0
  %v816 = vadd.f32 %v150, %v815
  %817 = vmatmul.f32.gmra.mxu0 %v442
  %v818 = vpop.f32.mrf.mxu0
  %v819 = vadd.f32 %v150, %v818
  %820 = vmatmul.f32.gmra.mxu0 %v445
  %v821 = vpop.f32.mrf.mxu0
  %v822 = vadd.f32 %v150, %v821
  %823 = vmatmul.f32.gmra.mxu0 %v448
  %v824 = vpop.f32.mrf.mxu0
  %v825 = vadd.f32 %v150, %v824
  %826 = vmatmul.f32.gmra.mxu0 %v451
  %v827 = vpop.f32.mrf.mxu0
  %v828 = vadd.f32 %v150, %v827
  %829 = vmatmul.f32.gmra.mxu0 %v454
  %v830 = vpop.f32.mrf.mxu0
  %v831 = vadd.f32 %v150, %v830
  %832 = vmatmul.f32.gmra.mxu0 %v457
  %v833 = vpop.f32.mrf.mxu0
  %v834 = vadd.f32 %v150, %v833
  %835 = vmatmul.f32.gmra.mxu0 %v460
  %v836 = vpop.f32.mrf.mxu0
  %v837 = vadd.f32 %v150, %v836
  %838 = vmatmul.f32.gmra.mxu0 %v463
  %v839 = vpop.f32.mrf.mxu0
  %v840 = vadd.f32 %v150, %v839
  %841 = vmatmul.f32.gmra.mxu0 %v466
  %v842 = vpop.f32.mrf.mxu0
  %v843 = vadd.f32 %v150, %v842
  %844 = vmatmul.f32.gmra.mxu0 %v469
  %v845 = vpop.f32.mrf.mxu0
  %v846 = vadd.f32 %v150, %v845
  %847 = vmatmul.f32.gmra.mxu0 %v472
  %v848 = vpop.f32.mrf.mxu0
  %v849 = vadd.f32 %v150, %v848
  %850 = vmatmul.f32.gmra.mxu0 %v475
  %v851 = vpop.f32.mrf.mxu0
  %v852 = vadd.f32 %v150, %v851
  %853 = vmatmul.f32.gmra.mxu0 %v478
  %v854 = vpop.f32.mrf.mxu0
  %v855 = vadd.f32 %v150, %v854
  %856 = vmatmul.f32.gmra.mxu0 %v481
  %v857 = vpop.f32.mrf.mxu0
  %v858 = vadd.f32 %v150, %v857
  %859 = vmatmul.f32.gmra.mxu0 %v484
  %v860 = vpop.f32.mrf.mxu0
  %v861 = vadd.f32 %v150, %v860
  %862 = vmatmul.f32.gmra.mxu0 %v487
  %v863 = vpop.f32.mrf.mxu0
  %v864 = vadd.f32 %v150, %v863
  %865 = vmatmul.f32.gmra.mxu0 %v490
  %v866 = vpop.f32.mrf.mxu0
  %v867 = vadd.f32 %v150, %v866
  %868 = vmatmul.f32.gmra.mxu0 %v493
  %v869 = vpop.f32.mrf.mxu0
  %v870 = vadd.f32 %v150, %v869
  %871 = vmatmul.f32.gmra.mxu0 %v496
  %v872 = vpop.f32.mrf.mxu0
  %v873 = vadd.f32 %v150, %v872
  %874 = vmatmul.f32.gmra.mxu0 %v499
  %v875 = vpop.f32.mrf.mxu0
  %v876 = vadd.f32 %v150, %v875
  %877 = vmatmul.f32.gmra.mxu0 %v502
  %v878 = vpop.f32.mrf.mxu0
  %v879 = vadd.f32 %v150, %v878
  %880 = vmatmul.f32.gmra.mxu0 %v505
  %v881 = vpop.f32.mrf.mxu0
  %v882 = vadd.f32 %v150, %v881
  %883 = vmatmul.f32.gmra.mxu0 %v508
  %v884 = vpop.f32.mrf.mxu0
  %v885 = vadd.f32 %v150, %v884
  %886 = vmatmul.f32.gmra.mxu0 %v511
  %v887 = vpop.f32.mrf.mxu0
  %v888 = vadd.f32 %v150, %v887
  %889 = vdwg.mxu0
  %vm890 = vcmask 261120
  %891 = vst.msk [vmem:[#allocation2] sm:$0xff] %vm890, %v531
  %892 = vst.msk [vmem:[#allocation2 + $0x8] sm:$0xff] %vm890, %v534
  %893 = vst.msk [vmem:[#allocation2 + $0x10] sm:$0xff] %vm890, %v537
  %894 = vst.msk [vmem:[#allocation2 + $0x18] sm:$0xff] %vm890, %v540
  %895 = vst.msk [vmem:[#allocation2 + $0x20] sm:$0xff] %vm890, %v543
  %896 = vst.msk [vmem:[#allocation2 + $0x28] sm:$0xff] %vm890, %v546
  %897 = vst.msk [vmem:[#allocation2 + $0x30] sm:$0xff] %vm890, %v549
  %898 = vst.msk [vmem:[#allocation2 + $0x38] sm:$0xff] %vm890, %v552
  %899 = vst.msk [vmem:[#allocation2 + $0x40] sm:$0xff] %vm890, %v555
  %900 = vst.msk [vmem:[#allocation2 + $0x48] sm:$0xff] %vm890, %v558
  %901 = vst.msk [vmem:[#allocation2 + $0x50] sm:$0xff] %vm890, %v561
  %902 = vst.msk [vmem:[#allocation2 + $0x58] sm:$0xff] %vm890, %v564
  %903 = vst.msk [vmem:[#allocation2 + $0x60] sm:$0xff] %vm890, %v567
  %904 = vst.msk [vmem:[#allocation2 + $0x68] sm:$0xff] %vm890, %v570
  %905 = vst.msk [vmem:[#allocation2 + $0x70] sm:$0xff] %vm890, %v573
  %906 = vst.msk [vmem:[#allocation2 + $0x78] sm:$0xff] %vm890, %v576
  %907 = vst.msk [vmem:[#allocation2 + $0x80] sm:$0xff] %vm890, %v579
  %908 = vst.msk [vmem:[#allocation2 + $0x88] sm:$0xff] %vm890, %v582
  %909 = vst.msk [vmem:[#allocation2 + $0x90] sm:$0xff] %vm890, %v585
  %910 = vst.msk [vmem:[#allocation2 + $0x98] sm:$0xff] %vm890, %v588
  %911 = vst.msk [vmem:[#allocation2 + $0xa0] sm:$0xff] %vm890, %v591
  %912 = vst.msk [vmem:[#allocation2 + $0xa8] sm:$0xff] %vm890, %v594
  %913 = vst.msk [vmem:[#allocation2 + $0xb0] sm:$0xff] %vm890, %v597
  %914 = vst.msk [vmem:[#allocation2 + $0xb8] sm:$0xff] %vm890, %v600
  %915 = vst.msk [vmem:[#allocation2 + $0xc0] sm:$0xff] %vm890, %v603
  %916 = vst.msk [vmem:[#allocation2 + $0xc8] sm:$0xff] %vm890, %v606
  %917 = vst.msk [vmem:[#allocation2 + $0xd0] sm:$0xff] %vm890, %v609
  %918 = vst.msk [vmem:[#allocation2 + $0xd8] sm:$0xff] %vm890, %v612
  %919 = vst.msk [vmem:[#allocation2 + $0xe0] sm:$0xff] %vm890, %v615
  %920 = vst.msk [vmem:[#allocation2 + $0xe8] sm:$0xff] %vm890, %v618
  %921 = vst.msk [vmem:[#allocation2 + $0xf0] sm:$0xff] %vm890, %v621
  %922 = vst.msk [vmem:[#allocation2 + $0xf8] sm:$0xff] %vm890, %v624
  %923 = vst.msk [vmem:[#allocation2 + $0x100] sm:$0xff] %vm890, %v627
  %924 = vst.msk [vmem:[#allocation2 + $0x108] sm:$0xff] %vm890, %v630
  %925 = vst.msk [vmem:[#allocation2 + $0x110] sm:$0xff] %vm890, %v633
  %926 = vst.msk [vmem:[#allocation2 + $0x118] sm:$0xff] %vm890, %v636
  %927 = vst.msk [vmem:[#allocation2 + $0x120] sm:$0xff] %vm890, %v639
  %928 = vst.msk [vmem:[#allocation2 + $0x128] sm:$0xff] %vm890, %v642
  %929 = vst.msk [vmem:[#allocation2 + $0x130] sm:$0xff] %vm890, %v645
  %930 = vst.msk [vmem:[#allocation2 + $0x138] sm:$0xff] %vm890, %v648
  %931 = vst.msk [vmem:[#allocation2 + $0x140] sm:$0xff] %vm890, %v651
  %932 = vst.msk [vmem:[#allocation2 + $0x148] sm:$0xff] %vm890, %v654
  %933 = vst.msk [vmem:[#allocation2 + $0x150] sm:$0xff] %vm890, %v657
  %934 = vst.msk [vmem:[#allocation2 + $0x158] sm:$0xff] %vm890, %v660
  %935 = vst.msk [vmem:[#allocation2 + $0x160] sm:$0xff] %vm890, %v663
  %936 = vst.msk [vmem:[#allocation2 + $0x168] sm:$0xff] %vm890, %v666
  %937 = vst.msk [vmem:[#allocation2 + $0x170] sm:$0xff] %vm890, %v669
  %938 = vst.msk [vmem:[#allocation2 + $0x178] sm:$0xff] %vm890, %v672
  %939 = vst.msk [vmem:[#allocation2 + $0x180] sm:$0xff] %vm890, %v675
  %940 = vst.msk [vmem:[#allocation2 + $0x188] sm:$0xff] %vm890, %v678
  %941 = vst.msk [vmem:[#allocation2 + $0x190] sm:$0xff] %vm890, %v681
  %942 = vst.msk [vmem:[#allocation2 + $0x198] sm:$0xff] %vm890, %v684
  %943 = vst.msk [vmem:[#allocation2 + $0x1a0] sm:$0xff] %vm890, %v687
  %944 = vst.msk [vmem:[#allocation2 + $0x1a8] sm:$0xff] %vm890, %v690
  %945 = vst.msk [vmem:[#allocation2 + $0x1b0] sm:$0xff] %vm890, %v693
  %946 = vst.msk [vmem:[#allocation2 + $0x1b8] sm:$0xff] %vm890, %v696
  %947 = vst.msk [vmem:[#allocation2 + $0x1c0] sm:$0xff] %vm890, %v699
  %948 = vst.msk [vmem:[#allocation2 + $0x1c8] sm:$0xff] %vm890, %v702
  %949 = vst.msk [vmem:[#allocation2 + $0x1d0] sm:$0xff] %vm890, %v705
  %950 = vst.msk [vmem:[#allocation2 + $0x1d8] sm:$0xff] %vm890, %v708
  %951 = vst.msk [vmem:[#allocation2 + $0x1e0] sm:$0xff] %vm890, %v711
  %952 = vst.msk [vmem:[#allocation2 + $0x1e8] sm:$0xff] %vm890, %v714
  %953 = vst.msk [vmem:[#allocation2 + $0x1f0] sm:$0xff] %vm890, %v717
  %954 = vst.msk [vmem:[#allocation2 + $0x1f8] sm:$0xff] %vm890, %v720
  %955 = vst.msk [vmem:[#allocation2 + $0x200] sm:$0xff] %vm890, %v723
  %956 = vst.msk [vmem:[#allocation2 + $0x208] sm:$0xff] %vm890, %v726
  %957 = vst.msk [vmem:[#allocation2 + $0x210] sm:$0xff] %vm890, %v729
  %958 = vst.msk [vmem:[#allocation2 + $0x218] sm:$0xff] %vm890, %v732
  %959 = vst.msk [vmem:[#allocation2 + $0x220] sm:$0xff] %vm890, %v735
  %960 = vst.msk [vmem:[#allocation2 + $0x228] sm:$0xff] %vm890, %v738
  %961 = vst.msk [vmem:[#allocation2 + $0x230] sm:$0xff] %vm890, %v741
  %962 = vst.msk [vmem:[#allocation2 + $0x238] sm:$0xff] %vm890, %v744
  %963 = vst.msk [vmem:[#allocation2 + $0x240] sm:$0xff] %vm890, %v747
  %964 = vst.msk [vmem:[#allocation2 + $0x248] sm:$0xff] %vm890, %v750
  %965 = vst.msk [vmem:[#allocation2 + $0x250] sm:$0xff] %vm890, %v753
  %966 = vst.msk [vmem:[#allocation2 + $0x258] sm:$0xff] %vm890, %v756
  %967 = vst.msk [vmem:[#allocation2 + $0x260] sm:$0xff] %vm890, %v759
  %968 = vst.msk [vmem:[#allocation2 + $0x268] sm:$0xff] %vm890, %v762
  %969 = vst.msk [vmem:[#allocation2 + $0x270] sm:$0xff] %vm890, %v765
  %970 = vst.msk [vmem:[#allocation2 + $0x278] sm:$0xff] %vm890, %v768
  %971 = vst.msk [vmem:[#allocation2 + $0x280] sm:$0xff] %vm890, %v771
  %972 = vst.msk [vmem:[#allocation2 + $0x288] sm:$0xff] %vm890, %v774
  %973 = vst.msk [vmem:[#allocation2 + $0x290] sm:$0xff] %vm890, %v777
  %974 = vst.msk [vmem:[#allocation2 + $0x298] sm:$0xff] %vm890, %v780
  %975 = vst.msk [vmem:[#allocation2 + $0x2a0] sm:$0xff] %vm890, %v783
  %976 = vst.msk [vmem:[#allocation2 + $0x2a8] sm:$0xff] %vm890, %v786
  %977 = vst.msk [vmem:[#allocation2 + $0x2b0] sm:$0xff] %vm890, %v789
  %978 = vst.msk [vmem:[#allocation2 + $0x2b8] sm:$0xff] %vm890, %v792
  %979 = vst.msk [vmem:[#allocation2 + $0x2c0] sm:$0xff] %vm890, %v795
  %980 = vst.msk [vmem:[#allocation2 + $0x2c8] sm:$0xff] %vm890, %v798
  %981 = vst.msk [vmem:[#allocation2 + $0x2d0] sm:$0xff] %vm890, %v801
  %982 = vst.msk [vmem:[#allocation2 + $0x2d8] sm:$0xff] %vm890, %v804
  %983 = vst.msk [vmem:[#allocation2 + $0x2e0] sm:$0xff] %vm890, %v807
  %984 = vst.msk [vmem:[#allocation2 + $0x2e8] sm:$0xff] %vm890, %v810
  %985 = vst.msk [vmem:[#allocation2 + $0x2f0] sm:$0xff] %vm890, %v813
  %986 = vst.msk [vmem:[#allocation2 + $0x2f8] sm:$0xff] %vm890, %v816
  %987 = vst.msk [vmem:[#allocation2 + $0x300] sm:$0xff] %vm890, %v819
  %988 = vst.msk [vmem:[#allocation2 + $0x308] sm:$0xff] %vm890, %v822
  %989 = vst.msk [vmem:[#allocation2 + $0x310] sm:$0xff] %vm890, %v825
  %990 = vst.msk [vmem:[#allocation2 + $0x318] sm:$0xff] %vm890, %v828
  %991 = vst.msk [vmem:[#allocation2 + $0x320] sm:$0xff] %vm890, %v831
  %992 = vst.msk [vmem:[#allocation2 + $0x328] sm:$0xff] %vm890, %v834
  %993 = vst.msk [vmem:[#allocation2 + $0x330] sm:$0xff] %vm890, %v837
  %994 = vst.msk [vmem:[#allocation2 + $0x338] sm:$0xff] %vm890, %v840
  %995 = vst.msk [vmem:[#allocation2 + $0x340] sm:$0xff] %vm890, %v843
  %996 = vst.msk [vmem:[#allocation2 + $0x348] sm:$0xff] %vm890, %v846
  %997 = vst.msk [vmem:[#allocation2 + $0x350] sm:$0xff] %vm890, %v849
  %998 = vst.msk [vmem:[#allocation2 + $0x358] sm:$0xff] %vm890, %v852
  %999 = vst.msk [vmem:[#allocation2 + $0x360] sm:$0xff] %vm890, %v855
  %1000 = vst.msk [vmem:[#allocation2 + $0x368] sm:$0xff] %vm890, %v858
  %1001 = vst.msk [vmem:[#allocation2 + $0x370] sm:$0xff] %vm890, %v861
  %1002 = vst.msk [vmem:[#allocation2 + $0x378] sm:$0xff] %vm890, %v864
  %1003 = vst.msk [vmem:[#allocation2 + $0x380] sm:$0xff] %vm890, %v867
  %1004 = vst.msk [vmem:[#allocation2 + $0x388] sm:$0xff] %vm890, %v870
  %1005 = vst.msk [vmem:[#allocation2 + $0x390] sm:$0xff] %vm890, %v873
  %1006 = vst.msk [vmem:[#allocation2 + $0x398] sm:$0xff] %vm890, %v876
  %1007 = vst.msk [vmem:[#allocation2 + $0x3a0] sm:$0xff] %vm890, %v879
  %1008 = vst.msk [vmem:[#allocation2 + $0x3a8] sm:$0xff] %vm890, %v882
  %1009 = vst.msk [vmem:[#allocation2 + $0x3b0] sm:$0xff] %vm890, %v885
  %1010 = vst.msk [vmem:[#allocation2 + $0x3b8] sm:$0xff] %vm890, %v888
  %v1011 = vld [vmem:[%s3] sm:$0xf]
  %s1012 = scalar_lea.vmem %s2, 4
  %v1013 = vld [vmem:[%s1012] sm:$0xf]
  %s1014 = scalar_lea.vmem %s3, 4
  %v1015 = vld [vmem:[%s1014] sm:$0xf]
  %s1016 = scalar_lea.vmem %s4, 1
  %v1017 = vld [vmem:[%s1016] sm:$0x1]
  %v1019 = vperm.slane %v1017, 0
  %v1021 = vld [vmem:[#allocation2] sm:$0xff]
  %v1023 = vsel %vm152, 0, 0
  %vm1025 = vcmask 1043456
  %v1027 = vsel %vm1025, %v1011, 0
  %1029 = vmatpush.bf16.msra.mxu0 0
  %1030 = vmatpush.bf16.msra.mxu0 0
  %1031 = vmatpush.bf16.msra.mxu0 0
  %1032 = vmatpush.bf16.msra.mxu0 0
  %1033 = vmatpush.bf16.msra.mxu0 0
  %1034 = vmatpush.bf16.msra.mxu0 0
  %1035 = vmatpush.bf16.msra.mxu0 0
  %1036 = vmatpush.bf16.msra.mxu0 %v1027
  %1037 = vmatmul.bf16.gmra.mxu0 %v1023
  %v1038 = vpop.f32.mrf.mxu0
  %v1039 = vadd.f32 0.0, %v1038
  %v1040 = vpop.f32.mrf.mxu0
  %1041 = vdwg.mxu0
  %v1042 = vadd.f32 %v1021, %v1039
  %v1043 = vxor.u32 %v1042, 2147483648
  %v1044 = vmul.f32 %v1043, 1.442695
  %v1045 = vpow.pop %v1044
  %v1046 = vadd.f32 %v1045, 1.0
  %v1047 = vrcp.pop %v1046
  %v1048 = vmul.f32 %v1046, %v1047
  %v1049 = vsub.f32 1.0, %v1048
  %v1050 = vmul.f32 %v1047, %v1049
  %v1051 = vadd.f32 %v1047, %v1050
  %vm1052 = vweird.f32 %v1046
  %vm1053 = vweird.f32 %v1047
  %vm1054 = vmor %vm1052, %vm1053
  %v1055 = vsel %vm1054, %v1047, %v1051
  %v1056 = vand.u32 2147483647, %v1046
  %vm1057 = vcmp.eq.f32.partialorder %v1056, 8.507059e+37
  %v1058 = vand.u32 %v1046, 2147483648
  %v1059 = vor.u32 1.1754944e-38, %v1058
  %v1060 = vsel %vm1057, %v1059, %v1055
  %v1061 = vmul.f32 1.0, %v1060
  %v1062 = vtanh.pop %v1042
  %v1063 = vmul.f32 %v1061, 0.0
  %1065 = vrot.lane.b32.xlu0 %v1062, 104
  %v1066 = vpop.permute.xlu0 %1065
  %v1068 = vmul.f32 %v1061, %v1066
  %1070 = vrot.lane.b32.xlu0 %v1068, 8
  %v1071 = vpop.permute.xlu0 %1070
  %v1073 = vadd.f32 %v1063, %v1071
  %v1074 = vtanh.pop %v1073
  %1076 = vrot.lane.b32.xlu0 %v1074, 8
  %v1077 = vpop.permute.xlu0 %1076
  %v1079 = vmul.f32 %v1061, %v1077
  %v1080 = vpack.c.bf16 %v1079, %v1079
  %v1082 = vunpack.c.l.b16 %v1080
  %v1083 = vpack.c.b16 %v1082, %v1082
  %1084 = vrot.lane.b32.xlu0 %v1083, 112
  %v1085 = vpop.permute.xlu0 %1084
  %v1087 = vsel %vm152, %v1085, 0
  %1089 = vmatpush.bf16.msra.mxu0 0
  %1090 = vmatpush.bf16.msra.mxu0 0
  %1091 = vmatpush.bf16.msra.mxu0 0
  %1092 = vmatpush.bf16.msra.mxu0 0
  %1093 = vmatpush.bf16.msra.mxu0 0
  %1094 = vmatpush.bf16.msra.mxu0 0
  %1095 = vmatpush.bf16.msra.mxu0 0
  %1096 = vmatpush.bf16.msra.mxu0 %v1027
  %1097 = vmatmul.bf16.gmra.mxu0 %v1087
  %v1098 = vpop.f32.mrf.mxu0
  %v1099 = vadd.f32 0.0, %v1098
  %v1100 = vpop.f32.mrf.mxu0
  %1101 = vdwg.mxu0
  %v1103 = vrot.slane %v1099, 6
  %v1105 = vadd.f32 %v1021, %v1103
  %v1106 = vxor.u32 %v1105, 2147483648
  %v1107 = vmul.f32 %v1106, 1.442695
  %v1108 = vpow.pop %v1107
  %v1109 = vadd.f32 %v1108, 1.0
  %v1110 = vrcp.pop %v1109
  %v1111 = vmul.f32 %v1109, %v1110
  %v1112 = vsub.f32 1.0, %v1111
  %v1113 = vmul.f32 %v1110, %v1112
  %v1114 = vadd.f32 %v1110, %v1113
  %vm1115 = vweird.f32 %v1109
  %vm1116 = vweird.f32 %v1110
  %vm1117 = vmor %vm1115, %vm1116
  %v1118 = vsel %vm1117, %v1110, %v1114
  %v1119 = vand.u32 2147483647, %v1109
  %vm1120 = vcmp.eq.f32.partialorder %v1119, 8.507059e+37
  %v1121 = vand.u32 %v1109, 2147483648
  %v1122 = vor.u32 1.1754944e-38, %v1121
  %v1123 = vsel %vm1120, %v1122, %v1118
  %v1124 = vmul.f32 1.0, %v1123
  %v1125 = vtanh.pop %v1105
  %v1127 = vrot.slane %v1073, 6
  %v1129 = vmul.f32 %v1124, %v1127
  %1131 = vrot.lane.b32.xlu0 %v1125, 104
  %v1132 = vpop.permute.xlu0 %1131
  %v1134 = vmul.f32 %v1124, %v1132
  %1136 = vrot.lane.b32.xlu0 %v1134, 8
  %v1137 = vpop.permute.xlu0 %1136
  %v1139 = vadd.f32 %v1129, %v1137
  %v1140 = vtanh.pop %v1139
  %1142 = vrot.lane.b32.xlu0 %v1140, 8
  %v1143 = vpop.permute.xlu0 %1142
  %v1145 = vmul.f32 %v1124, %v1143
  %v1146 = vpack.c.bf16 %v1145, %v1145
  %v1148 = vunpack.c.l.b16 %v1146
  %v1149 = vpack.c.b16 %v1148, %v1148
  %v1150 = vrot.slane %v1149, 1
  %1151 = vrot.lane.b32.xlu0 %v1150, 112
  %v1152 = vpop.permute.xlu0 %1151
  %v1154 = vsel %vm152, %v1152, 0
  %1156 = vmatpush.bf16.msra.mxu0 0
  %1157 = vmatpush.bf16.msra.mxu0 0
  %1158 = vmatpush.bf16.msra.mxu0 0
  %1159 = vmatpush.bf16.msra.mxu0 0
  %1160 = vmatpush.bf16.msra.mxu0 0
  %1161 = vmatpush.bf16.msra.mxu0 0
  %1162 = vmatpush.bf16.msra.mxu0 0
  %1163 = vmatpush.bf16.msra.mxu0 %v1027
  %1164 = vmatmul.bf16.gmra.mxu0 %v1154
  %v1165 = vpop.f32.mrf.mxu0
  %v1166 = vadd.f32 0.0, %v1165
  %v1167 = vpop.f32.mrf.mxu0
  %1168 = vdwg.mxu0
  %v1170 = vrot.slane %v1166, 4
  %v1172 = vadd.f32 %v1021, %v1170
  %v1173 = vxor.u32 %v1172, 2147483648
  %v1174 = vmul.f32 %v1173, 1.442695
  %v1175 = vpow.pop %v1174
  %v1176 = vadd.f32 %v1175, 1.0
  %v1177 = vrcp.pop %v1176
  %v1178 = vmul.f32 %v1176, %v1177
  %v1179 = vsub.f32 1.0, %v1178
  %v1180 = vmul.f32 %v1177, %v1179
  %v1181 = vadd.f32 %v1177, %v1180
  %vm1182 = vweird.f32 %v1176
  %vm1183 = vweird.f32 %v1177
  %vm1184 = vmor %vm1182, %vm1183
  %v1185 = vsel %vm1184, %v1177, %v1181
  %v1186 = vand.u32 2147483647, %v1176
  %vm1187 = vcmp.eq.f32.partialorder %v1186, 8.507059e+37
  %v1188 = vand.u32 %v1176, 2147483648
  %v1189 = vor.u32 1.1754944e-38, %v1188
  %v1190 = vsel %vm1187, %v1189, %v1185
  %v1191 = vmul.f32 1.0, %v1190
  %v1192 = vtanh.pop %v1172
  %v1194 = vrot.slane %v1139, 6
  %v1196 = vmul.f32 %v1191, %v1194
  %1198 = vrot.lane.b32.xlu0 %v1192, 104
  %v1199 = vpop.permute.xlu0 %1198
  %v1201 = vmul.f32 %v1191, %v1199
  %1203 = vrot.lane.b32.xlu0 %v1201, 8
  %v1204 = vpop.permute.xlu0 %1203
  %v1206 = vadd.f32 %v1196, %v1204
  %v1207 = vtanh.pop %v1206
  %1209 = vrot.lane.b32.xlu0 %v1207, 8
  %v1210 = vpop.permute.xlu0 %1209
  %v1212 = vmul.f32 %v1191, %v1210
  %v1213 = vpack.c.bf16 %v1212, %v1212
  %v1215 = vunpack.c.l.b16 %v1213
  %v1216 = vpack.c.b16 %v1215, %v1215
  %v1217 = vrot.slane %v1216, 2
  %1218 = vrot.lane.b32.xlu0 %v1217, 112
  %v1219 = vpop.permute.xlu0 %1218
  %v1221 = vsel %vm152, %v1219, 0
  %1223 = vmatpush.bf16.msra.mxu0 0
  %1224 = vmatpush.bf16.msra.mxu0 0
  %1225 = vmatpush.bf16.msra.mxu0 0
  %1226 = vmatpush.bf16.msra.mxu0 0
  %1227 = vmatpush.bf16.msra.mxu0 0
  %1228 = vmatpush.bf16.msra.mxu0 0
  %1229 = vmatpush.bf16.msra.mxu0 0
  %1230 = vmatpush.bf16.msra.mxu0 %v1027
  %1231 = vmatmul.bf16.gmra.mxu0 %v1221
  %v1232 = vpop.f32.mrf.mxu0
  %v1233 = vadd.f32 0.0, %v1232
  %v1234 = vpop.f32.mrf.mxu0
  %1235 = vdwg.mxu0
  %v1237 = vrot.slane %v1233, 2
  %v1239 = vadd.f32 %v1021, %v1237
  %v1240 = vxor.u32 %v1239, 2147483648
  %v1241 = vmul.f32 %v1240, 1.442695
  %v1242 = vpow.pop %v1241
  %v1243 = vadd.f32 %v1242, 1.0
  %v1244 = vrcp.pop %v1243
  %v1245 = vmul.f32 %v1243, %v1244
  %v1246 = vsub.f32 1.0, %v1245
  %v1247 = vmul.f32 %v1244, %v1246
  %v1248 = vadd.f32 %v1244, %v1247
  %vm1249 = vweird.f32 %v1243
  %vm1250 = vweird.f32 %v1244
  %vm1251 = vmor %vm1249, %vm1250
  %v1252 = vsel %vm1251, %v1244, %v1248
  %v1253 = vand.u32 2147483647, %v1243
  %vm1254 = vcmp.eq.f32.partialorder %v1253, 8.507059e+37
  %v1255 = vand.u32 %v1243, 2147483648
  %v1256 = vor.u32 1.1754944e-38, %v1255
  %v1257 = vsel %vm1254, %v1256, %v1252
  %v1258 = vmul.f32 1.0, %v1257
  %v1259 = vtanh.pop %v1239
  %v1261 = vrot.slane %v1206, 6
  %v1263 = vmul.f32 %v1258, %v1261
  %1265 = vrot.lane.b32.xlu0 %v1259, 104
  %v1266 = vpop.permute.xlu0 %1265
  %v1268 = vmul.f32 %v1258, %v1266
  %1270 = vrot.lane.b32.xlu0 %v1268, 8
  %v1271 = vpop.permute.xlu0 %1270
  %v1273 = vadd.f32 %v1263, %v1271
  %v1274 = vtanh.pop %v1273
  %1276 = vrot.lane.b32.xlu0 %v1274, 8
  %v1277 = vpop.permute.xlu0 %1276
  %v1279 = vmul.f32 %v1258, %v1277
  %v1280 = vpack.c.bf16 %v1279, %v1279
  loop: start=1, step=1, limit=120
  $region30: #{mylstm_forward.1} parent=0 // loop_pre_header
    _
  $region31: #{mylstm_forward.1} parent=0 // loop_header
    %s1282 = sphi 1, %s1286
    %p1283 = scmp.ge.s32.totalorder %s1282, 120
    %v1287 = vphi %v1280, %v1833
    %v1288 = vphi %v1273, %v1826
    %v1289 = vphi 0, %v1904
    %v1290 = vphi 0.0, %v1897
    %v1291 = vphi %v1080, %v1361
    %v1292 = vphi %v1146, %v1523
    %v1293 = vphi %v1213, %v1678
  $region32: #{mylstm_forward.1} parent=0 // loop_header_branch
    %1285 = sbr.rel (%p1283) target = $region36
  $region33: #{mylstm_forward.1} parent=0 // loop_body
    %s1294 = smul.u32 %s1282, 4
    %s1295 = smul.u32 %s1282, 8
    %s1296 = scalar_lea.vmem [#allocation2], %s1295
    %v1297 = vld [vmem:[%s1296] sm:$0xff]
    %v1299 = vunpack.c.l.b16 %v1287
    %v1300 = vpack.c.b16 %v1299, %v1299
    %v1301 = vrot.slane %v1300, 3
    %1302 = vrot.lane.b32.xlu0 %v1301, 112
    %v1303 = vpop.permute.xlu0 %1302
    %v1305 = vsel %vm152, %v1303, 0
    %1307 = vmatpush.bf16.msra.mxu0 0
    %1308 = vmatpush.bf16.msra.mxu0 0
    %1309 = vmatpush.bf16.msra.mxu0 0
    %1310 = vmatpush.bf16.msra.mxu0 0
    %1311 = vmatpush.bf16.msra.mxu0 0
    %1312 = vmatpush.bf16.msra.mxu0 0
    %1313 = vmatpush.bf16.msra.mxu0 0
    %1314 = vmatpush.bf16.msra.mxu0 %v1027
    %1315 = vmatmul.bf16.gmra.mxu0 %v1305
    %v1316 = vpop.f32.mrf.mxu0
    %v1317 = vadd.f32 0.0, %v1316
    %v1318 = vpop.f32.mrf.mxu0
    %1319 = vdwg.mxu0
    %v1320 = vadd.f32 %v1297, %v1317
    %v1321 = vxor.u32 %v1320, 2147483648
    %v1322 = vmul.f32 %v1321, 1.442695
    %v1323 = vpow.pop %v1322
    %v1324 = vadd.f32 %v1323, 1.0
    %v1325 = vrcp.pop %v1324
    %v1326 = vmul.f32 %v1324, %v1325
    %v1327 = vsub.f32 1.0, %v1326
    %v1328 = vmul.f32 %v1325, %v1327
    %v1329 = vadd.f32 %v1325, %v1328
    %vm1330 = vweird.f32 %v1324
    %vm1331 = vweird.f32 %v1325
    %vm1332 = vmor %vm1330, %vm1331
    %v1333 = vsel %vm1332, %v1325, %v1329
    %v1334 = vand.u32 2147483647, %v1324
    %vm1335 = vcmp.eq.f32.partialorder %v1334, 8.507059e+37
    %v1336 = vand.u32 %v1324, 2147483648
    %v1337 = vor.u32 1.1754944e-38, %v1336
    %v1338 = vsel %vm1335, %v1337, %v1333
    %v1339 = vmul.f32 1.0, %v1338
    %v1340 = vtanh.pop %v1320
    %v1342 = vrot.slane %v1288, 6
    %v1344 = vmul.f32 %v1339, %v1342
    %1346 = vrot.lane.b32.xlu0 %v1340, 104
    %v1347 = vpop.permute.xlu0 %1346
    %v1349 = vmul.f32 %v1339, %v1347
    %1351 = vrot.lane.b32.xlu0 %v1349, 8
    %v1352 = vpop.permute.xlu0 %1351
    %v1354 = vadd.f32 %v1344, %v1352
    %v1355 = vtanh.pop %v1354
    %1357 = vrot.lane.b32.xlu0 %v1355, 8
    %v1358 = vpop.permute.xlu0 %1357
    %v1360 = vmul.f32 %v1339, %v1358
    %v1361 = vpack.c.bf16 %v1360, %v1360
    %v1363 = vunpack.c.l.b16 %v1291
    %v1364 = vpack.c.b16 %v1363, %v1363
    %1365 = vrot.lane.b32.xlu0 %v1364, 112
    %v1366 = vpop.permute.xlu0 %1365
    %v1368 = vsel %vm152, %v1366, 0
    %v1371 = vsel %vm1025, %v1013, 0
    %1373 = vmatpush.bf16.msra.mxu0 0
    %1374 = vmatpush.bf16.msra.mxu0 0
    %1375 = vmatpush.bf16.msra.mxu0 0
    %1376 = vmatpush.bf16.msra.mxu0 0
    %1377 = vmatpush.bf16.msra.mxu0 0
    %1378 = vmatpush.bf16.msra.mxu0 0
    %1379 = vmatpush.bf16.msra.mxu0 0
    %1380 = vmatpush.bf16.msra.mxu0 %v1371
    %1381 = vmatmul.bf16.gmra.mxu0 %v1368
    %v1382 = vpop.f32.mrf.mxu0
    %v1383 = vadd.f32 %v1019, %v1382
    %v1384 = vpop.f32.mrf.mxu0
    %1385 = vdwg.mxu0
    %v1387 = vunpack.c.l.b16 %v1289
    %v1388 = vpack.c.b16 %v1387, %v1387
    %1389 = vrot.lane.b32.xlu0 %v1388, 112
    %v1390 = vpop.permute.xlu0 %1389
    %v1392 = vsel %vm152, %v1390, 0
    %v1395 = vsel %vm1025, %v1015, 0
    %1397 = vmatpush.bf16.msra.mxu0 0
    %1398 = vmatpush.bf16.msra.mxu0 0
    %1399 = vmatpush.bf16.msra.mxu0 0
    %1400 = vmatpush.bf16.msra.mxu0 0
    %1401 = vmatpush.bf16.msra.mxu0 0
    %1402 = vmatpush.bf16.msra.mxu0 0
    %1403 = vmatpush.bf16.msra.mxu0 0
    %1404 = vmatpush.bf16.msra.mxu0 %v1395
    %1405 = vmatmul.bf16.gmra.mxu0 %v1392
    %v1406 = vpop.f32.mrf.mxu0
    %v1407 = vadd.f32 0.0, %v1406
    %v1408 = vpop.f32.mrf.mxu0
    %1409 = vdwg.mxu0
    %v1410 = vadd.f32 %v1383, %v1407
    %v1411 = vxor.u32 %v1410, 2147483648
    %v1412 = vmul.f32 %v1411, 1.442695
    %v1413 = vpow.pop %v1412
    %v1414 = vadd.f32 %v1413, 1.0
    %v1415 = vrcp.pop %v1414
    %v1416 = vmul.f32 %v1414, %v1415
    %v1417 = vsub.f32 1.0, %v1416
    %v1418 = vmul.f32 %v1415, %v1417
    %v1419 = vadd.f32 %v1415, %v1418
    %vm1420 = vweird.f32 %v1414
    %vm1421 = vweird.f32 %v1415
    %vm1422 = vmor %vm1420, %vm1421
    %v1423 = vsel %vm1422, %v1415, %v1419
    %v1424 = vand.u32 2147483647, %v1414
    %vm1425 = vcmp.eq.f32.partialorder %v1424, 8.507059e+37
    %v1426 = vand.u32 %v1414, 2147483648
    %v1427 = vor.u32 1.1754944e-38, %v1426
    %v1428 = vsel %vm1425, %v1427, %v1423
    %v1429 = vmul.f32 1.0, %v1428
    %v1430 = vtanh.pop %v1410
    %v1431 = vmul.f32 %v1429, %v1290
    %1433 = vrot.lane.b32.xlu0 %v1430, 104
    %v1434 = vpop.permute.xlu0 %1433
    %v1436 = vmul.f32 %v1429, %v1434
    %1438 = vrot.lane.b32.xlu0 %v1436, 8
    %v1439 = vpop.permute.xlu0 %1438
    %v1441 = vadd.f32 %v1431, %v1439
    %v1442 = vtanh.pop %v1441
    %1444 = vrot.lane.b32.xlu0 %v1442, 8
    %v1445 = vpop.permute.xlu0 %1444
    %v1447 = vmul.f32 %v1429, %v1445
    %v1448 = vpack.c.bf16 %v1447, %v1447
    %s1449 = ssub.s32 %s1294, 4
    %1451 = vrot.lane.b32.xlu0 %v1447, 112
    %v1452 = vpop.permute.xlu0 %1451
    %s1454 = smul.u32 %s1449, 2
    %s1455 = scalar_lea.vmem [#allocation3], %s1454
    %vm1456 = vcmask 58368
    %1457 = vst.msk [vmem:[%s1455] sm:$0x3] %vm1456, %v1452
    %v1459 = vunpack.c.l.b16 %v1361
    %v1460 = vpack.c.b16 %v1459, %v1459
    %1461 = vrot.lane.b32.xlu0 %v1460, 112
    %v1462 = vpop.permute.xlu0 %1461
    %v1464 = vsel %vm152, %v1462, 0
    %1466 = vmatpush.bf16.msra.mxu0 0
    %1467 = vmatpush.bf16.msra.mxu0 0
    %1468 = vmatpush.bf16.msra.mxu0 0
    %1469 = vmatpush.bf16.msra.mxu0 0
    %1470 = vmatpush.bf16.msra.mxu0 0
    %1471 = vmatpush.bf16.msra.mxu0 0
    %1472 = vmatpush.bf16.msra.mxu0 0
    %1473 = vmatpush.bf16.msra.mxu0 %v1027
    %1474 = vmatmul.bf16.gmra.mxu0 %v1464
    %v1475 = vpop.f32.mrf.mxu0
    %v1476 = vadd.f32 0.0, %v1475
    %v1477 = vpop.f32.mrf.mxu0
    %1478 = vdwg.mxu0
    %v1480 = vrot.slane %v1476, 6
    %v1482 = vadd.f32 %v1297, %v1480
    %v1483 = vxor.u32 %v1482, 2147483648
    %v1484 = vmul.f32 %v1483, 1.442695
    %v1485 = vpow.pop %v1484
    %v1486 = vadd.f32 %v1485, 1.0
    %v1487 = vrcp.pop %v1486
    %v1488 = vmul.f32 %v1486, %v1487
    %v1489 = vsub.f32 1.0, %v1488
    %v1490 = vmul.f32 %v1487, %v1489
    %v1491 = vadd.f32 %v1487, %v1490
    %vm1492 = vweird.f32 %v1486
    %vm1493 = vweird.f32 %v1487
    %vm1494 = vmor %vm1492, %vm1493
    %v1495 = vsel %vm1494, %v1487, %v1491
    %v1496 = vand.u32 2147483647, %v1486
    %vm1497 = vcmp.eq.f32.partialorder %v1496, 8.507059e+37
    %v1498 = vand.u32 %v1486, 2147483648
    %v1499 = vor.u32 1.1754944e-38, %v1498
    %v1500 = vsel %vm1497, %v1499, %v1495
    %v1501 = vmul.f32 1.0, %v1500
    %v1502 = vtanh.pop %v1482
    %v1504 = vrot.slane %v1354, 6
    %v1506 = vmul.f32 %v1501, %v1504
    %1508 = vrot.lane.b32.xlu0 %v1502, 104
    %v1509 = vpop.permute.xlu0 %1508
    %v1511 = vmul.f32 %v1501, %v1509
    %1513 = vrot.lane.b32.xlu0 %v1511, 8
    %v1514 = vpop.permute.xlu0 %1513
    %v1516 = vadd.f32 %v1506, %v1514
    %v1517 = vtanh.pop %v1516
    %1519 = vrot.lane.b32.xlu0 %v1517, 8
    %v1520 = vpop.permute.xlu0 %1519
    %v1522 = vmul.f32 %v1501, %v1520
    %v1523 = vpack.c.bf16 %v1522, %v1522
    %v1525 = vunpack.c.l.b16 %v1292
    %v1526 = vpack.c.b16 %v1525, %v1525
    %v1527 = vrot.slane %v1526, 1
    %1528 = vrot.lane.b32.xlu0 %v1527, 112
    %v1529 = vpop.permute.xlu0 %1528
    %v1531 = vsel %vm152, %v1529, 0
    %1533 = vmatpush.bf16.msra.mxu0 0
    %1534 = vmatpush.bf16.msra.mxu0 0
    %1535 = vmatpush.bf16.msra.mxu0 0
    %1536 = vmatpush.bf16.msra.mxu0 0
    %1537 = vmatpush.bf16.msra.mxu0 0
    %1538 = vmatpush.bf16.msra.mxu0 0
    %1539 = vmatpush.bf16.msra.mxu0 0
    %1540 = vmatpush.bf16.msra.mxu0 %v1371
    %1541 = vmatmul.bf16.gmra.mxu0 %v1531
    %v1542 = vpop.f32.mrf.mxu0
    %v1543 = vadd.f32 %v1019, %v1542
    %v1544 = vpop.f32.mrf.mxu0
    %1545 = vdwg.mxu0
    %1547 = vrot.lane.b32.xlu0 %v1448, 112
    %v1548 = vpop.permute.xlu0 %1547
    %v1550 = vsel %vm152, %v1548, 0
    %1552 = vmatpush.bf16.msra.mxu0 0
    %1553 = vmatpush.bf16.msra.mxu0 0
    %1554 = vmatpush.bf16.msra.mxu0 0
    %1555 = vmatpush.bf16.msra.mxu0 0
    %1556 = vmatpush.bf16.msra.mxu0 0
    %1557 = vmatpush.bf16.msra.mxu0 0
    %1558 = vmatpush.bf16.msra.mxu0 0
    %1559 = vmatpush.bf16.msra.mxu0 %v1395
    %1560 = vmatmul.bf16.gmra.mxu0 %v1550
    %v1561 = vpop.f32.mrf.mxu0
    %v1562 = vadd.f32 0.0, %v1561
    %v1563 = vpop.f32.mrf.mxu0
    %1564 = vdwg.mxu0
    %v1565 = vadd.f32 %v1543, %v1562
    %v1566 = vxor.u32 %v1565, 2147483648
    %v1567 = vmul.f32 %v1566, 1.442695
    %v1568 = vpow.pop %v1567
    %v1569 = vadd.f32 %v1568, 1.0
    %v1570 = vrcp.pop %v1569
    %v1571 = vmul.f32 %v1569, %v1570
    %v1572 = vsub.f32 1.0, %v1571
    %v1573 = vmul.f32 %v1570, %v1572
    %v1574 = vadd.f32 %v1570, %v1573
    %vm1575 = vweird.f32 %v1569
    %vm1576 = vweird.f32 %v1570
    %vm1577 = vmor %vm1575, %vm1576
    %v1578 = vsel %vm1577, %v1570, %v1574
    %v1579 = vand.u32 2147483647, %v1569
    %vm1580 = vcmp.eq.f32.partialorder %v1579, 8.507059e+37
    %v1581 = vand.u32 %v1569, 2147483648
    %v1582 = vor.u32 1.1754944e-38, %v1581
    %v1583 = vsel %vm1580, %v1582, %v1578
    %v1584 = vmul.f32 1.0, %v1583
    %v1585 = vtanh.pop %v1565
    %v1586 = vmul.f32 %v1584, %v1441
    %1588 = vrot.lane.b32.xlu0 %v1585, 104
    %v1589 = vpop.permute.xlu0 %1588
    %v1591 = vmul.f32 %v1584, %v1589
    %1593 = vrot.lane.b32.xlu0 %v1591, 8
    %v1594 = vpop.permute.xlu0 %1593
    %v1596 = vadd.f32 %v1586, %v1594
    %v1597 = vtanh.pop %v1596
    %1599 = vrot.lane.b32.xlu0 %v1597, 8
    %v1600 = vpop.permute.xlu0 %1599
    %v1602 = vmul.f32 %v1584, %v1600
    %v1603 = vpack.c.bf16 %v1602, %v1602
    %s1604 = sadd.s32 %s1294, 4294967293
    %1606 = vrot.lane.b32.xlu0 %v1602, 112
    %v1607 = vpop.permute.xlu0 %1606
    %s1609 = smul.u32 %s1604, 2
    %s1610 = scalar_lea.vmem [#allocation3], %s1609
    %1611 = vst.msk [vmem:[%s1610] sm:$0x3] %vm1456, %v1607
    %v1613 = vunpack.c.l.b16 %v1523
    %v1614 = vpack.c.b16 %v1613, %v1613
    %v1615 = vrot.slane %v1614, 1
    %1616 = vrot.lane.b32.xlu0 %v1615, 112
    %v1617 = vpop.permute.xlu0 %1616
    %v1619 = vsel %vm152, %v1617, 0
    %1621 = vmatpush.bf16.msra.mxu0 0
    %1622 = vmatpush.bf16.msra.mxu0 0
    %1623 = vmatpush.bf16.msra.mxu0 0
    %1624 = vmatpush.bf16.msra.mxu0 0
    %1625 = vmatpush.bf16.msra.mxu0 0
    %1626 = vmatpush.bf16.msra.mxu0 0
    %1627 = vmatpush.bf16.msra.mxu0 0
    %1628 = vmatpush.bf16.msra.mxu0 %v1027
    %1629 = vmatmul.bf16.gmra.mxu0 %v1619
    %v1630 = vpop.f32.mrf.mxu0
    %v1631 = vadd.f32 0.0, %v1630
    %v1632 = vpop.f32.mrf.mxu0
    %1633 = vdwg.mxu0
    %v1635 = vrot.slane %v1631, 4
    %v1637 = vadd.f32 %v1297, %v1635
    %v1638 = vxor.u32 %v1637, 2147483648
    %v1639 = vmul.f32 %v1638, 1.442695
    %v1640 = vpow.pop %v1639
    %v1641 = vadd.f32 %v1640, 1.0
    %v1642 = vrcp.pop %v1641
    %v1643 = vmul.f32 %v1641, %v1642
    %v1644 = vsub.f32 1.0, %v1643
    %v1645 = vmul.f32 %v1642, %v1644
    %v1646 = vadd.f32 %v1642, %v1645
    %vm1647 = vweird.f32 %v1641
    %vm1648 = vweird.f32 %v1642
    %vm1649 = vmor %vm1647, %vm1648
    %v1650 = vsel %vm1649, %v1642, %v1646
    %v1651 = vand.u32 2147483647, %v1641
    %vm1652 = vcmp.eq.f32.partialorder %v1651, 8.507059e+37
    %v1653 = vand.u32 %v1641, 2147483648
    %v1654 = vor.u32 1.1754944e-38, %v1653
    %v1655 = vsel %vm1652, %v1654, %v1650
    %v1656 = vmul.f32 1.0, %v1655
    %v1657 = vtanh.pop %v1637
    %v1659 = vrot.slane %v1516, 6
    %v1661 = vmul.f32 %v1656, %v1659
    %1663 = vrot.lane.b32.xlu0 %v1657, 104
    %v1664 = vpop.permute.xlu0 %1663
    %v1666 = vmul.f32 %v1656, %v1664
    %1668 = vrot.lane.b32.xlu0 %v1666, 8
    %v1669 = vpop.permute.xlu0 %1668
    %v1671 = vadd.f32 %v1661, %v1669
    %v1672 = vtanh.pop %v1671
    %1674 = vrot.lane.b32.xlu0 %v1672, 8
    %v1675 = vpop.permute.xlu0 %1674
    %v1677 = vmul.f32 %v1656, %v1675
    %v1678 = vpack.c.bf16 %v1677, %v1677
    %v1680 = vunpack.c.l.b16 %v1293
    %v1681 = vpack.c.b16 %v1680, %v1680
    %v1682 = vrot.slane %v1681, 2
    %1683 = vrot.lane.b32.xlu0 %v1682, 112
    %v1684 = vpop.permute.xlu0 %1683
    %v1686 = vsel %vm152, %v1684, 0
    %1688 = vmatpush.bf16.msra.mxu0 0
    %1689 = vmatpush.bf16.msra.mxu0 0
    %1690 = vmatpush.bf16.msra.mxu0 0
    %1691 = vmatpush.bf16.msra.mxu0 0
    %1692 = vmatpush.bf16.msra.mxu0 0
    %1693 = vmatpush.bf16.msra.mxu0 0
    %1694 = vmatpush.bf16.msra.mxu0 0
    %1695 = vmatpush.bf16.msra.mxu0 %v1371
    %1696 = vmatmul.bf16.gmra.mxu0 %v1686
    %v1697 = vpop.f32.mrf.mxu0
    %v1698 = vadd.f32 %v1019, %v1697
    %v1699 = vpop.f32.mrf.mxu0
    %1700 = vdwg.mxu0
    %1702 = vrot.lane.b32.xlu0 %v1603, 112
    %v1703 = vpop.permute.xlu0 %1702
    %v1705 = vsel %vm152, %v1703, 0
    %1707 = vmatpush.bf16.msra.mxu0 0
    %1708 = vmatpush.bf16.msra.mxu0 0
    %1709 = vmatpush.bf16.msra.mxu0 0
    %1710 = vmatpush.bf16.msra.mxu0 0
    %1711 = vmatpush.bf16.msra.mxu0 0
    %1712 = vmatpush.bf16.msra.mxu0 0
    %1713 = vmatpush.bf16.msra.mxu0 0
    %1714 = vmatpush.bf16.msra.mxu0 %v1395
    %1715 = vmatmul.bf16.gmra.mxu0 %v1705
    %v1716 = vpop.f32.mrf.mxu0
    %v1717 = vadd.f32 0.0, %v1716
    %v1718 = vpop.f32.mrf.mxu0
    %1719 = vdwg.mxu0
    %v1720 = vadd.f32 %v1698, %v1717
    %v1721 = vxor.u32 %v1720, 2147483648
    %v1722 = vmul.f32 %v1721, 1.442695
    %v1723 = vpow.pop %v1722
    %v1724 = vadd.f32 %v1723, 1.0
    %v1725 = vrcp.pop %v1724
    %v1726 = vmul.f32 %v1724, %v1725
    %v1727 = vsub.f32 1.0, %v1726
    %v1728 = vmul.f32 %v1725, %v1727
    %v1729 = vadd.f32 %v1725, %v1728
    %vm1730 = vweird.f32 %v1724
    %vm1731 = vweird.f32 %v1725
    %vm1732 = vmor %vm1730, %vm1731
    %v1733 = vsel %vm1732, %v1725, %v1729
    %v1734 = vand.u32 2147483647, %v1724
    %vm1735 = vcmp.eq.f32.partialorder %v1734, 8.507059e+37
    %v1736 = vand.u32 %v1724, 2147483648
    %v1737 = vor.u32 1.1754944e-38, %v1736
    %v1738 = vsel %vm1735, %v1737, %v1733
    %v1739 = vmul.f32 1.0, %v1738
    %v1740 = vtanh.pop %v1720
    %v1741 = vmul.f32 %v1739, %v1596
    %1743 = vrot.lane.b32.xlu0 %v1740, 104
    %v1744 = vpop.permute.xlu0 %1743
    %v1746 = vmul.f32 %v1739, %v1744
    %1748 = vrot.lane.b32.xlu0 %v1746, 8
    %v1749 = vpop.permute.xlu0 %1748
    %v1751 = vadd.f32 %v1741, %v1749
    %v1752 = vtanh.pop %v1751
    %1754 = vrot.lane.b32.xlu0 %v1752, 8
    %v1755 = vpop.permute.xlu0 %1754
    %v1757 = vmul.f32 %v1739, %v1755
    %v1758 = vpack.c.bf16 %v1757, %v1757
    %s1759 = sadd.s32 %s1294, 4294967294
    %1761 = vrot.lane.b32.xlu0 %v1757, 112
    %v1762 = vpop.permute.xlu0 %1761
    %s1764 = smul.u32 %s1759, 2
    %s1765 = scalar_lea.vmem [#allocation3], %s1764
    %1766 = vst.msk [vmem:[%s1765] sm:$0x3] %vm1456, %v1762
    %v1768 = vunpack.c.l.b16 %v1678
    %v1769 = vpack.c.b16 %v1768, %v1768
    %v1770 = vrot.slane %v1769, 2
    %1771 = vrot.lane.b32.xlu0 %v1770, 112
    %v1772 = vpop.permute.xlu0 %1771
    %v1774 = vsel %vm152, %v1772, 0
    %1776 = vmatpush.bf16.msra.mxu0 0
    %1777 = vmatpush.bf16.msra.mxu0 0
    %1778 = vmatpush.bf16.msra.mxu0 0
    %1779 = vmatpush.bf16.msra.mxu0 0
    %1780 = vmatpush.bf16.msra.mxu0 0
    %1781 = vmatpush.bf16.msra.mxu0 0
    %1782 = vmatpush.bf16.msra.mxu0 0
    %1783 = vmatpush.bf16.msra.mxu0 %v1027
    %1784 = vmatmul.bf16.gmra.mxu0 %v1774
    %v1785 = vpop.f32.mrf.mxu0
    %v1786 = vadd.f32 0.0, %v1785
    %v1787 = vpop.f32.mrf.mxu0
    %1788 = vdwg.mxu0
    %v1790 = vrot.slane %v1786, 2
    %v1792 = vadd.f32 %v1297, %v1790
    %v1793 = vxor.u32 %v1792, 2147483648
    %v1794 = vmul.f32 %v1793, 1.442695
    %v1795 = vpow.pop %v1794
    %v1796 = vadd.f32 %v1795, 1.0
    %v1797 = vrcp.pop %v1796
    %v1798 = vmul.f32 %v1796, %v1797
    %v1799 = vsub.f32 1.0, %v1798
    %v1800 = vmul.f32 %v1797, %v1799
    %v1801 = vadd.f32 %v1797, %v1800
    %vm1802 = vweird.f32 %v1796
    %vm1803 = vweird.f32 %v1797
    %vm1804 = vmor %vm1802, %vm1803
    %v1805 = vsel %vm1804, %v1797, %v1801
    %v1806 = vand.u32 2147483647, %v1796
    %vm1807 = vcmp.eq.f32.partialorder %v1806, 8.507059e+37
    %v1808 = vand.u32 %v1796, 2147483648
    %v1809 = vor.u32 1.1754944e-38, %v1808
    %v1810 = vsel %vm1807, %v1809, %v1805
    %v1811 = vmul.f32 1.0, %v1810
    %v1812 = vtanh.pop %v1792
    %v1814 = vrot.slane %v1671, 6
    %v1816 = vmul.f32 %v1811, %v1814
    %1818 = vrot.lane.b32.xlu0 %v1812, 104
    %v1819 = vpop.permute.xlu0 %1818
    %v1821 = vmul.f32 %v1811, %v1819
    %1823 = vrot.lane.b32.xlu0 %v1821, 8
    %v1824 = vpop.permute.xlu0 %1823
    %v1826 = vadd.f32 %v1816, %v1824
    %v1827 = vtanh.pop %v1826
    %1829 = vrot.lane.b32.xlu0 %v1827, 8
    %v1830 = vpop.permute.xlu0 %1829
    %v1832 = vmul.f32 %v1811, %v1830
    %v1833 = vpack.c.bf16 %v1832, %v1832
    %1834 = vmatpush.bf16.msra.mxu0 0
    %1835 = vmatpush.bf16.msra.mxu0 0
    %1836 = vmatpush.bf16.msra.mxu0 0
    %1837 = vmatpush.bf16.msra.mxu0 0
    %1838 = vmatpush.bf16.msra.mxu0 0
    %1839 = vmatpush.bf16.msra.mxu0 0
    %1840 = vmatpush.bf16.msra.mxu0 0
    %1841 = vmatpush.bf16.msra.mxu0 %v1371
    %1842 = vmatmul.bf16.gmra.mxu0 %v1305
    %v1843 = vpop.f32.mrf.mxu0
    %v1844 = vadd.f32 %v1019, %v1843
    %v1845 = vpop.f32.mrf.mxu0
    %1846 = vdwg.mxu0
    %1848 = vrot.lane.b32.xlu0 %v1758, 112
    %v1849 = vpop.permute.xlu0 %1848
    %v1851 = vsel %vm152, %v1849, 0
    %1853 = vmatpush.bf16.msra.mxu0 0
    %1854 = vmatpush.bf16.msra.mxu0 0
    %1855 = vmatpush.bf16.msra.mxu0 0
    %1856 = vmatpush.bf16.msra.mxu0 0
    %1857 = vmatpush.bf16.msra.mxu0 0
    %1858 = vmatpush.bf16.msra.mxu0 0
    %1859 = vmatpush.bf16.msra.mxu0 0
    %1860 = vmatpush.bf16.msra.mxu0 %v1395
    %1861 = vmatmul.bf16.gmra.mxu0 %v1851
    %v1862 = vpop.f32.mrf.mxu0
    %v1863 = vadd.f32 0.0, %v1862
    %v1864 = vpop.f32.mrf.mxu0
    %1865 = vdwg.mxu0
    %v1866 = vadd.f32 %v1844, %v1863
    %v1867 = vxor.u32 %v1866, 2147483648
    %v1868 = vmul.f32 %v1867, 1.442695
    %v1869 = vpow.pop %v1868
    %v1870 = vadd.f32 %v1869, 1.0
    %v1871 = vrcp.pop %v1870
    %v1872 = vmul.f32 %v1870, %v1871
    %v1873 = vsub.f32 1.0, %v1872
    %v1874 = vmul.f32 %v1871, %v1873
    %v1875 = vadd.f32 %v1871, %v1874
    %vm1876 = vweird.f32 %v1870
    %vm1877 = vweird.f32 %v1871
    %vm1878 = vmor %vm1876, %vm1877
    %v1879 = vsel %vm1878, %v1871, %v1875
    %v1880 = vand.u32 2147483647, %v1870
    %vm1881 = vcmp.eq.f32.partialorder %v1880, 8.507059e+37
    %v1882 = vand.u32 %v1870, 2147483648
    %v1883 = vor.u32 1.1754944e-38, %v1882
    %v1884 = vsel %vm1881, %v1883, %v1879
    %v1885 = vmul.f32 1.0, %v1884
    %v1886 = vtanh.pop %v1866
    %v1887 = vmul.f32 %v1885, %v1751
    %1889 = vrot.lane.b32.xlu0 %v1886, 104
    %v1890 = vpop.permute.xlu0 %1889
    %v1892 = vmul.f32 %v1885, %v1890
    %1894 = vrot.lane.b32.xlu0 %v1892, 8
    %v1895 = vpop.permute.xlu0 %1894
    %v1897 = vadd.f32 %v1887, %v1895
    %v1898 = vtanh.pop %v1897
    %1900 = vrot.lane.b32.xlu0 %v1898, 8
    %v1901 = vpop.permute.xlu0 %1900
    %v1903 = vmul.f32 %v1885, %v1901
    %v1904 = vpack.c.bf16 %v1903, %v1903
    %s1905 = sadd.s32 %s1294, 4294967295
    %1907 = vrot.lane.b32.xlu0 %v1903, 112
    %v1908 = vpop.permute.xlu0 %1907
    %s1910 = smul.u32 %s1905, 2
    %s1911 = scalar_lea.vmem [#allocation3], %s1910
    %1912 = vst.msk [vmem:[%s1911] sm:$0x3] %vm1456, %v1908
  $region34: #{mylstm_forward.1} parent=0 // loop_footer
    %s1286 = sadd.s32 1, %s1282
  $region35: #{mylstm_forward.1} parent=0 // loop_footer_branch
    %1281 = sbr.rel target = $region31
  $region36: #{mylstm_forward.1} parent=0 // loop_exit
    _
  %v1914 = vunpack.c.l.b16 %v1291
  %v1915 = vpack.c.b16 %v1914, %v1914
  %1916 = vrot.lane.b32.xlu0 %v1915, 112
  %v1917 = vpop.permute.xlu0 %1916
  %v1919 = vsel %vm152, %v1917, 0
  %v1922 = vsel %vm1025, %v1013, 0
  %1924 = vmatpush.bf16.msra.mxu0 0
  %1925 = vmatpush.bf16.msra.mxu0 0
  %1926 = vmatpush.bf16.msra.mxu0 0
  %1927 = vmatpush.bf16.msra.mxu0 0
  %1928 = vmatpush.bf16.msra.mxu0 0
  %1929 = vmatpush.bf16.msra.mxu0 0
  %1930 = vmatpush.bf16.msra.mxu0 0
  %1931 = vmatpush.bf16.msra.mxu0 %v1922
  %1932 = vmatmul.bf16.gmra.mxu0 %v1919
  %v1933 = vpop.f32.mrf.mxu0
  %v1934 = vadd.f32 %v1019, %v1933
  %v1935 = vpop.f32.mrf.mxu0
  %1936 = vdwg.mxu0
  %v1938 = vunpack.c.l.b16 %v1289
  %v1939 = vpack.c.b16 %v1938, %v1938
  %1940 = vrot.lane.b32.xlu0 %v1939, 112
  %v1941 = vpop.permute.xlu0 %1940
  %v1943 = vsel %vm152, %v1941, 0
  %v1946 = vsel %vm1025, %v1015, 0
  %1948 = vmatpush.bf16.msra.mxu0 0
  %1949 = vmatpush.bf16.msra.mxu0 0
  %1950 = vmatpush.bf16.msra.mxu0 0
  %1951 = vmatpush.bf16.msra.mxu0 0
  %1952 = vmatpush.bf16.msra.mxu0 0
  %1953 = vmatpush.bf16.msra.mxu0 0
  %1954 = vmatpush.bf16.msra.mxu0 0
  %1955 = vmatpush.bf16.msra.mxu0 %v1946
  %1956 = vmatmul.bf16.gmra.mxu0 %v1943
  %v1957 = vpop.f32.mrf.mxu0
  %v1958 = vadd.f32 0.0, %v1957
  %v1959 = vpop.f32.mrf.mxu0
  %1960 = vdwg.mxu0
  %v1961 = vadd.f32 %v1934, %v1958
  %v1962 = vxor.u32 %v1961, 2147483648
  %v1963 = vmul.f32 %v1962, 1.442695
  %v1964 = vpow.pop %v1963
  %v1965 = vadd.f32 %v1964, 1.0
  %v1966 = vrcp.pop %v1965
  %v1967 = vmul.f32 %v1965, %v1966
  %v1968 = vsub.f32 1.0, %v1967
  %v1969 = vmul.f32 %v1966, %v1968
  %v1970 = vadd.f32 %v1966, %v1969
  %vm1971 = vweird.f32 %v1965
  %vm1972 = vweird.f32 %v1966
  %vm1973 = vmor %vm1971, %vm1972
  %v1974 = vsel %vm1973, %v1966, %v1970
  %v1975 = vand.u32 2147483647, %v1965
  %vm1976 = vcmp.eq.f32.partialorder %v1975, 8.507059e+37
  %v1977 = vand.u32 %v1965, 2147483648
  %v1978 = vor.u32 1.1754944e-38, %v1977
  %v1979 = vsel %vm1976, %v1978, %v1974
  %v1980 = vmul.f32 1.0, %v1979
  %v1981 = vtanh.pop %v1961
  %v1982 = vmul.f32 %v1980, %v1290
  %1984 = vrot.lane.b32.xlu0 %v1981, 104
  %v1985 = vpop.permute.xlu0 %1984
  %v1987 = vmul.f32 %v1980, %v1985
  %1989 = vrot.lane.b32.xlu0 %v1987, 8
  %v1990 = vpop.permute.xlu0 %1989
  %v1992 = vadd.f32 %v1982, %v1990
  %v1993 = vtanh.pop %v1992
  %1995 = vrot.lane.b32.xlu0 %v1993, 8
  %v1996 = vpop.permute.xlu0 %1995
  %v1998 = vmul.f32 %v1980, %v1996
  %v1999 = vpack.c.bf16 %v1998, %v1998
  %2001 = vrot.lane.b32.xlu0 %v1998, 112
  %v2002 = vpop.permute.xlu0 %2001
  %s2004 = scalar_lea.vmem [#allocation3], 952
  %vm2005 = vcmask 58368
  %2006 = vst.msk [vmem:[%s2004] sm:$0x3] %vm2005, %v2002
  %v2008 = vunpack.c.l.b16 %v1292
  %v2009 = vpack.c.b16 %v2008, %v2008
  %v2010 = vrot.slane %v2009, 1
  %2011 = vrot.lane.b32.xlu0 %v2010, 112
  %v2012 = vpop.permute.xlu0 %2011
  %v2014 = vsel %vm152, %v2012, 0
  %2016 = vmatpush.bf16.msra.mxu0 0
  %2017 = vmatpush.bf16.msra.mxu0 0
  %2018 = vmatpush.bf16.msra.mxu0 0
  %2019 = vmatpush.bf16.msra.mxu0 0
  %2020 = vmatpush.bf16.msra.mxu0 0
  %2021 = vmatpush.bf16.msra.mxu0 0
  %2022 = vmatpush.bf16.msra.mxu0 0
  %2023 = vmatpush.bf16.msra.mxu0 %v1922
  %2024 = vmatmul.bf16.gmra.mxu0 %v2014
  %v2025 = vpop.f32.mrf.mxu0
  %v2026 = vadd.f32 %v1019, %v2025
  %v2027 = vpop.f32.mrf.mxu0
  %2028 = vdwg.mxu0
  %2030 = vrot.lane.b32.xlu0 %v1999, 112
  %v2031 = vpop.permute.xlu0 %2030
  %v2033 = vsel %vm152, %v2031, 0
  %2035 = vmatpush.bf16.msra.mxu0 0
  %2036 = vmatpush.bf16.msra.mxu0 0
  %2037 = vmatpush.bf16.msra.mxu0 0
  %2038 = vmatpush.bf16.msra.mxu0 0
  %2039 = vmatpush.bf16.msra.mxu0 0
  %2040 = vmatpush.bf16.msra.mxu0 0
  %2041 = vmatpush.bf16.msra.mxu0 0
  %2042 = vmatpush.bf16.msra.mxu0 %v1946
  %2043 = vmatmul.bf16.gmra.mxu0 %v2033
  %v2044 = vpop.f32.mrf.mxu0
  %v2045 = vadd.f32 0.0, %v2044
  %v2046 = vpop.f32.mrf.mxu0
  %2047 = vdwg.mxu0
  %v2048 = vadd.f32 %v2026, %v2045
  %v2049 = vxor.u32 %v2048, 2147483648
  %v2050 = vmul.f32 %v2049, 1.442695
  %v2051 = vpow.pop %v2050
  %v2052 = vadd.f32 %v2051, 1.0
  %v2053 = vrcp.pop %v2052
  %v2054 = vmul.f32 %v2052, %v2053
  %v2055 = vsub.f32 1.0, %v2054
  %v2056 = vmul.f32 %v2053, %v2055
  %v2057 = vadd.f32 %v2053, %v2056
  %vm2058 = vweird.f32 %v2052
  %vm2059 = vweird.f32 %v2053
  %vm2060 = vmor %vm2058, %vm2059
  %v2061 = vsel %vm2060, %v2053, %v2057
  %v2062 = vand.u32 2147483647, %v2052
  %vm2063 = vcmp.eq.f32.partialorder %v2062, 8.507059e+37
  %v2064 = vand.u32 %v2052, 2147483648
  %v2065 = vor.u32 1.1754944e-38, %v2064
  %v2066 = vsel %vm2063, %v2065, %v2061
  %v2067 = vmul.f32 1.0, %v2066
  %v2068 = vtanh.pop %v2048
  %v2069 = vmul.f32 %v2067, %v1992
  %2071 = vrot.lane.b32.xlu0 %v2068, 104
  %v2072 = vpop.permute.xlu0 %2071
  %v2074 = vmul.f32 %v2067, %v2072
  %2076 = vrot.lane.b32.xlu0 %v2074, 8
  %v2077 = vpop.permute.xlu0 %2076
  %v2079 = vadd.f32 %v2069, %v2077
  %v2080 = vtanh.pop %v2079
  %2082 = vrot.lane.b32.xlu0 %v2080, 8
  %v2083 = vpop.permute.xlu0 %2082
  %v2085 = vmul.f32 %v2067, %v2083
  %v2086 = vpack.c.bf16 %v2085, %v2085
  %2088 = vrot.lane.b32.xlu0 %v2085, 112
  %v2089 = vpop.permute.xlu0 %2088
  %s2091 = scalar_lea.vmem [#allocation3], 954
  %2092 = vst.msk [vmem:[%s2091] sm:$0x3] %vm2005, %v2089
  %v2094 = vunpack.c.l.b16 %v1293
  %v2095 = vpack.c.b16 %v2094, %v2094
  %v2096 = vrot.slane %v2095, 2
  %2097 = vrot.lane.b32.xlu0 %v2096, 112
  %v2098 = vpop.permute.xlu0 %2097
  %v2100 = vsel %vm152, %v2098, 0
  %2102 = vmatpush.bf16.msra.mxu0 0
  %2103 = vmatpush.bf16.msra.mxu0 0
  %2104 = vmatpush.bf16.msra.mxu0 0
  %2105 = vmatpush.bf16.msra.mxu0 0
  %2106 = vmatpush.bf16.msra.mxu0 0
  %2107 = vmatpush.bf16.msra.mxu0 0
  %2108 = vmatpush.bf16.msra.mxu0 0
  %2109 = vmatpush.bf16.msra.mxu0 %v1922
  %2110 = vmatmul.bf16.gmra.mxu0 %v2100
  %v2111 = vpop.f32.mrf.mxu0
  %v2112 = vadd.f32 %v1019, %v2111
  %v2113 = vpop.f32.mrf.mxu0
  %2114 = vdwg.mxu0
  %2116 = vrot.lane.b32.xlu0 %v2086, 112
  %v2117 = vpop.permute.xlu0 %2116
  %v2119 = vsel %vm152, %v2117, 0
  %2121 = vmatpush.bf16.msra.mxu0 0
  %2122 = vmatpush.bf16.msra.mxu0 0
  %2123 = vmatpush.bf16.msra.mxu0 0
  %2124 = vmatpush.bf16.msra.mxu0 0
  %2125 = vmatpush.bf16.msra.mxu0 0
  %2126 = vmatpush.bf16.msra.mxu0 0
  %2127 = vmatpush.bf16.msra.mxu0 0
  %2128 = vmatpush.bf16.msra.mxu0 %v1946
  %2129 = vmatmul.bf16.gmra.mxu0 %v2119
  %v2130 = vpop.f32.mrf.mxu0
  %v2131 = vadd.f32 0.0, %v2130
  %v2132 = vpop.f32.mrf.mxu0
  %2133 = vdwg.mxu0
  %v2134 = vadd.f32 %v2112, %v2131
  %v2135 = vxor.u32 %v2134, 2147483648
  %v2136 = vmul.f32 %v2135, 1.442695
  %v2137 = vpow.pop %v2136
  %v2138 = vadd.f32 %v2137, 1.0
  %v2139 = vrcp.pop %v2138
  %v2140 = vmul.f32 %v2138, %v2139
  %v2141 = vsub.f32 1.0, %v2140
  %v2142 = vmul.f32 %v2139, %v2141
  %v2143 = vadd.f32 %v2139, %v2142
  %vm2144 = vweird.f32 %v2138
  %vm2145 = vweird.f32 %v2139
  %vm2146 = vmor %vm2144, %vm2145
  %v2147 = vsel %vm2146, %v2139, %v2143
  %v2148 = vand.u32 2147483647, %v2138
  %vm2149 = vcmp.eq.f32.partialorder %v2148, 8.507059e+37
  %v2150 = vand.u32 %v2138, 2147483648
  %v2151 = vor.u32 1.1754944e-38, %v2150
  %v2152 = vsel %vm2149, %v2151, %v2147
  %v2153 = vmul.f32 1.0, %v2152
  %v2154 = vtanh.pop %v2134
  %v2155 = vmul.f32 %v2153, %v2079
  %2157 = vrot.lane.b32.xlu0 %v2154, 104
  %v2158 = vpop.permute.xlu0 %2157
  %v2160 = vmul.f32 %v2153, %v2158
  %2162 = vrot.lane.b32.xlu0 %v2160, 8
  %v2163 = vpop.permute.xlu0 %2162
  %v2165 = vadd.f32 %v2155, %v2163
  %v2166 = vtanh.pop %v2165
  %2168 = vrot.lane.b32.xlu0 %v2166, 8
  %v2169 = vpop.permute.xlu0 %2168
  %v2171 = vmul.f32 %v2153, %v2169
  %v2172 = vpack.c.bf16 %v2171, %v2171
  %2174 = vrot.lane.b32.xlu0 %v2171, 112
  %v2175 = vpop.permute.xlu0 %2174
  %s2177 = scalar_lea.vmem [#allocation3], 956
  %2178 = vst.msk [vmem:[%s2177] sm:$0x3] %vm2005, %v2175
  %v2180 = vunpack.c.l.b16 %v1287
  %v2181 = vpack.c.b16 %v2180, %v2180
  %v2182 = vrot.slane %v2181, 3
  %2183 = vrot.lane.b32.xlu0 %v2182, 112
  %v2184 = vpop.permute.xlu0 %2183
  %v2186 = vsel %vm152, %v2184, 0
  %2188 = vmatpush.bf16.msra.mxu0 0
  %2189 = vmatpush.bf16.msra.mxu0 0
  %2190 = vmatpush.bf16.msra.mxu0 0
  %2191 = vmatpush.bf16.msra.mxu0 0
  %2192 = vmatpush.bf16.msra.mxu0 0
  %2193 = vmatpush.bf16.msra.mxu0 0
  %2194 = vmatpush.bf16.msra.mxu0 0
  %2195 = vmatpush.bf16.msra.mxu0 %v1922
  %2196 = vmatmul.bf16.gmra.mxu0 %v2186
  %v2197 = vpop.f32.mrf.mxu0
  %v2198 = vadd.f32 %v1019, %v2197
  %v2199 = vpop.f32.mrf.mxu0
  %2200 = vdwg.mxu0
  %2202 = vrot.lane.b32.xlu0 %v2172, 112
  %v2203 = vpop.permute.xlu0 %2202
  %v2205 = vsel %vm152, %v2203, 0
  %2207 = vmatpush.bf16.msra.mxu0 0
  %2208 = vmatpush.bf16.msra.mxu0 0
  %2209 = vmatpush.bf16.msra.mxu0 0
  %2210 = vmatpush.bf16.msra.mxu0 0
  %2211 = vmatpush.bf16.msra.mxu0 0
  %2212 = vmatpush.bf16.msra.mxu0 0
  %2213 = vmatpush.bf16.msra.mxu0 0
  %2214 = vmatpush.bf16.msra.mxu0 %v1946
  %2215 = vmatmul.bf16.gmra.mxu0 %v2205
  %v2216 = vpop.f32.mrf.mxu0
  %v2217 = vadd.f32 0.0, %v2216
  %v2218 = vpop.f32.mrf.mxu0
  %2219 = vdwg.mxu0
  %v2220 = vadd.f32 %v2198, %v2217
  %v2221 = vxor.u32 %v2220, 2147483648
  %v2222 = vmul.f32 %v2221, 1.442695
  %v2223 = vpow.pop %v2222
  %v2224 = vadd.f32 %v2223, 1.0
  %v2225 = vrcp.pop %v2224
  %v2226 = vmul.f32 %v2224, %v2225
  %v2227 = vsub.f32 1.0, %v2226
  %v2228 = vmul.f32 %v2225, %v2227
  %v2229 = vadd.f32 %v2225, %v2228
  %vm2230 = vweird.f32 %v2224
  %vm2231 = vweird.f32 %v2225
  %vm2232 = vmor %vm2230, %vm2231
  %v2233 = vsel %vm2232, %v2225, %v2229
  %v2234 = vand.u32 2147483647, %v2224
  %vm2235 = vcmp.eq.f32.partialorder %v2234, 8.507059e+37
  %v2236 = vand.u32 %v2224, 2147483648
  %v2237 = vor.u32 1.1754944e-38, %v2236
  %v2238 = vsel %vm2235, %v2237, %v2233
  %v2239 = vmul.f32 1.0, %v2238
  %v2240 = vtanh.pop %v2220
  %v2241 = vmul.f32 %v2239, %v2165
  %2243 = vrot.lane.b32.xlu0 %v2240, 104
  %v2244 = vpop.permute.xlu0 %2243
  %v2246 = vmul.f32 %v2239, %v2244
  %2248 = vrot.lane.b32.xlu0 %v2246, 8
  %v2249 = vpop.permute.xlu0 %2248
  %v2251 = vadd.f32 %v2241, %v2249
  %v2252 = vtanh.pop %v2251
  %2254 = vrot.lane.b32.xlu0 %v2252, 8
  %v2255 = vpop.permute.xlu0 %2254
  %v2257 = vmul.f32 %v2239, %v2255
  %2259 = vrot.lane.b32.xlu0 %v2257, 112
  %v2260 = vpop.permute.xlu0 %2259
  %s2262 = scalar_lea.vmem [#allocation3], 958
  %2263 = vst.msk [vmem:[%s2262] sm:$0x3] %vm2005, %v2260
  %v2264 = vld [vmem:[%s5] sm:$0xff]
  %v2265 = vld [vmem:[%s5 + $0x8] sm:$0xff]
  %v2266 = vld [vmem:[%s5 + $0x10] sm:$0xff]
  %v2267 = vld [vmem:[%s5 + $0x18] sm:$0xff]
  %v2268 = vld [vmem:[%s5 + $0x20] sm:$0xff]
  %v2269 = vld [vmem:[%s5 + $0x28] sm:$0xff]
  %v2270 = vld [vmem:[%s5 + $0x30] sm:$0xff]
  %v2271 = vld [vmem:[%s5 + $0x38] sm:$0xff]
  %v2272 = vld [vmem:[%s5 + $0x40] sm:$0xff]
  %v2273 = vld [vmem:[%s5 + $0x48] sm:$0xff]
  %v2274 = vld [vmem:[%s5 + $0x50] sm:$0xff]
  %v2275 = vld [vmem:[%s5 + $0x58] sm:$0xff]
  %v2276 = vld [vmem:[%s5 + $0x60] sm:$0xff]
  %v2277 = vld [vmem:[%s5 + $0x68] sm:$0xff]
  %v2278 = vld [vmem:[%s5 + $0x70] sm:$0xff]
  %v2279 = vld [vmem:[%s5 + $0x78] sm:$0xff]
  %v2280 = vld [vmem:[%s5 + $0x80] sm:$0xff]
  %v2281 = vld [vmem:[%s5 + $0x88] sm:$0xff]
  %v2282 = vld [vmem:[%s5 + $0x90] sm:$0xff]
  %v2283 = vld [vmem:[%s5 + $0x98] sm:$0xff]
  %v2284 = vld [vmem:[%s5 + $0xa0] sm:$0xff]
  %v2285 = vld [vmem:[%s5 + $0xa8] sm:$0xff]
  %v2286 = vld [vmem:[%s5 + $0xb0] sm:$0xff]
  %v2287 = vld [vmem:[%s5 + $0xb8] sm:$0xff]
  %v2288 = vld [vmem:[%s5 + $0xc0] sm:$0xff]
  %v2289 = vld [vmem:[%s5 + $0xc8] sm:$0xff]
  %v2290 = vld [vmem:[%s5 + $0xd0] sm:$0xff]
  %v2291 = vld [vmem:[%s5 + $0xd8] sm:$0xff]
  %v2292 = vld [vmem:[%s5 + $0xe0] sm:$0xff]
  %v2293 = vld [vmem:[%s5 + $0xe8] sm:$0xff]
  %v2294 = vld [vmem:[%s5 + $0xf0] sm:$0xff]
  %v2295 = vld [vmem:[%s5 + $0xf8] sm:$0xff]
  %v2296 = vld [vmem:[%s5 + $0x100] sm:$0xff]
  %v2297 = vld [vmem:[%s5 + $0x108] sm:$0xff]
  %v2298 = vld [vmem:[%s5 + $0x110] sm:$0xff]
  %v2299 = vld [vmem:[%s5 + $0x118] sm:$0xff]
  %v2300 = vld [vmem:[%s5 + $0x120] sm:$0xff]
  %v2301 = vld [vmem:[%s5 + $0x128] sm:$0xff]
  %v2302 = vld [vmem:[%s5 + $0x130] sm:$0xff]
  %v2303 = vld [vmem:[%s5 + $0x138] sm:$0xff]
  %v2304 = vld [vmem:[%s5 + $0x140] sm:$0xff]
  %v2305 = vld [vmem:[%s5 + $0x148] sm:$0xff]
  %v2306 = vld [vmem:[%s5 + $0x150] sm:$0xff]
  %v2307 = vld [vmem:[%s5 + $0x158] sm:$0xff]
  %v2308 = vld [vmem:[%s5 + $0x160] sm:$0xff]
  %v2309 = vld [vmem:[%s5 + $0x168] sm:$0xff]
  %v2310 = vld [vmem:[%s5 + $0x170] sm:$0xff]
  %v2311 = vld [vmem:[%s5 + $0x178] sm:$0xff]
  %v2312 = vld [vmem:[%s5 + $0x180] sm:$0xff]
  %v2313 = vld [vmem:[%s5 + $0x188] sm:$0xff]
  %v2314 = vld [vmem:[%s5 + $0x190] sm:$0xff]
  %v2315 = vld [vmem:[%s5 + $0x198] sm:$0xff]
  %v2316 = vld [vmem:[%s5 + $0x1a0] sm:$0xff]
  %v2317 = vld [vmem:[%s5 + $0x1a8] sm:$0xff]
  %v2318 = vld [vmem:[%s5 + $0x1b0] sm:$0xff]
  %v2319 = vld [vmem:[%s5 + $0x1b8] sm:$0xff]
  %v2320 = vld [vmem:[%s5 + $0x1c0] sm:$0xff]
  %v2321 = vld [vmem:[%s5 + $0x1c8] sm:$0xff]
  %v2322 = vld [vmem:[%s5 + $0x1d0] sm:$0xff]
  %v2323 = vld [vmem:[%s5 + $0x1d8] sm:$0xff]
  %v2324 = vld [vmem:[%s6] sm:$0x1]
  %v2325 = vld [vmem:[#allocation3] sm:$0x1]
  %v2326 = vld [vmem:[#allocation3 + $0x2] sm:$0x1]
  %v2327 = vld [vmem:[#allocation3 + $0x4] sm:$0x1]
  %v2328 = vld [vmem:[#allocation3 + $0x6] sm:$0x1]
  %v2329 = vld [vmem:[#allocation3 + $0x8] sm:$0x1]
  %v2330 = vld [vmem:[#allocation3 + $0xa] sm:$0x1]
  %v2331 = vld [vmem:[#allocation3 + $0xc] sm:$0x1]
  %v2332 = vld [vmem:[#allocation3 + $0xe] sm:$0x1]
  %v2333 = vld [vmem:[#allocation3 + $0x10] sm:$0x1]
  %v2334 = vld [vmem:[#allocation3 + $0x12] sm:$0x1]
  %v2335 = vld [vmem:[#allocation3 + $0x14] sm:$0x1]
  %v2336 = vld [vmem:[#allocation3 + $0x16] sm:$0x1]
  %v2337 = vld [vmem:[#allocation3 + $0x18] sm:$0x1]
  %v2338 = vld [vmem:[#allocation3 + $0x1a] sm:$0x1]
  %v2339 = vld [vmem:[#allocation3 + $0x1c] sm:$0x1]
  %v2340 = vld [vmem:[#allocation3 + $0x1e] sm:$0x1]
  %v2341 = vld [vmem:[#allocation3 + $0x20] sm:$0x1]
  %v2342 = vld [vmem:[#allocation3 + $0x22] sm:$0x1]
  %v2343 = vld [vmem:[#allocation3 + $0x24] sm:$0x1]
  %v2344 = vld [vmem:[#allocation3 + $0x26] sm:$0x1]
  %v2345 = vld [vmem:[#allocation3 + $0x28] sm:$0x1]
  %v2346 = vld [vmem:[#allocation3 + $0x2a] sm:$0x1]
  %v2347 = vld [vmem:[#allocation3 + $0x2c] sm:$0x1]
  %v2348 = vld [vmem:[#allocation3 + $0x2e] sm:$0x1]
  %v2349 = vld [vmem:[#allocation3 + $0x30] sm:$0x1]
  %v2350 = vld [vmem:[#allocation3 + $0x32] sm:$0x1]
  %v2351 = vld [vmem:[#allocation3 + $0x34] sm:$0x1]
  %v2352 = vld [vmem:[#allocation3 + $0x36] sm:$0x1]
  %v2353 = vld [vmem:[#allocation3 + $0x38] sm:$0x1]
  %v2354 = vld [vmem:[#allocation3 + $0x3a] sm:$0x1]
  %v2355 = vld [vmem:[#allocation3 + $0x3c] sm:$0x1]
  %v2356 = vld [vmem:[#allocation3 + $0x3e] sm:$0x1]
  %v2357 = vld [vmem:[#allocation3 + $0x40] sm:$0x1]
  %v2358 = vld [vmem:[#allocation3 + $0x42] sm:$0x1]
  %v2359 = vld [vmem:[#allocation3 + $0x44] sm:$0x1]
  %v2360 = vld [vmem:[#allocation3 + $0x46] sm:$0x1]
  %v2361 = vld [vmem:[#allocation3 + $0x48] sm:$0x1]
  %v2362 = vld [vmem:[#allocation3 + $0x4a] sm:$0x1]
  %v2363 = vld [vmem:[#allocation3 + $0x4c] sm:$0x1]
  %v2364 = vld [vmem:[#allocation3 + $0x4e] sm:$0x1]
  %v2365 = vld [vmem:[#allocation3 + $0x50] sm:$0x1]
  %v2366 = vld [vmem:[#allocation3 + $0x52] sm:$0x1]
  %v2367 = vld [vmem:[#allocation3 + $0x54] sm:$0x1]
  %v2368 = vld [vmem:[#allocation3 + $0x56] sm:$0x1]
  %v2369 = vld [vmem:[#allocation3 + $0x58] sm:$0x1]
  %v2370 = vld [vmem:[#allocation3 + $0x5a] sm:$0x1]
  %v2371 = vld [vmem:[#allocation3 + $0x5c] sm:$0x1]
  %v2372 = vld [vmem:[#allocation3 + $0x5e] sm:$0x1]
  %v2373 = vld [vmem:[#allocation3 + $0x60] sm:$0x1]
  %v2374 = vld [vmem:[#allocation3 + $0x62] sm:$0x1]
  %v2375 = vld [vmem:[#allocation3 + $0x64] sm:$0x1]
  %v2376 = vld [vmem:[#allocation3 + $0x66] sm:$0x1]
  %v2377 = vld [vmem:[#allocation3 + $0x68] sm:$0x1]
  %v2378 = vld [vmem:[#allocation3 + $0x6a] sm:$0x1]
  %v2379 = vld [vmem:[#allocation3 + $0x6c] sm:$0x1]
  %v2380 = vld [vmem:[#allocation3 + $0x6e] sm:$0x1]
  %v2381 = vld [vmem:[#allocation3 + $0x70] sm:$0x1]
  %v2382 = vld [vmem:[#allocation3 + $0x72] sm:$0x1]
  %v2383 = vld [vmem:[#allocation3 + $0x74] sm:$0x1]
  %v2384 = vld [vmem:[#allocation3 + $0x76] sm:$0x1]
  %v2385 = vld [vmem:[#allocation3 + $0x78] sm:$0x1]
  %v2386 = vld [vmem:[#allocation3 + $0x7a] sm:$0x1]
  %v2387 = vld [vmem:[#allocation3 + $0x7c] sm:$0x1]
  %v2388 = vld [vmem:[#allocation3 + $0x7e] sm:$0x1]
  %v2389 = vld [vmem:[#allocation3 + $0x80] sm:$0x1]
  %v2390 = vld [vmem:[#allocation3 + $0x82] sm:$0x1]
  %v2391 = vld [vmem:[#allocation3 + $0x84] sm:$0x1]
  %v2392 = vld [vmem:[#allocation3 + $0x86] sm:$0x1]
  %v2393 = vld [vmem:[#allocation3 + $0x88] sm:$0x1]
  %v2394 = vld [vmem:[#allocation3 + $0x8a] sm:$0x1]
  %v2395 = vld [vmem:[#allocation3 + $0x8c] sm:$0x1]
  %v2396 = vld [vmem:[#allocation3 + $0x8e] sm:$0x1]
  %v2397 = vld [vmem:[#allocation3 + $0x90] sm:$0x1]
  %v2398 = vld [vmem:[#allocation3 + $0x92] sm:$0x1]
  %v2399 = vld [vmem:[#allocation3 + $0x94] sm:$0x1]
  %v2400 = vld [vmem:[#allocation3 + $0x96] sm:$0x1]
  %v2401 = vld [vmem:[#allocation3 + $0x98] sm:$0x1]
  %v2402 = vld [vmem:[#allocation3 + $0x9a] sm:$0x1]
  %v2403 = vld [vmem:[#allocation3 + $0x9c] sm:$0x1]
  %v2404 = vld [vmem:[#allocation3 + $0x9e] sm:$0x1]
  %v2405 = vld [vmem:[#allocation3 + $0xa0] sm:$0x1]
  %v2406 = vld [vmem:[#allocation3 + $0xa2] sm:$0x1]
  %v2407 = vld [vmem:[#allocation3 + $0xa4] sm:$0x1]
  %v2408 = vld [vmem:[#allocation3 + $0xa6] sm:$0x1]
  %v2409 = vld [vmem:[#allocation3 + $0xa8] sm:$0x1]
  %v2410 = vld [vmem:[#allocation3 + $0xaa] sm:$0x1]
  %v2411 = vld [vmem:[#allocation3 + $0xac] sm:$0x1]
  %v2412 = vld [vmem:[#allocation3 + $0xae] sm:$0x1]
  %v2413 = vld [vmem:[#allocation3 + $0xb0] sm:$0x1]
  %v2414 = vld [vmem:[#allocation3 + $0xb2] sm:$0x1]
  %v2415 = vld [vmem:[#allocation3 + $0xb4] sm:$0x1]
  %v2416 = vld [vmem:[#allocation3 + $0xb6] sm:$0x1]
  %v2417 = vld [vmem:[#allocation3 + $0xb8] sm:$0x1]
  %v2418 = vld [vmem:[#allocation3 + $0xba] sm:$0x1]
  %v2419 = vld [vmem:[#allocation3 + $0xbc] sm:$0x1]
  %v2420 = vld [vmem:[#allocation3 + $0xbe] sm:$0x1]
  %v2421 = vld [vmem:[#allocation3 + $0xc0] sm:$0x1]
  %v2422 = vld [vmem:[#allocation3 + $0xc2] sm:$0x1]
  %v2423 = vld [vmem:[#allocation3 + $0xc4] sm:$0x1]
  %v2424 = vld [vmem:[#allocation3 + $0xc6] sm:$0x1]
  %v2425 = vld [vmem:[#allocation3 + $0xc8] sm:$0x1]
  %v2426 = vld [vmem:[#allocation3 + $0xca] sm:$0x1]
  %v2427 = vld [vmem:[#allocation3 + $0xcc] sm:$0x1]
  %v2428 = vld [vmem:[#allocation3 + $0xce] sm:$0x1]
  %v2429 = vld [vmem:[#allocation3 + $0xd0] sm:$0x1]
  %v2430 = vld [vmem:[#allocation3 + $0xd2] sm:$0x1]
  %v2431 = vld [vmem:[#allocation3 + $0xd4] sm:$0x1]
  %v2432 = vld [vmem:[#allocation3 + $0xd6] sm:$0x1]
  %v2433 = vld [vmem:[#allocation3 + $0xd8] sm:$0x1]
  %v2434 = vld [vmem:[#allocation3 + $0xda] sm:$0x1]
  %v2435 = vld [vmem:[#allocation3 + $0xdc] sm:$0x1]
  %v2436 = vld [vmem:[#allocation3 + $0xde] sm:$0x1]
  %v2437 = vld [vmem:[#allocation3 + $0xe0] sm:$0x1]
  %v2438 = vld [vmem:[#allocation3 + $0xe2] sm:$0x1]
  %v2439 = vld [vmem:[#allocation3 + $0xe4] sm:$0x1]
  %v2440 = vld [vmem:[#allocation3 + $0xe6] sm:$0x1]
  %v2441 = vld [vmem:[#allocation3 + $0xe8] sm:$0x1]
  %v2442 = vld [vmem:[#allocation3 + $0xea] sm:$0x1]
  %v2443 = vld [vmem:[#allocation3 + $0xec] sm:$0x1]
  %v2444 = vld [vmem:[#allocation3 + $0xee] sm:$0x1]
  %v2445 = vld [vmem:[#allocation3 + $0xf0] sm:$0x1]
  %v2446 = vld [vmem:[#allocation3 + $0xf2] sm:$0x1]
  %v2447 = vld [vmem:[#allocation3 + $0xf4] sm:$0x1]
  %v2448 = vld [vmem:[#allocation3 + $0xf6] sm:$0x1]
  %v2449 = vld [vmem:[#allocation3 + $0xf8] sm:$0x1]
  %v2450 = vld [vmem:[#allocation3 + $0xfa] sm:$0x1]
  %v2451 = vld [vmem:[#allocation3 + $0xfc] sm:$0x1]
  %v2452 = vld [vmem:[#allocation3 + $0xfe] sm:$0x1]
  %v2453 = vld [vmem:[#allocation3 + $0x100] sm:$0x1]
  %v2454 = vld [vmem:[#allocation3 + $0x102] sm:$0x1]
  %v2455 = vld [vmem:[#allocation3 + $0x104] sm:$0x1]
  %v2456 = vld [vmem:[#allocation3 + $0x106] sm:$0x1]
  %v2457 = vld [vmem:[#allocation3 + $0x108] sm:$0x1]
  %v2458 = vld [vmem:[#allocation3 + $0x10a] sm:$0x1]
  %v2459 = vld [vmem:[#allocation3 + $0x10c] sm:$0x1]
  %v2460 = vld [vmem:[#allocation3 + $0x10e] sm:$0x1]
  %v2461 = vld [vmem:[#allocation3 + $0x110] sm:$0x1]
  %v2462 = vld [vmem:[#allocation3 + $0x112] sm:$0x1]
  %v2463 = vld [vmem:[#allocation3 + $0x114] sm:$0x1]
  %v2464 = vld [vmem:[#allocation3 + $0x116] sm:$0x1]
  %v2465 = vld [vmem:[#allocation3 + $0x118] sm:$0x1]
  %v2466 = vld [vmem:[#allocation3 + $0x11a] sm:$0x1]
  %v2467 = vld [vmem:[#allocation3 + $0x11c] sm:$0x1]
  %v2468 = vld [vmem:[#allocation3 + $0x11e] sm:$0x1]
  %v2469 = vld [vmem:[#allocation3 + $0x120] sm:$0x1]
  %v2470 = vld [vmem:[#allocation3 + $0x122] sm:$0x1]
  %v2471 = vld [vmem:[#allocation3 + $0x124] sm:$0x1]
  %v2472 = vld [vmem:[#allocation3 + $0x126] sm:$0x1]
  %v2473 = vld [vmem:[#allocation3 + $0x128] sm:$0x1]
  %v2474 = vld [vmem:[#allocation3 + $0x12a] sm:$0x1]
  %v2475 = vld [vmem:[#allocation3 + $0x12c] sm:$0x1]
  %v2476 = vld [vmem:[#allocation3 + $0x12e] sm:$0x1]
  %v2477 = vld [vmem:[#allocation3 + $0x130] sm:$0x1]
  %v2478 = vld [vmem:[#allocation3 + $0x132] sm:$0x1]
  %v2479 = vld [vmem:[#allocation3 + $0x134] sm:$0x1]
  %v2480 = vld [vmem:[#allocation3 + $0x136] sm:$0x1]
  %v2481 = vld [vmem:[#allocation3 + $0x138] sm:$0x1]
  %v2482 = vld [vmem:[#allocation3 + $0x13a] sm:$0x1]
  %v2483 = vld [vmem:[#allocation3 + $0x13c] sm:$0x1]
  %v2484 = vld [vmem:[#allocation3 + $0x13e] sm:$0x1]
  %v2485 = vld [vmem:[#allocation3 + $0x140] sm:$0x1]
  %v2486 = vld [vmem:[#allocation3 + $0x142] sm:$0x1]
  %v2487 = vld [vmem:[#allocation3 + $0x144] sm:$0x1]
  %v2488 = vld [vmem:[#allocation3 + $0x146] sm:$0x1]
  %v2489 = vld [vmem:[#allocation3 + $0x148] sm:$0x1]
  %v2490 = vld [vmem:[#allocation3 + $0x14a] sm:$0x1]
  %v2491 = vld [vmem:[#allocation3 + $0x14c] sm:$0x1]
  %v2492 = vld [vmem:[#allocation3 + $0x14e] sm:$0x1]
  %v2493 = vld [vmem:[#allocation3 + $0x150] sm:$0x1]
  %v2494 = vld [vmem:[#allocation3 + $0x152] sm:$0x1]
  %v2495 = vld [vmem:[#allocation3 + $0x154] sm:$0x1]
  %v2496 = vld [vmem:[#allocation3 + $0x156] sm:$0x1]
  %v2497 = vld [vmem:[#allocation3 + $0x158] sm:$0x1]
  %v2498 = vld [vmem:[#allocation3 + $0x15a] sm:$0x1]
  %v2499 = vld [vmem:[#allocation3 + $0x15c] sm:$0x1]
  %v2500 = vld [vmem:[#allocation3 + $0x15e] sm:$0x1]
  %v2501 = vld [vmem:[#allocation3 + $0x160] sm:$0x1]
  %v2502 = vld [vmem:[#allocation3 + $0x162] sm:$0x1]
  %v2503 = vld [vmem:[#allocation3 + $0x164] sm:$0x1]
  %v2504 = vld [vmem:[#allocation3 + $0x166] sm:$0x1]
  %v2505 = vld [vmem:[#allocation3 + $0x168] sm:$0x1]
  %v2506 = vld [vmem:[#allocation3 + $0x16a] sm:$0x1]
  %v2507 = vld [vmem:[#allocation3 + $0x16c] sm:$0x1]
  %v2508 = vld [vmem:[#allocation3 + $0x16e] sm:$0x1]
  %v2509 = vld [vmem:[#allocation3 + $0x170] sm:$0x1]
  %v2510 = vld [vmem:[#allocation3 + $0x172] sm:$0x1]
  %v2511 = vld [vmem:[#allocation3 + $0x174] sm:$0x1]
  %v2512 = vld [vmem:[#allocation3 + $0x176] sm:$0x1]
  %v2513 = vld [vmem:[#allocation3 + $0x178] sm:$0x1]
  %v2514 = vld [vmem:[#allocation3 + $0x17a] sm:$0x1]
  %v2515 = vld [vmem:[#allocation3 + $0x17c] sm:$0x1]
  %v2516 = vld [vmem:[#allocation3 + $0x17e] sm:$0x1]
  %v2517 = vld [vmem:[#allocation3 + $0x180] sm:$0x1]
  %v2518 = vld [vmem:[#allocation3 + $0x182] sm:$0x1]
  %v2519 = vld [vmem:[#allocation3 + $0x184] sm:$0x1]
  %v2520 = vld [vmem:[#allocation3 + $0x186] sm:$0x1]
  %v2521 = vld [vmem:[#allocation3 + $0x188] sm:$0x1]
  %v2522 = vld [vmem:[#allocation3 + $0x18a] sm:$0x1]
  %v2523 = vld [vmem:[#allocation3 + $0x18c] sm:$0x1]
  %v2524 = vld [vmem:[#allocation3 + $0x18e] sm:$0x1]
  %v2525 = vld [vmem:[#allocation3 + $0x190] sm:$0x1]
  %v2526 = vld [vmem:[#allocation3 + $0x192] sm:$0x1]
  %v2527 = vld [vmem:[#allocation3 + $0x194] sm:$0x1]
  %v2528 = vld [vmem:[#allocation3 + $0x196] sm:$0x1]
  %v2529 = vld [vmem:[#allocation3 + $0x198] sm:$0x1]
  %v2530 = vld [vmem:[#allocation3 + $0x19a] sm:$0x1]
  %v2531 = vld [vmem:[#allocation3 + $0x19c] sm:$0x1]
  %v2532 = vld [vmem:[#allocation3 + $0x19e] sm:$0x1]
  %v2533 = vld [vmem:[#allocation3 + $0x1a0] sm:$0x1]
  %v2534 = vld [vmem:[#allocation3 + $0x1a2] sm:$0x1]
  %v2535 = vld [vmem:[#allocation3 + $0x1a4] sm:$0x1]
  %v2536 = vld [vmem:[#allocation3 + $0x1a6] sm:$0x1]
  %v2537 = vld [vmem:[#allocation3 + $0x1a8] sm:$0x1]
  %v2538 = vld [vmem:[#allocation3 + $0x1aa] sm:$0x1]
  %v2539 = vld [vmem:[#allocation3 + $0x1ac] sm:$0x1]
  %v2540 = vld [vmem:[#allocation3 + $0x1ae] sm:$0x1]
  %v2541 = vld [vmem:[#allocation3 + $0x1b0] sm:$0x1]
  %v2542 = vld [vmem:[#allocation3 + $0x1b2] sm:$0x1]
  %v2543 = vld [vmem:[#allocation3 + $0x1b4] sm:$0x1]
  %v2544 = vld [vmem:[#allocation3 + $0x1b6] sm:$0x1]
  %v2545 = vld [vmem:[#allocation3 + $0x1b8] sm:$0x1]
  %v2546 = vld [vmem:[#allocation3 + $0x1ba] sm:$0x1]
  %v2547 = vld [vmem:[#allocation3 + $0x1bc] sm:$0x1]
  %v2548 = vld [vmem:[#allocation3 + $0x1be] sm:$0x1]
  %v2549 = vld [vmem:[#allocation3 + $0x1c0] sm:$0x1]
  %v2550 = vld [vmem:[#allocation3 + $0x1c2] sm:$0x1]
  %v2551 = vld [vmem:[#allocation3 + $0x1c4] sm:$0x1]
  %v2552 = vld [vmem:[#allocation3 + $0x1c6] sm:$0x1]
  %v2553 = vld [vmem:[#allocation3 + $0x1c8] sm:$0x1]
  %v2554 = vld [vmem:[#allocation3 + $0x1ca] sm:$0x1]
  %v2555 = vld [vmem:[#allocation3 + $0x1cc] sm:$0x1]
  %v2556 = vld [vmem:[#allocation3 + $0x1ce] sm:$0x1]
  %v2557 = vld [vmem:[#allocation3 + $0x1d0] sm:$0x1]
  %v2558 = vld [vmem:[#allocation3 + $0x1d2] sm:$0x1]
  %v2559 = vld [vmem:[#allocation3 + $0x1d4] sm:$0x1]
  %v2560 = vld [vmem:[#allocation3 + $0x1d6] sm:$0x1]
  %v2561 = vld [vmem:[#allocation3 + $0x1d8] sm:$0x1]
  %v2562 = vld [vmem:[#allocation3 + $0x1da] sm:$0x1]
  %v2563 = vld [vmem:[#allocation3 + $0x1dc] sm:$0x1]
  %v2564 = vld [vmem:[#allocation3 + $0x1de] sm:$0x1]
  %v2565 = vld [vmem:[#allocation3 + $0x1e0] sm:$0x1]
  %v2566 = vld [vmem:[#allocation3 + $0x1e2] sm:$0x1]
  %v2567 = vld [vmem:[#allocation3 + $0x1e4] sm:$0x1]
  %v2568 = vld [vmem:[#allocation3 + $0x1e6] sm:$0x1]
  %v2569 = vld [vmem:[#allocation3 + $0x1e8] sm:$0x1]
  %v2570 = vld [vmem:[#allocation3 + $0x1ea] sm:$0x1]
  %v2571 = vld [vmem:[#allocation3 + $0x1ec] sm:$0x1]
  %v2572 = vld [vmem:[#allocation3 + $0x1ee] sm:$0x1]
  %v2573 = vld [vmem:[#allocation3 + $0x1f0] sm:$0x1]
  %v2574 = vld [vmem:[#allocation3 + $0x1f2] sm:$0x1]
  %v2575 = vld [vmem:[#allocation3 + $0x1f4] sm:$0x1]
  %v2576 = vld [vmem:[#allocation3 + $0x1f6] sm:$0x1]
  %v2577 = vld [vmem:[#allocation3 + $0x1f8] sm:$0x1]
  %v2578 = vld [vmem:[#allocation3 + $0x1fa] sm:$0x1]
  %v2579 = vld [vmem:[#allocation3 + $0x1fc] sm:$0x1]
  %v2580 = vld [vmem:[#allocation3 + $0x1fe] sm:$0x1]
  %v2581 = vld [vmem:[#allocation3 + $0x200] sm:$0x1]
  %v2582 = vld [vmem:[#allocation3 + $0x202] sm:$0x1]
  %v2583 = vld [vmem:[#allocation3 + $0x204] sm:$0x1]
  %v2584 = vld [vmem:[#allocation3 + $0x206] sm:$0x1]
  %v2585 = vld [vmem:[#allocation3 + $0x208] sm:$0x1]
  %v2586 = vld [vmem:[#allocation3 + $0x20a] sm:$0x1]
  %v2587 = vld [vmem:[#allocation3 + $0x20c] sm:$0x1]
  %v2588 = vld [vmem:[#allocation3 + $0x20e] sm:$0x1]
  %v2589 = vld [vmem:[#allocation3 + $0x210] sm:$0x1]
  %v2590 = vld [vmem:[#allocation3 + $0x212] sm:$0x1]
  %v2591 = vld [vmem:[#allocation3 + $0x214] sm:$0x1]
  %v2592 = vld [vmem:[#allocation3 + $0x216] sm:$0x1]
  %v2593 = vld [vmem:[#allocation3 + $0x218] sm:$0x1]
  %v2594 = vld [vmem:[#allocation3 + $0x21a] sm:$0x1]
  %v2595 = vld [vmem:[#allocation3 + $0x21c] sm:$0x1]
  %v2596 = vld [vmem:[#allocation3 + $0x21e] sm:$0x1]
  %v2597 = vld [vmem:[#allocation3 + $0x220] sm:$0x1]
  %v2598 = vld [vmem:[#allocation3 + $0x222] sm:$0x1]
  %v2599 = vld [vmem:[#allocation3 + $0x224] sm:$0x1]
  %v2600 = vld [vmem:[#allocation3 + $0x226] sm:$0x1]
  %v2601 = vld [vmem:[#allocation3 + $0x228] sm:$0x1]
  %v2602 = vld [vmem:[#allocation3 + $0x22a] sm:$0x1]
  %v2603 = vld [vmem:[#allocation3 + $0x22c] sm:$0x1]
  %v2604 = vld [vmem:[#allocation3 + $0x22e] sm:$0x1]
  %v2605 = vld [vmem:[#allocation3 + $0x230] sm:$0x1]
  %v2606 = vld [vmem:[#allocation3 + $0x232] sm:$0x1]
  %v2607 = vld [vmem:[#allocation3 + $0x234] sm:$0x1]
  %v2608 = vld [vmem:[#allocation3 + $0x236] sm:$0x1]
  %v2609 = vld [vmem:[#allocation3 + $0x238] sm:$0x1]
  %v2610 = vld [vmem:[#allocation3 + $0x23a] sm:$0x1]
  %v2611 = vld [vmem:[#allocation3 + $0x23c] sm:$0x1]
  %v2612 = vld [vmem:[#allocation3 + $0x23e] sm:$0x1]
  %v2613 = vld [vmem:[#allocation3 + $0x240] sm:$0x1]
  %v2614 = vld [vmem:[#allocation3 + $0x242] sm:$0x1]
  %v2615 = vld [vmem:[#allocation3 + $0x244] sm:$0x1]
  %v2616 = vld [vmem:[#allocation3 + $0x246] sm:$0x1]
  %v2617 = vld [vmem:[#allocation3 + $0x248] sm:$0x1]
  %v2618 = vld [vmem:[#allocation3 + $0x24a] sm:$0x1]
  %v2619 = vld [vmem:[#allocation3 + $0x24c] sm:$0x1]
  %v2620 = vld [vmem:[#allocation3 + $0x24e] sm:$0x1]
  %v2621 = vld [vmem:[#allocation3 + $0x250] sm:$0x1]
  %v2622 = vld [vmem:[#allocation3 + $0x252] sm:$0x1]
  %v2623 = vld [vmem:[#allocation3 + $0x254] sm:$0x1]
  %v2624 = vld [vmem:[#allocation3 + $0x256] sm:$0x1]
  %v2625 = vld [vmem:[#allocation3 + $0x258] sm:$0x1]
  %v2626 = vld [vmem:[#allocation3 + $0x25a] sm:$0x1]
  %v2627 = vld [vmem:[#allocation3 + $0x25c] sm:$0x1]
  %v2628 = vld [vmem:[#allocation3 + $0x25e] sm:$0x1]
  %v2629 = vld [vmem:[#allocation3 + $0x260] sm:$0x1]
  %v2630 = vld [vmem:[#allocation3 + $0x262] sm:$0x1]
  %v2631 = vld [vmem:[#allocation3 + $0x264] sm:$0x1]
  %v2632 = vld [vmem:[#allocation3 + $0x266] sm:$0x1]
  %v2633 = vld [vmem:[#allocation3 + $0x268] sm:$0x1]
  %v2634 = vld [vmem:[#allocation3 + $0x26a] sm:$0x1]
  %v2635 = vld [vmem:[#allocation3 + $0x26c] sm:$0x1]
  %v2636 = vld [vmem:[#allocation3 + $0x26e] sm:$0x1]
  %v2637 = vld [vmem:[#allocation3 + $0x270] sm:$0x1]
  %v2638 = vld [vmem:[#allocation3 + $0x272] sm:$0x1]
  %v2639 = vld [vmem:[#allocation3 + $0x274] sm:$0x1]
  %v2640 = vld [vmem:[#allocation3 + $0x276] sm:$0x1]
  %v2641 = vld [vmem:[#allocation3 + $0x278] sm:$0x1]
  %v2642 = vld [vmem:[#allocation3 + $0x27a] sm:$0x1]
  %v2643 = vld [vmem:[#allocation3 + $0x27c] sm:$0x1]
  %v2644 = vld [vmem:[#allocation3 + $0x27e] sm:$0x1]
  %v2645 = vld [vmem:[#allocation3 + $0x280] sm:$0x1]
  %v2646 = vld [vmem:[#allocation3 + $0x282] sm:$0x1]
  %v2647 = vld [vmem:[#allocation3 + $0x284] sm:$0x1]
  %v2648 = vld [vmem:[#allocation3 + $0x286] sm:$0x1]
  %v2649 = vld [vmem:[#allocation3 + $0x288] sm:$0x1]
  %v2650 = vld [vmem:[#allocation3 + $0x28a] sm:$0x1]
  %v2651 = vld [vmem:[#allocation3 + $0x28c] sm:$0x1]
  %v2652 = vld [vmem:[#allocation3 + $0x28e] sm:$0x1]
  %v2653 = vld [vmem:[#allocation3 + $0x290] sm:$0x1]
  %v2654 = vld [vmem:[#allocation3 + $0x292] sm:$0x1]
  %v2655 = vld [vmem:[#allocation3 + $0x294] sm:$0x1]
  %v2656 = vld [vmem:[#allocation3 + $0x296] sm:$0x1]
  %v2657 = vld [vmem:[#allocation3 + $0x298] sm:$0x1]
  %v2658 = vld [vmem:[#allocation3 + $0x29a] sm:$0x1]
  %v2659 = vld [vmem:[#allocation3 + $0x29c] sm:$0x1]
  %v2660 = vld [vmem:[#allocation3 + $0x29e] sm:$0x1]
  %v2661 = vld [vmem:[#allocation3 + $0x2a0] sm:$0x1]
  %v2662 = vld [vmem:[#allocation3 + $0x2a2] sm:$0x1]
  %v2663 = vld [vmem:[#allocation3 + $0x2a4] sm:$0x1]
  %v2664 = vld [vmem:[#allocation3 + $0x2a6] sm:$0x1]
  %v2665 = vld [vmem:[#allocation3 + $0x2a8] sm:$0x1]
  %v2666 = vld [vmem:[#allocation3 + $0x2aa] sm:$0x1]
  %v2667 = vld [vmem:[#allocation3 + $0x2ac] sm:$0x1]
  %v2668 = vld [vmem:[#allocation3 + $0x2ae] sm:$0x1]
  %v2669 = vld [vmem:[#allocation3 + $0x2b0] sm:$0x1]
  %v2670 = vld [vmem:[#allocation3 + $0x2b2] sm:$0x1]
  %v2671 = vld [vmem:[#allocation3 + $0x2b4] sm:$0x1]
  %v2672 = vld [vmem:[#allocation3 + $0x2b6] sm:$0x1]
  %v2673 = vld [vmem:[#allocation3 + $0x2b8] sm:$0x1]
  %v2674 = vld [vmem:[#allocation3 + $0x2ba] sm:$0x1]
  %v2675 = vld [vmem:[#allocation3 + $0x2bc] sm:$0x1]
  %v2676 = vld [vmem:[#allocation3 + $0x2be] sm:$0x1]
  %v2677 = vld [vmem:[#allocation3 + $0x2c0] sm:$0x1]
  %v2678 = vld [vmem:[#allocation3 + $0x2c2] sm:$0x1]
  %v2679 = vld [vmem:[#allocation3 + $0x2c4] sm:$0x1]
  %v2680 = vld [vmem:[#allocation3 + $0x2c6] sm:$0x1]
  %v2681 = vld [vmem:[#allocation3 + $0x2c8] sm:$0x1]
  %v2682 = vld [vmem:[#allocation3 + $0x2ca] sm:$0x1]
  %v2683 = vld [vmem:[#allocation3 + $0x2cc] sm:$0x1]
  %v2684 = vld [vmem:[#allocation3 + $0x2ce] sm:$0x1]
  %v2685 = vld [vmem:[#allocation3 + $0x2d0] sm:$0x1]
  %v2686 = vld [vmem:[#allocation3 + $0x2d2] sm:$0x1]
  %v2687 = vld [vmem:[#allocation3 + $0x2d4] sm:$0x1]
  %v2688 = vld [vmem:[#allocation3 + $0x2d6] sm:$0x1]
  %v2689 = vld [vmem:[#allocation3 + $0x2d8] sm:$0x1]
  %v2690 = vld [vmem:[#allocation3 + $0x2da] sm:$0x1]
  %v2691 = vld [vmem:[#allocation3 + $0x2dc] sm:$0x1]
  %v2692 = vld [vmem:[#allocation3 + $0x2de] sm:$0x1]
  %v2693 = vld [vmem:[#allocation3 + $0x2e0] sm:$0x1]
  %v2694 = vld [vmem:[#allocation3 + $0x2e2] sm:$0x1]
  %v2695 = vld [vmem:[#allocation3 + $0x2e4] sm:$0x1]
  %v2696 = vld [vmem:[#allocation3 + $0x2e6] sm:$0x1]
  %v2697 = vld [vmem:[#allocation3 + $0x2e8] sm:$0x1]
  %v2698 = vld [vmem:[#allocation3 + $0x2ea] sm:$0x1]
  %v2699 = vld [vmem:[#allocation3 + $0x2ec] sm:$0x1]
  %v2700 = vld [vmem:[#allocation3 + $0x2ee] sm:$0x1]
  %v2701 = vld [vmem:[#allocation3 + $0x2f0] sm:$0x1]
  %v2702 = vld [vmem:[#allocation3 + $0x2f2] sm:$0x1]
  %v2703 = vld [vmem:[#allocation3 + $0x2f4] sm:$0x1]
  %v2704 = vld [vmem:[#allocation3 + $0x2f6] sm:$0x1]
  %v2705 = vld [vmem:[#allocation3 + $0x2f8] sm:$0x1]
  %v2706 = vld [vmem:[#allocation3 + $0x2fa] sm:$0x1]
  %v2707 = vld [vmem:[#allocation3 + $0x2fc] sm:$0x1]
  %v2708 = vld [vmem:[#allocation3 + $0x2fe] sm:$0x1]
  %v2709 = vld [vmem:[#allocation3 + $0x300] sm:$0x1]
  %v2710 = vld [vmem:[#allocation3 + $0x302] sm:$0x1]
  %v2711 = vld [vmem:[#allocation3 + $0x304] sm:$0x1]
  %v2712 = vld [vmem:[#allocation3 + $0x306] sm:$0x1]
  %v2713 = vld [vmem:[#allocation3 + $0x308] sm:$0x1]
  %v2714 = vld [vmem:[#allocation3 + $0x30a] sm:$0x1]
  %v2715 = vld [vmem:[#allocation3 + $0x30c] sm:$0x1]
  %v2716 = vld [vmem:[#allocation3 + $0x30e] sm:$0x1]
  %v2717 = vld [vmem:[#allocation3 + $0x310] sm:$0x1]
  %v2718 = vld [vmem:[#allocation3 + $0x312] sm:$0x1]
  %v2719 = vld [vmem:[#allocation3 + $0x314] sm:$0x1]
  %v2720 = vld [vmem:[#allocation3 + $0x316] sm:$0x1]
  %v2721 = vld [vmem:[#allocation3 + $0x318] sm:$0x1]
  %v2722 = vld [vmem:[#allocation3 + $0x31a] sm:$0x1]
  %v2723 = vld [vmem:[#allocation3 + $0x31c] sm:$0x1]
  %v2724 = vld [vmem:[#allocation3 + $0x31e] sm:$0x1]
  %v2725 = vld [vmem:[#allocation3 + $0x320] sm:$0x1]
  %v2726 = vld [vmem:[#allocation3 + $0x322] sm:$0x1]
  %v2727 = vld [vmem:[#allocation3 + $0x324] sm:$0x1]
  %v2728 = vld [vmem:[#allocation3 + $0x326] sm:$0x1]
  %v2729 = vld [vmem:[#allocation3 + $0x328] sm:$0x1]
  %v2730 = vld [vmem:[#allocation3 + $0x32a] sm:$0x1]
  %v2731 = vld [vmem:[#allocation3 + $0x32c] sm:$0x1]
  %v2732 = vld [vmem:[#allocation3 + $0x32e] sm:$0x1]
  %v2733 = vld [vmem:[#allocation3 + $0x330] sm:$0x1]
  %v2734 = vld [vmem:[#allocation3 + $0x332] sm:$0x1]
  %v2735 = vld [vmem:[#allocation3 + $0x334] sm:$0x1]
  %v2736 = vld [vmem:[#allocation3 + $0x336] sm:$0x1]
  %v2737 = vld [vmem:[#allocation3 + $0x338] sm:$0x1]
  %v2738 = vld [vmem:[#allocation3 + $0x33a] sm:$0x1]
  %v2739 = vld [vmem:[#allocation3 + $0x33c] sm:$0x1]
  %v2740 = vld [vmem:[#allocation3 + $0x33e] sm:$0x1]
  %v2741 = vld [vmem:[#allocation3 + $0x340] sm:$0x1]
  %v2742 = vld [vmem:[#allocation3 + $0x342] sm:$0x1]
  %v2743 = vld [vmem:[#allocation3 + $0x344] sm:$0x1]
  %v2744 = vld [vmem:[#allocation3 + $0x346] sm:$0x1]
  %v2745 = vld [vmem:[#allocation3 + $0x348] sm:$0x1]
  %v2746 = vld [vmem:[#allocation3 + $0x34a] sm:$0x1]
  %v2747 = vld [vmem:[#allocation3 + $0x34c] sm:$0x1]
  %v2748 = vld [vmem:[#allocation3 + $0x34e] sm:$0x1]
  %v2749 = vld [vmem:[#allocation3 + $0x350] sm:$0x1]
  %v2750 = vld [vmem:[#allocation3 + $0x352] sm:$0x1]
  %v2751 = vld [vmem:[#allocation3 + $0x354] sm:$0x1]
  %v2752 = vld [vmem:[#allocation3 + $0x356] sm:$0x1]
  %v2753 = vld [vmem:[#allocation3 + $0x358] sm:$0x1]
  %v2754 = vld [vmem:[#allocation3 + $0x35a] sm:$0x1]
  %v2755 = vld [vmem:[#allocation3 + $0x35c] sm:$0x1]
  %v2756 = vld [vmem:[#allocation3 + $0x35e] sm:$0x1]
  %v2757 = vld [vmem:[#allocation3 + $0x360] sm:$0x1]
  %v2758 = vld [vmem:[#allocation3 + $0x362] sm:$0x1]
  %v2759 = vld [vmem:[#allocation3 + $0x364] sm:$0x1]
  %v2760 = vld [vmem:[#allocation3 + $0x366] sm:$0x1]
  %v2761 = vld [vmem:[#allocation3 + $0x368] sm:$0x1]
  %v2762 = vld [vmem:[#allocation3 + $0x36a] sm:$0x1]
  %v2763 = vld [vmem:[#allocation3 + $0x36c] sm:$0x1]
  %v2764 = vld [vmem:[#allocation3 + $0x36e] sm:$0x1]
  %v2765 = vld [vmem:[#allocation3 + $0x370] sm:$0x1]
  %v2766 = vld [vmem:[#allocation3 + $0x372] sm:$0x1]
  %v2767 = vld [vmem:[#allocation3 + $0x374] sm:$0x1]
  %v2768 = vld [vmem:[#allocation3 + $0x376] sm:$0x1]
  %v2769 = vld [vmem:[#allocation3 + $0x378] sm:$0x1]
  %v2770 = vld [vmem:[#allocation3 + $0x37a] sm:$0x1]
  %v2771 = vld [vmem:[#allocation3 + $0x37c] sm:$0x1]
  %v2772 = vld [vmem:[#allocation3 + $0x37e] sm:$0x1]
  %v2773 = vld [vmem:[#allocation3 + $0x380] sm:$0x1]
  %v2774 = vld [vmem:[#allocation3 + $0x382] sm:$0x1]
  %v2775 = vld [vmem:[#allocation3 + $0x384] sm:$0x1]
  %v2776 = vld [vmem:[#allocation3 + $0x386] sm:$0x1]
  %v2777 = vld [vmem:[#allocation3 + $0x388] sm:$0x1]
  %v2778 = vld [vmem:[#allocation3 + $0x38a] sm:$0x1]
  %v2779 = vld [vmem:[#allocation3 + $0x38c] sm:$0x1]
  %v2780 = vld [vmem:[#allocation3 + $0x38e] sm:$0x1]
  %v2781 = vld [vmem:[#allocation3 + $0x390] sm:$0x1]
  %v2782 = vld [vmem:[#allocation3 + $0x392] sm:$0x1]
  %v2783 = vld [vmem:[#allocation3 + $0x394] sm:$0x1]
  %v2784 = vld [vmem:[#allocation3 + $0x396] sm:$0x1]
  %v2785 = vld [vmem:[#allocation3 + $0x398] sm:$0x1]
  %v2786 = vld [vmem:[#allocation3 + $0x39a] sm:$0x1]
  %v2787 = vld [vmem:[#allocation3 + $0x39c] sm:$0x1]
  %v2788 = vld [vmem:[#allocation3 + $0x39e] sm:$0x1]
  %v2789 = vld [vmem:[#allocation3 + $0x3a0] sm:$0x1]
  %v2790 = vld [vmem:[#allocation3 + $0x3a2] sm:$0x1]
  %v2791 = vld [vmem:[#allocation3 + $0x3a4] sm:$0x1]
  %v2792 = vld [vmem:[#allocation3 + $0x3a6] sm:$0x1]
  %v2793 = vld [vmem:[#allocation3 + $0x3a8] sm:$0x1]
  %v2794 = vld [vmem:[#allocation3 + $0x3aa] sm:$0x1]
  %v2795 = vld [vmem:[#allocation3 + $0x3ac] sm:$0x1]
  %v2796 = vld [vmem:[#allocation3 + $0x3ae] sm:$0x1]
  %v2797 = vld [vmem:[#allocation3 + $0x3b0] sm:$0x1]
  %v2798 = vld [vmem:[#allocation3 + $0x3b2] sm:$0x1]
  %v2799 = vld [vmem:[#allocation3 + $0x3b4] sm:$0x1]
  %v2800 = vld [vmem:[#allocation3 + $0x3b6] sm:$0x1]
  %v2801 = vld [vmem:[#allocation3 + $0x3b8] sm:$0x1]
  %v2802 = vld [vmem:[#allocation3 + $0x3ba] sm:$0x1]
  %v2803 = vld [vmem:[#allocation3 + $0x3bc] sm:$0x1]
  %v2804 = vld [vmem:[#allocation3 + $0x3be] sm:$0x1]
  %v2806 = vperm.slane %v2324, 0
  %v3288 = vrot.slane %v2326, 7
  %vm3289 = vcmask 1041409
  %v3290 = vsel %vm3289, %v3288, %v2325
  %v3291 = vrot.slane %v2327, 6
  %vm3292 = vcmask 1042434
  %v3293 = vsel %vm3292, %v3291, %v3290
  %v3294 = vrot.slane %v2328, 5
  %vm3295 = vcmask 1043459
  %v3296 = vsel %vm3295, %v3294, %v3293
  %v3297 = vrot.slane %v2329, 4
  %vm3298 = vcmask 1044484
  %v3299 = vsel %vm3298, %v3297, %v3296
  %v3300 = vrot.slane %v2330, 3
  %vm3301 = vcmask 1045509
  %v3302 = vsel %vm3301, %v3300, %v3299
  %v3303 = vrot.slane %v2331, 2
  %vm3304 = vcmask 1046534
  %v3305 = vsel %vm3304, %v3303, %v3302
  %v3306 = vrot.slane %v2332, 1
  %vm3307 = vcmask 1047559
  %v3308 = vsel %vm3307, %v3306, %v3305
  %v3309 = vrot.slane %v2334, 7
  %v3310 = vsel %vm3289, %v3309, %v2333
  %v3311 = vrot.slane %v2335, 6
  %v3312 = vsel %vm3292, %v3311, %v3310
  %v3313 = vrot.slane %v2336, 5
  %v3314 = vsel %vm3295, %v3313, %v3312
  %v3315 = vrot.slane %v2337, 4
  %v3316 = vsel %vm3298, %v3315, %v3314
  %v3317 = vrot.slane %v2338, 3
  %v3318 = vsel %vm3301, %v3317, %v3316
  %v3319 = vrot.slane %v2339, 2
  %v3320 = vsel %vm3304, %v3319, %v3318
  %v3321 = vrot.slane %v2340, 1
  %v3322 = vsel %vm3307, %v3321, %v3320
  %v3323 = vrot.slane %v2342, 7
  %v3324 = vsel %vm3289, %v3323, %v2341
  %v3325 = vrot.slane %v2343, 6
  %v3326 = vsel %vm3292, %v3325, %v3324
  %v3327 = vrot.slane %v2344, 5
  %v3328 = vsel %vm3295, %v3327, %v3326
  %v3329 = vrot.slane %v2345, 4
  %v3330 = vsel %vm3298, %v3329, %v3328
  %v3331 = vrot.slane %v2346, 3
  %v3332 = vsel %vm3301, %v3331, %v3330
  %v3333 = vrot.slane %v2347, 2
  %v3334 = vsel %vm3304, %v3333, %v3332
  %v3335 = vrot.slane %v2348, 1
  %v3336 = vsel %vm3307, %v3335, %v3334
  %v3337 = vrot.slane %v2350, 7
  %v3338 = vsel %vm3289, %v3337, %v2349
  %v3339 = vrot.slane %v2351, 6
  %v3340 = vsel %vm3292, %v3339, %v3338
  %v3341 = vrot.slane %v2352, 5
  %v3342 = vsel %vm3295, %v3341, %v3340
  %v3343 = vrot.slane %v2353, 4
  %v3344 = vsel %vm3298, %v3343, %v3342
  %v3345 = vrot.slane %v2354, 3
  %v3346 = vsel %vm3301, %v3345, %v3344
  %v3347 = vrot.slane %v2355, 2
  %v3348 = vsel %vm3304, %v3347, %v3346
  %v3349 = vrot.slane %v2356, 1
  %v3350 = vsel %vm3307, %v3349, %v3348
  %v3351 = vrot.slane %v2358, 7
  %v3352 = vsel %vm3289, %v3351, %v2357
  %v3353 = vrot.slane %v2359, 6
  %v3354 = vsel %vm3292, %v3353, %v3352
  %v3355 = vrot.slane %v2360, 5
  %v3356 = vsel %vm3295, %v3355, %v3354
  %v3357 = vrot.slane %v2361, 4
  %v3358 = vsel %vm3298, %v3357, %v3356
  %v3359 = vrot.slane %v2362, 3
  %v3360 = vsel %vm3301, %v3359, %v3358
  %v3361 = vrot.slane %v2363, 2
  %v3362 = vsel %vm3304, %v3361, %v3360
  %v3363 = vrot.slane %v2364, 1
  %v3364 = vsel %vm3307, %v3363, %v3362
  %v3365 = vrot.slane %v2366, 7
  %v3366 = vsel %vm3289, %v3365, %v2365
  %v3367 = vrot.slane %v2367, 6
  %v3368 = vsel %vm3292, %v3367, %v3366
  %v3369 = vrot.slane %v2368, 5
  %v3370 = vsel %vm3295, %v3369, %v3368
  %v3371 = vrot.slane %v2369, 4
  %v3372 = vsel %vm3298, %v3371, %v3370
  %v3373 = vrot.slane %v2370, 3
  %v3374 = vsel %vm3301, %v3373, %v3372
  %v3375 = vrot.slane %v2371, 2
  %v3376 = vsel %vm3304, %v3375, %v3374
  %v3377 = vrot.slane %v2372, 1
  %v3378 = vsel %vm3307, %v3377, %v3376
  %v3379 = vrot.slane %v2374, 7
  %v3380 = vsel %vm3289, %v3379, %v2373
  %v3381 = vrot.slane %v2375, 6
  %v3382 = vsel %vm3292, %v3381, %v3380
  %v3383 = vrot.slane %v2376, 5
  %v3384 = vsel %vm3295, %v3383, %v3382
  %v3385 = vrot.slane %v2377, 4
  %v3386 = vsel %vm3298, %v3385, %v3384
  %v3387 = vrot.slane %v2378, 3
  %v3388 = vsel %vm3301, %v3387, %v3386
  %v3389 = vrot.slane %v2379, 2
  %v3390 = vsel %vm3304, %v3389, %v3388
  %v3391 = vrot.slane %v2380, 1
  %v3392 = vsel %vm3307, %v3391, %v3390
  %v3393 = vrot.slane %v2382, 7
  %v3394 = vsel %vm3289, %v3393, %v2381
  %v3395 = vrot.slane %v2383, 6
  %v3396 = vsel %vm3292, %v3395, %v3394
  %v3397 = vrot.slane %v2384, 5
  %v3398 = vsel %vm3295, %v3397, %v3396
  %v3399 = vrot.slane %v2385, 4
  %v3400 = vsel %vm3298, %v3399, %v3398
  %v3401 = vrot.slane %v2386, 3
  %v3402 = vsel %vm3301, %v3401, %v3400
  %v3403 = vrot.slane %v2387, 2
  %v3404 = vsel %vm3304, %v3403, %v3402
  %v3405 = vrot.slane %v2388, 1
  %v3406 = vsel %vm3307, %v3405, %v3404
  %v3407 = vrot.slane %v2390, 7
  %v3408 = vsel %vm3289, %v3407, %v2389
  %v3409 = vrot.slane %v2391, 6
  %v3410 = vsel %vm3292, %v3409, %v3408
  %v3411 = vrot.slane %v2392, 5
  %v3412 = vsel %vm3295, %v3411, %v3410
  %v3413 = vrot.slane %v2393, 4
  %v3414 = vsel %vm3298, %v3413, %v3412
  %v3415 = vrot.slane %v2394, 3
  %v3416 = vsel %vm3301, %v3415, %v3414
  %v3417 = vrot.slane %v2395, 2
  %v3418 = vsel %vm3304, %v3417, %v3416
  %v3419 = vrot.slane %v2396, 1
  %v3420 = vsel %vm3307, %v3419, %v3418
  %v3421 = vrot.slane %v2398, 7
  %v3422 = vsel %vm3289, %v3421, %v2397
  %v3423 = vrot.slane %v2399, 6
  %v3424 = vsel %vm3292, %v3423, %v3422
  %v3425 = vrot.slane %v2400, 5
  %v3426 = vsel %vm3295, %v3425, %v3424
  %v3427 = vrot.slane %v2401, 4
  %v3428 = vsel %vm3298, %v3427, %v3426
  %v3429 = vrot.slane %v2402, 3
  %v3430 = vsel %vm3301, %v3429, %v3428
  %v3431 = vrot.slane %v2403, 2
  %v3432 = vsel %vm3304, %v3431, %v3430
  %v3433 = vrot.slane %v2404, 1
  %v3434 = vsel %vm3307, %v3433, %v3432
  %v3435 = vrot.slane %v2406, 7
  %v3436 = vsel %vm3289, %v3435, %v2405
  %v3437 = vrot.slane %v2407, 6
  %v3438 = vsel %vm3292, %v3437, %v3436
  %v3439 = vrot.slane %v2408, 5
  %v3440 = vsel %vm3295, %v3439, %v3438
  %v3441 = vrot.slane %v2409, 4
  %v3442 = vsel %vm3298, %v3441, %v3440
  %v3443 = vrot.slane %v2410, 3
  %v3444 = vsel %vm3301, %v3443, %v3442
  %v3445 = vrot.slane %v2411, 2
  %v3446 = vsel %vm3304, %v3445, %v3444
  %v3447 = vrot.slane %v2412, 1
  %v3448 = vsel %vm3307, %v3447, %v3446
  %v3449 = vrot.slane %v2414, 7
  %v3450 = vsel %vm3289, %v3449, %v2413
  %v3451 = vrot.slane %v2415, 6
  %v3452 = vsel %vm3292, %v3451, %v3450
  %v3453 = vrot.slane %v2416, 5
  %v3454 = vsel %vm3295, %v3453, %v3452
  %v3455 = vrot.slane %v2417, 4
  %v3456 = vsel %vm3298, %v3455, %v3454
  %v3457 = vrot.slane %v2418, 3
  %v3458 = vsel %vm3301, %v3457, %v3456
  %v3459 = vrot.slane %v2419, 2
  %v3460 = vsel %vm3304, %v3459, %v3458
  %v3461 = vrot.slane %v2420, 1
  %v3462 = vsel %vm3307, %v3461, %v3460
  %v3463 = vrot.slane %v2422, 7
  %v3464 = vsel %vm3289, %v3463, %v2421
  %v3465 = vrot.slane %v2423, 6
  %v3466 = vsel %vm3292, %v3465, %v3464
  %v3467 = vrot.slane %v2424, 5
  %v3468 = vsel %vm3295, %v3467, %v3466
  %v3469 = vrot.slane %v2425, 4
  %v3470 = vsel %vm3298, %v3469, %v3468
  %v3471 = vrot.slane %v2426, 3
  %v3472 = vsel %vm3301, %v3471, %v3470
  %v3473 = vrot.slane %v2427, 2
  %v3474 = vsel %vm3304, %v3473, %v3472
  %v3475 = vrot.slane %v2428, 1
  %v3476 = vsel %vm3307, %v3475, %v3474
  %v3477 = vrot.slane %v2430, 7
  %v3478 = vsel %vm3289, %v3477, %v2429
  %v3479 = vrot.slane %v2431, 6
  %v3480 = vsel %vm3292, %v3479, %v3478
  %v3481 = vrot.slane %v2432, 5
  %v3482 = vsel %vm3295, %v3481, %v3480
  %v3483 = vrot.slane %v2433, 4
  %v3484 = vsel %vm3298, %v3483, %v3482
  %v3485 = vrot.slane %v2434, 3
  %v3486 = vsel %vm3301, %v3485, %v3484
  %v3487 = vrot.slane %v2435, 2
  %v3488 = vsel %vm3304, %v3487, %v3486
  %v3489 = vrot.slane %v2436, 1
  %v3490 = vsel %vm3307, %v3489, %v3488
  %v3491 = vrot.slane %v2438, 7
  %v3492 = vsel %vm3289, %v3491, %v2437
  %v3493 = vrot.slane %v2439, 6
  %v3494 = vsel %vm3292, %v3493, %v3492
  %v3495 = vrot.slane %v2440, 5
  %v3496 = vsel %vm3295, %v3495, %v3494
  %v3497 = vrot.slane %v2441, 4
  %v3498 = vsel %vm3298, %v3497, %v3496
  %v3499 = vrot.slane %v2442, 3
  %v3500 = vsel %vm3301, %v3499, %v3498
  %v3501 = vrot.slane %v2443, 2
  %v3502 = vsel %vm3304, %v3501, %v3500
  %v3503 = vrot.slane %v2444, 1
  %v3504 = vsel %vm3307, %v3503, %v3502
  %v3505 = vrot.slane %v2446, 7
  %v3506 = vsel %vm3289, %v3505, %v2445
  %v3507 = vrot.slane %v2447, 6
  %v3508 = vsel %vm3292, %v3507, %v3506
  %v3509 = vrot.slane %v2448, 5
  %v3510 = vsel %vm3295, %v3509, %v3508
  %v3511 = vrot.slane %v2449, 4
  %v3512 = vsel %vm3298, %v3511, %v3510
  %v3513 = vrot.slane %v2450, 3
  %v3514 = vsel %vm3301, %v3513, %v3512
  %v3515 = vrot.slane %v2451, 2
  %v3516 = vsel %vm3304, %v3515, %v3514
  %v3517 = vrot.slane %v2452, 1
  %v3518 = vsel %vm3307, %v3517, %v3516
  %v3519 = vrot.slane %v2454, 7
  %v3520 = vsel %vm3289, %v3519, %v2453
  %v3521 = vrot.slane %v2455, 6
  %v3522 = vsel %vm3292, %v3521, %v3520
  %v3523 = vrot.slane %v2456, 5
  %v3524 = vsel %vm3295, %v3523, %v3522
  %v3525 = vrot.slane %v2457, 4
  %v3526 = vsel %vm3298, %v3525, %v3524
  %v3527 = vrot.slane %v2458, 3
  %v3528 = vsel %vm3301, %v3527, %v3526
  %v3529 = vrot.slane %v2459, 2
  %v3530 = vsel %vm3304, %v3529, %v3528
  %v3531 = vrot.slane %v2460, 1
  %v3532 = vsel %vm3307, %v3531, %v3530
  %v3533 = vrot.slane %v2462, 7
  %v3534 = vsel %vm3289, %v3533, %v2461
  %v3535 = vrot.slane %v2463, 6
  %v3536 = vsel %vm3292, %v3535, %v3534
  %v3537 = vrot.slane %v2464, 5
  %v3538 = vsel %vm3295, %v3537, %v3536
  %v3539 = vrot.slane %v2465, 4
  %v3540 = vsel %vm3298, %v3539, %v3538
  %v3541 = vrot.slane %v2466, 3
  %v3542 = vsel %vm3301, %v3541, %v3540
  %v3543 = vrot.slane %v2467, 2
  %v3544 = vsel %vm3304, %v3543, %v3542
  %v3545 = vrot.slane %v2468, 1
  %v3546 = vsel %vm3307, %v3545, %v3544
  %v3547 = vrot.slane %v2470, 7
  %v3548 = vsel %vm3289, %v3547, %v2469
  %v3549 = vrot.slane %v2471, 6
  %v3550 = vsel %vm3292, %v3549, %v3548
  %v3551 = vrot.slane %v2472, 5
  %v3552 = vsel %vm3295, %v3551, %v3550
  %v3553 = vrot.slane %v2473, 4
  %v3554 = vsel %vm3298, %v3553, %v3552
  %v3555 = vrot.slane %v2474, 3
  %v3556 = vsel %vm3301, %v3555, %v3554
  %v3557 = vrot.slane %v2475, 2
  %v3558 = vsel %vm3304, %v3557, %v3556
  %v3559 = vrot.slane %v2476, 1
  %v3560 = vsel %vm3307, %v3559, %v3558
  %v3561 = vrot.slane %v2478, 7
  %v3562 = vsel %vm3289, %v3561, %v2477
  %v3563 = vrot.slane %v2479, 6
  %v3564 = vsel %vm3292, %v3563, %v3562
  %v3565 = vrot.slane %v2480, 5
  %v3566 = vsel %vm3295, %v3565, %v3564
  %v3567 = vrot.slane %v2481, 4
  %v3568 = vsel %vm3298, %v3567, %v3566
  %v3569 = vrot.slane %v2482, 3
  %v3570 = vsel %vm3301, %v3569, %v3568
  %v3571 = vrot.slane %v2483, 2
  %v3572 = vsel %vm3304, %v3571, %v3570
  %v3573 = vrot.slane %v2484, 1
  %v3574 = vsel %vm3307, %v3573, %v3572
  %v3575 = vrot.slane %v2486, 7
  %v3576 = vsel %vm3289, %v3575, %v2485
  %v3577 = vrot.slane %v2487, 6
  %v3578 = vsel %vm3292, %v3577, %v3576
  %v3579 = vrot.slane %v2488, 5
  %v3580 = vsel %vm3295, %v3579, %v3578
  %v3581 = vrot.slane %v2489, 4
  %v3582 = vsel %vm3298, %v3581, %v3580
  %v3583 = vrot.slane %v2490, 3
  %v3584 = vsel %vm3301, %v3583, %v3582
  %v3585 = vrot.slane %v2491, 2
  %v3586 = vsel %vm3304, %v3585, %v3584
  %v3587 = vrot.slane %v2492, 1
  %v3588 = vsel %vm3307, %v3587, %v3586
  %v3589 = vrot.slane %v2494, 7
  %v3590 = vsel %vm3289, %v3589, %v2493
  %v3591 = vrot.slane %v2495, 6
  %v3592 = vsel %vm3292, %v3591, %v3590
  %v3593 = vrot.slane %v2496, 5
  %v3594 = vsel %vm3295, %v3593, %v3592
  %v3595 = vrot.slane %v2497, 4
  %v3596 = vsel %vm3298, %v3595, %v3594
  %v3597 = vrot.slane %v2498, 3
  %v3598 = vsel %vm3301, %v3597, %v3596
  %v3599 = vrot.slane %v2499, 2
  %v3600 = vsel %vm3304, %v3599, %v3598
  %v3601 = vrot.slane %v2500, 1
  %v3602 = vsel %vm3307, %v3601, %v3600
  %v3603 = vrot.slane %v2502, 7
  %v3604 = vsel %vm3289, %v3603, %v2501
  %v3605 = vrot.slane %v2503, 6
  %v3606 = vsel %vm3292, %v3605, %v3604
  %v3607 = vrot.slane %v2504, 5
  %v3608 = vsel %vm3295, %v3607, %v3606
  %v3609 = vrot.slane %v2505, 4
  %v3610 = vsel %vm3298, %v3609, %v3608
  %v3611 = vrot.slane %v2506, 3
  %v3612 = vsel %vm3301, %v3611, %v3610
  %v3613 = vrot.slane %v2507, 2
  %v3614 = vsel %vm3304, %v3613, %v3612
  %v3615 = vrot.slane %v2508, 1
  %v3616 = vsel %vm3307, %v3615, %v3614
  %v3617 = vrot.slane %v2510, 7
  %v3618 = vsel %vm3289, %v3617, %v2509
  %v3619 = vrot.slane %v2511, 6
  %v3620 = vsel %vm3292, %v3619, %v3618
  %v3621 = vrot.slane %v2512, 5
  %v3622 = vsel %vm3295, %v3621, %v3620
  %v3623 = vrot.slane %v2513, 4
  %v3624 = vsel %vm3298, %v3623, %v3622
  %v3625 = vrot.slane %v2514, 3
  %v3626 = vsel %vm3301, %v3625, %v3624
  %v3627 = vrot.slane %v2515, 2
  %v3628 = vsel %vm3304, %v3627, %v3626
  %v3629 = vrot.slane %v2516, 1
  %v3630 = vsel %vm3307, %v3629, %v3628
  %v3631 = vrot.slane %v2518, 7
  %v3632 = vsel %vm3289, %v3631, %v2517
  %v3633 = vrot.slane %v2519, 6
  %v3634 = vsel %vm3292, %v3633, %v3632
  %v3635 = vrot.slane %v2520, 5
  %v3636 = vsel %vm3295, %v3635, %v3634
  %v3637 = vrot.slane %v2521, 4
  %v3638 = vsel %vm3298, %v3637, %v3636
  %v3639 = vrot.slane %v2522, 3
  %v3640 = vsel %vm3301, %v3639, %v3638
  %v3641 = vrot.slane %v2523, 2
  %v3642 = vsel %vm3304, %v3641, %v3640
  %v3643 = vrot.slane %v2524, 1
  %v3644 = vsel %vm3307, %v3643, %v3642
  %v3645 = vrot.slane %v2526, 7
  %v3646 = vsel %vm3289, %v3645, %v2525
  %v3647 = vrot.slane %v2527, 6
  %v3648 = vsel %vm3292, %v3647, %v3646
  %v3649 = vrot.slane %v2528, 5
  %v3650 = vsel %vm3295, %v3649, %v3648
  %v3651 = vrot.slane %v2529, 4
  %v3652 = vsel %vm3298, %v3651, %v3650
  %v3653 = vrot.slane %v2530, 3
  %v3654 = vsel %vm3301, %v3653, %v3652
  %v3655 = vrot.slane %v2531, 2
  %v3656 = vsel %vm3304, %v3655, %v3654
  %v3657 = vrot.slane %v2532, 1
  %v3658 = vsel %vm3307, %v3657, %v3656
  %v3659 = vrot.slane %v2534, 7
  %v3660 = vsel %vm3289, %v3659, %v2533
  %v3661 = vrot.slane %v2535, 6
  %v3662 = vsel %vm3292, %v3661, %v3660
  %v3663 = vrot.slane %v2536, 5
  %v3664 = vsel %vm3295, %v3663, %v3662
  %v3665 = vrot.slane %v2537, 4
  %v3666 = vsel %vm3298, %v3665, %v3664
  %v3667 = vrot.slane %v2538, 3
  %v3668 = vsel %vm3301, %v3667, %v3666
  %v3669 = vrot.slane %v2539, 2
  %v3670 = vsel %vm3304, %v3669, %v3668
  %v3671 = vrot.slane %v2540, 1
  %v3672 = vsel %vm3307, %v3671, %v3670
  %v3673 = vrot.slane %v2542, 7
  %v3674 = vsel %vm3289, %v3673, %v2541
  %v3675 = vrot.slane %v2543, 6
  %v3676 = vsel %vm3292, %v3675, %v3674
  %v3677 = vrot.slane %v2544, 5
  %v3678 = vsel %vm3295, %v3677, %v3676
  %v3679 = vrot.slane %v2545, 4
  %v3680 = vsel %vm3298, %v3679, %v3678
  %v3681 = vrot.slane %v2546, 3
  %v3682 = vsel %vm3301, %v3681, %v3680
  %v3683 = vrot.slane %v2547, 2
  %v3684 = vsel %vm3304, %v3683, %v3682
  %v3685 = vrot.slane %v2548, 1
  %v3686 = vsel %vm3307, %v3685, %v3684
  %v3687 = vrot.slane %v2550, 7
  %v3688 = vsel %vm3289, %v3687, %v2549
  %v3689 = vrot.slane %v2551, 6
  %v3690 = vsel %vm3292, %v3689, %v3688
  %v3691 = vrot.slane %v2552, 5
  %v3692 = vsel %vm3295, %v3691, %v3690
  %v3693 = vrot.slane %v2553, 4
  %v3694 = vsel %vm3298, %v3693, %v3692
  %v3695 = vrot.slane %v2554, 3
  %v3696 = vsel %vm3301, %v3695, %v3694
  %v3697 = vrot.slane %v2555, 2
  %v3698 = vsel %vm3304, %v3697, %v3696
  %v3699 = vrot.slane %v2556, 1
  %v3700 = vsel %vm3307, %v3699, %v3698
  %v3701 = vrot.slane %v2558, 7
  %v3702 = vsel %vm3289, %v3701, %v2557
  %v3703 = vrot.slane %v2559, 6
  %v3704 = vsel %vm3292, %v3703, %v3702
  %v3705 = vrot.slane %v2560, 5
  %v3706 = vsel %vm3295, %v3705, %v3704
  %v3707 = vrot.slane %v2561, 4
  %v3708 = vsel %vm3298, %v3707, %v3706
  %v3709 = vrot.slane %v2562, 3
  %v3710 = vsel %vm3301, %v3709, %v3708
  %v3711 = vrot.slane %v2563, 2
  %v3712 = vsel %vm3304, %v3711, %v3710
  %v3713 = vrot.slane %v2564, 1
  %v3714 = vsel %vm3307, %v3713, %v3712
  %v3715 = vrot.slane %v2566, 7
  %v3716 = vsel %vm3289, %v3715, %v2565
  %v3717 = vrot.slane %v2567, 6
  %v3718 = vsel %vm3292, %v3717, %v3716
  %v3719 = vrot.slane %v2568, 5
  %v3720 = vsel %vm3295, %v3719, %v3718
  %v3721 = vrot.slane %v2569, 4
  %v3722 = vsel %vm3298, %v3721, %v3720
  %v3723 = vrot.slane %v2570, 3
  %v3724 = vsel %vm3301, %v3723, %v3722
  %v3725 = vrot.slane %v2571, 2
  %v3726 = vsel %vm3304, %v3725, %v3724
  %v3727 = vrot.slane %v2572, 1
  %v3728 = vsel %vm3307, %v3727, %v3726
  %v3729 = vrot.slane %v2574, 7
  %v3730 = vsel %vm3289, %v3729, %v2573
  %v3731 = vrot.slane %v2575, 6
  %v3732 = vsel %vm3292, %v3731, %v3730
  %v3733 = vrot.slane %v2576, 5
  %v3734 = vsel %vm3295, %v3733, %v3732
  %v3735 = vrot.slane %v2577, 4
  %v3736 = vsel %vm3298, %v3735, %v3734
  %v3737 = vrot.slane %v2578, 3
  %v3738 = vsel %vm3301, %v3737, %v3736
  %v3739 = vrot.slane %v2579, 2
  %v3740 = vsel %vm3304, %v3739, %v3738
  %v3741 = vrot.slane %v2580, 1
  %v3742 = vsel %vm3307, %v3741, %v3740
  %v3743 = vrot.slane %v2582, 7
  %v3744 = vsel %vm3289, %v3743, %v2581
  %v3745 = vrot.slane %v2583, 6
  %v3746 = vsel %vm3292, %v3745, %v3744
  %v3747 = vrot.slane %v2584, 5
  %v3748 = vsel %vm3295, %v3747, %v3746
  %v3749 = vrot.slane %v2585, 4
  %v3750 = vsel %vm3298, %v3749, %v3748
  %v3751 = vrot.slane %v2586, 3
  %v3752 = vsel %vm3301, %v3751, %v3750
  %v3753 = vrot.slane %v2587, 2
  %v3754 = vsel %vm3304, %v3753, %v3752
  %v3755 = vrot.slane %v2588, 1
  %v3756 = vsel %vm3307, %v3755, %v3754
  %v3757 = vrot.slane %v2590, 7
  %v3758 = vsel %vm3289, %v3757, %v2589
  %v3759 = vrot.slane %v2591, 6
  %v3760 = vsel %vm3292, %v3759, %v3758
  %v3761 = vrot.slane %v2592, 5
  %v3762 = vsel %vm3295, %v3761, %v3760
  %v3763 = vrot.slane %v2593, 4
  %v3764 = vsel %vm3298, %v3763, %v3762
  %v3765 = vrot.slane %v2594, 3
  %v3766 = vsel %vm3301, %v3765, %v3764
  %v3767 = vrot.slane %v2595, 2
  %v3768 = vsel %vm3304, %v3767, %v3766
  %v3769 = vrot.slane %v2596, 1
  %v3770 = vsel %vm3307, %v3769, %v3768
  %v3771 = vrot.slane %v2598, 7
  %v3772 = vsel %vm3289, %v3771, %v2597
  %v3773 = vrot.slane %v2599, 6
  %v3774 = vsel %vm3292, %v3773, %v3772
  %v3775 = vrot.slane %v2600, 5
  %v3776 = vsel %vm3295, %v3775, %v3774
  %v3777 = vrot.slane %v2601, 4
  %v3778 = vsel %vm3298, %v3777, %v3776
  %v3779 = vrot.slane %v2602, 3
  %v3780 = vsel %vm3301, %v3779, %v3778
  %v3781 = vrot.slane %v2603, 2
  %v3782 = vsel %vm3304, %v3781, %v3780
  %v3783 = vrot.slane %v2604, 1
  %v3784 = vsel %vm3307, %v3783, %v3782
  %v3785 = vrot.slane %v2606, 7
  %v3786 = vsel %vm3289, %v3785, %v2605
  %v3787 = vrot.slane %v2607, 6
  %v3788 = vsel %vm3292, %v3787, %v3786
  %v3789 = vrot.slane %v2608, 5
  %v3790 = vsel %vm3295, %v3789, %v3788
  %v3791 = vrot.slane %v2609, 4
  %v3792 = vsel %vm3298, %v3791, %v3790
  %v3793 = vrot.slane %v2610, 3
  %v3794 = vsel %vm3301, %v3793, %v3792
  %v3795 = vrot.slane %v2611, 2
  %v3796 = vsel %vm3304, %v3795, %v3794
  %v3797 = vrot.slane %v2612, 1
  %v3798 = vsel %vm3307, %v3797, %v3796
  %v3799 = vrot.slane %v2614, 7
  %v3800 = vsel %vm3289, %v3799, %v2613
  %v3801 = vrot.slane %v2615, 6
  %v3802 = vsel %vm3292, %v3801, %v3800
  %v3803 = vrot.slane %v2616, 5
  %v3804 = vsel %vm3295, %v3803, %v3802
  %v3805 = vrot.slane %v2617, 4
  %v3806 = vsel %vm3298, %v3805, %v3804
  %v3807 = vrot.slane %v2618, 3
  %v3808 = vsel %vm3301, %v3807, %v3806
  %v3809 = vrot.slane %v2619, 2
  %v3810 = vsel %vm3304, %v3809, %v3808
  %v3811 = vrot.slane %v2620, 1
  %v3812 = vsel %vm3307, %v3811, %v3810
  %v3813 = vrot.slane %v2622, 7
  %v3814 = vsel %vm3289, %v3813, %v2621
  %v3815 = vrot.slane %v2623, 6
  %v3816 = vsel %vm3292, %v3815, %v3814
  %v3817 = vrot.slane %v2624, 5
  %v3818 = vsel %vm3295, %v3817, %v3816
  %v3819 = vrot.slane %v2625, 4
  %v3820 = vsel %vm3298, %v3819, %v3818
  %v3821 = vrot.slane %v2626, 3
  %v3822 = vsel %vm3301, %v3821, %v3820
  %v3823 = vrot.slane %v2627, 2
  %v3824 = vsel %vm3304, %v3823, %v3822
  %v3825 = vrot.slane %v2628, 1
  %v3826 = vsel %vm3307, %v3825, %v3824
  %v3827 = vrot.slane %v2630, 7
  %v3828 = vsel %vm3289, %v3827, %v2629
  %v3829 = vrot.slane %v2631, 6
  %v3830 = vsel %vm3292, %v3829, %v3828
  %v3831 = vrot.slane %v2632, 5
  %v3832 = vsel %vm3295, %v3831, %v3830
  %v3833 = vrot.slane %v2633, 4
  %v3834 = vsel %vm3298, %v3833, %v3832
  %v3835 = vrot.slane %v2634, 3
  %v3836 = vsel %vm3301, %v3835, %v3834
  %v3837 = vrot.slane %v2635, 2
  %v3838 = vsel %vm3304, %v3837, %v3836
  %v3839 = vrot.slane %v2636, 1
  %v3840 = vsel %vm3307, %v3839, %v3838
  %v3841 = vrot.slane %v2638, 7
  %v3842 = vsel %vm3289, %v3841, %v2637
  %v3843 = vrot.slane %v2639, 6
  %v3844 = vsel %vm3292, %v3843, %v3842
  %v3845 = vrot.slane %v2640, 5
  %v3846 = vsel %vm3295, %v3845, %v3844
  %v3847 = vrot.slane %v2641, 4
  %v3848 = vsel %vm3298, %v3847, %v3846
  %v3849 = vrot.slane %v2642, 3
  %v3850 = vsel %vm3301, %v3849, %v3848
  %v3851 = vrot.slane %v2643, 2
  %v3852 = vsel %vm3304, %v3851, %v3850
  %v3853 = vrot.slane %v2644, 1
  %v3854 = vsel %vm3307, %v3853, %v3852
  %v3855 = vrot.slane %v2646, 7
  %v3856 = vsel %vm3289, %v3855, %v2645
  %v3857 = vrot.slane %v2647, 6
  %v3858 = vsel %vm3292, %v3857, %v3856
  %v3859 = vrot.slane %v2648, 5
  %v3860 = vsel %vm3295, %v3859, %v3858
  %v3861 = vrot.slane %v2649, 4
  %v3862 = vsel %vm3298, %v3861, %v3860
  %v3863 = vrot.slane %v2650, 3
  %v3864 = vsel %vm3301, %v3863, %v3862
  %v3865 = vrot.slane %v2651, 2
  %v3866 = vsel %vm3304, %v3865, %v3864
  %v3867 = vrot.slane %v2652, 1
  %v3868 = vsel %vm3307, %v3867, %v3866
  %v3869 = vrot.slane %v2654, 7
  %v3870 = vsel %vm3289, %v3869, %v2653
  %v3871 = vrot.slane %v2655, 6
  %v3872 = vsel %vm3292, %v3871, %v3870
  %v3873 = vrot.slane %v2656, 5
  %v3874 = vsel %vm3295, %v3873, %v3872
  %v3875 = vrot.slane %v2657, 4
  %v3876 = vsel %vm3298, %v3875, %v3874
  %v3877 = vrot.slane %v2658, 3
  %v3878 = vsel %vm3301, %v3877, %v3876
  %v3879 = vrot.slane %v2659, 2
  %v3880 = vsel %vm3304, %v3879, %v3878
  %v3881 = vrot.slane %v2660, 1
  %v3882 = vsel %vm3307, %v3881, %v3880
  %v3883 = vrot.slane %v2662, 7
  %v3884 = vsel %vm3289, %v3883, %v2661
  %v3885 = vrot.slane %v2663, 6
  %v3886 = vsel %vm3292, %v3885, %v3884
  %v3887 = vrot.slane %v2664, 5
  %v3888 = vsel %vm3295, %v3887, %v3886
  %v3889 = vrot.slane %v2665, 4
  %v3890 = vsel %vm3298, %v3889, %v3888
  %v3891 = vrot.slane %v2666, 3
  %v3892 = vsel %vm3301, %v3891, %v3890
  %v3893 = vrot.slane %v2667, 2
  %v3894 = vsel %vm3304, %v3893, %v3892
  %v3895 = vrot.slane %v2668, 1
  %v3896 = vsel %vm3307, %v3895, %v3894
  %v3897 = vrot.slane %v2670, 7
  %v3898 = vsel %vm3289, %v3897, %v2669
  %v3899 = vrot.slane %v2671, 6
  %v3900 = vsel %vm3292, %v3899, %v3898
  %v3901 = vrot.slane %v2672, 5
  %v3902 = vsel %vm3295, %v3901, %v3900
  %v3903 = vrot.slane %v2673, 4
  %v3904 = vsel %vm3298, %v3903, %v3902
  %v3905 = vrot.slane %v2674, 3
  %v3906 = vsel %vm3301, %v3905, %v3904
  %v3907 = vrot.slane %v2675, 2
  %v3908 = vsel %vm3304, %v3907, %v3906
  %v3909 = vrot.slane %v2676, 1
  %v3910 = vsel %vm3307, %v3909, %v3908
  %v3911 = vrot.slane %v2678, 7
  %v3912 = vsel %vm3289, %v3911, %v2677
  %v3913 = vrot.slane %v2679, 6
  %v3914 = vsel %vm3292, %v3913, %v3912
  %v3915 = vrot.slane %v2680, 5
  %v3916 = vsel %vm3295, %v3915, %v3914
  %v3917 = vrot.slane %v2681, 4
  %v3918 = vsel %vm3298, %v3917, %v3916
  %v3919 = vrot.slane %v2682, 3
  %v3920 = vsel %vm3301, %v3919, %v3918
  %v3921 = vrot.slane %v2683, 2
  %v3922 = vsel %vm3304, %v3921, %v3920
  %v3923 = vrot.slane %v2684, 1
  %v3924 = vsel %vm3307, %v3923, %v3922
  %v3925 = vrot.slane %v2686, 7
  %v3926 = vsel %vm3289, %v3925, %v2685
  %v3927 = vrot.slane %v2687, 6
  %v3928 = vsel %vm3292, %v3927, %v3926
  %v3929 = vrot.slane %v2688, 5
  %v3930 = vsel %vm3295, %v3929, %v3928
  %v3931 = vrot.slane %v2689, 4
  %v3932 = vsel %vm3298, %v3931, %v3930
  %v3933 = vrot.slane %v2690, 3
  %v3934 = vsel %vm3301, %v3933, %v3932
  %v3935 = vrot.slane %v2691, 2
  %v3936 = vsel %vm3304, %v3935, %v3934
  %v3937 = vrot.slane %v2692, 1
  %v3938 = vsel %vm3307, %v3937, %v3936
  %v3939 = vrot.slane %v2694, 7
  %v3940 = vsel %vm3289, %v3939, %v2693
  %v3941 = vrot.slane %v2695, 6
  %v3942 = vsel %vm3292, %v3941, %v3940
  %v3943 = vrot.slane %v2696, 5
  %v3944 = vsel %vm3295, %v3943, %v3942
  %v3945 = vrot.slane %v2697, 4
  %v3946 = vsel %vm3298, %v3945, %v3944
  %v3947 = vrot.slane %v2698, 3
  %v3948 = vsel %vm3301, %v3947, %v3946
  %v3949 = vrot.slane %v2699, 2
  %v3950 = vsel %vm3304, %v3949, %v3948
  %v3951 = vrot.slane %v2700, 1
  %v3952 = vsel %vm3307, %v3951, %v3950
  %v3953 = vrot.slane %v2702, 7
  %v3954 = vsel %vm3289, %v3953, %v2701
  %v3955 = vrot.slane %v2703, 6
  %v3956 = vsel %vm3292, %v3955, %v3954
  %v3957 = vrot.slane %v2704, 5
  %v3958 = vsel %vm3295, %v3957, %v3956
  %v3959 = vrot.slane %v2705, 4
  %v3960 = vsel %vm3298, %v3959, %v3958
  %v3961 = vrot.slane %v2706, 3
  %v3962 = vsel %vm3301, %v3961, %v3960
  %v3963 = vrot.slane %v2707, 2
  %v3964 = vsel %vm3304, %v3963, %v3962
  %v3965 = vrot.slane %v2708, 1
  %v3966 = vsel %vm3307, %v3965, %v3964
  %v3967 = vrot.slane %v2710, 7
  %v3968 = vsel %vm3289, %v3967, %v2709
  %v3969 = vrot.slane %v2711, 6
  %v3970 = vsel %vm3292, %v3969, %v3968
  %v3971 = vrot.slane %v2712, 5
  %v3972 = vsel %vm3295, %v3971, %v3970
  %v3973 = vrot.slane %v2713, 4
  %v3974 = vsel %vm3298, %v3973, %v3972
  %v3975 = vrot.slane %v2714, 3
  %v3976 = vsel %vm3301, %v3975, %v3974
  %v3977 = vrot.slane %v2715, 2
  %v3978 = vsel %vm3304, %v3977, %v3976
  %v3979 = vrot.slane %v2716, 1
  %v3980 = vsel %vm3307, %v3979, %v3978
  %v3981 = vrot.slane %v2718, 7
  %v3982 = vsel %vm3289, %v3981, %v2717
  %v3983 = vrot.slane %v2719, 6
  %v3984 = vsel %vm3292, %v3983, %v3982
  %v3985 = vrot.slane %v2720, 5
  %v3986 = vsel %vm3295, %v3985, %v3984
  %v3987 = vrot.slane %v2721, 4
  %v3988 = vsel %vm3298, %v3987, %v3986
  %v3989 = vrot.slane %v2722, 3
  %v3990 = vsel %vm3301, %v3989, %v3988
  %v3991 = vrot.slane %v2723, 2
  %v3992 = vsel %vm3304, %v3991, %v3990
  %v3993 = vrot.slane %v2724, 1
  %v3994 = vsel %vm3307, %v3993, %v3992
  %v3995 = vrot.slane %v2726, 7
  %v3996 = vsel %vm3289, %v3995, %v2725
  %v3997 = vrot.slane %v2727, 6
  %v3998 = vsel %vm3292, %v3997, %v3996
  %v3999 = vrot.slane %v2728, 5
  %v4000 = vsel %vm3295, %v3999, %v3998
  %v4001 = vrot.slane %v2729, 4
  %v4002 = vsel %vm3298, %v4001, %v4000
  %v4003 = vrot.slane %v2730, 3
  %v4004 = vsel %vm3301, %v4003, %v4002
  %v4005 = vrot.slane %v2731, 2
  %v4006 = vsel %vm3304, %v4005, %v4004
  %v4007 = vrot.slane %v2732, 1
  %v4008 = vsel %vm3307, %v4007, %v4006
  %v4009 = vrot.slane %v2734, 7
  %v4010 = vsel %vm3289, %v4009, %v2733
  %v4011 = vrot.slane %v2735, 6
  %v4012 = vsel %vm3292, %v4011, %v4010
  %v4013 = vrot.slane %v2736, 5
  %v4014 = vsel %vm3295, %v4013, %v4012
  %v4015 = vrot.slane %v2737, 4
  %v4016 = vsel %vm3298, %v4015, %v4014
  %v4017 = vrot.slane %v2738, 3
  %v4018 = vsel %vm3301, %v4017, %v4016
  %v4019 = vrot.slane %v2739, 2
  %v4020 = vsel %vm3304, %v4019, %v4018
  %v4021 = vrot.slane %v2740, 1
  %v4022 = vsel %vm3307, %v4021, %v4020
  %v4023 = vrot.slane %v2742, 7
  %v4024 = vsel %vm3289, %v4023, %v2741
  %v4025 = vrot.slane %v2743, 6
  %v4026 = vsel %vm3292, %v4025, %v4024
  %v4027 = vrot.slane %v2744, 5
  %v4028 = vsel %vm3295, %v4027, %v4026
  %v4029 = vrot.slane %v2745, 4
  %v4030 = vsel %vm3298, %v4029, %v4028
  %v4031 = vrot.slane %v2746, 3
  %v4032 = vsel %vm3301, %v4031, %v4030
  %v4033 = vrot.slane %v2747, 2
  %v4034 = vsel %vm3304, %v4033, %v4032
  %v4035 = vrot.slane %v2748, 1
  %v4036 = vsel %vm3307, %v4035, %v4034
  %v4037 = vrot.slane %v2750, 7
  %v4038 = vsel %vm3289, %v4037, %v2749
  %v4039 = vrot.slane %v2751, 6
  %v4040 = vsel %vm3292, %v4039, %v4038
  %v4041 = vrot.slane %v2752, 5
  %v4042 = vsel %vm3295, %v4041, %v4040
  %v4043 = vrot.slane %v2753, 4
  %v4044 = vsel %vm3298, %v4043, %v4042
  %v4045 = vrot.slane %v2754, 3
  %v4046 = vsel %vm3301, %v4045, %v4044
  %v4047 = vrot.slane %v2755, 2
  %v4048 = vsel %vm3304, %v4047, %v4046
  %v4049 = vrot.slane %v2756, 1
  %v4050 = vsel %vm3307, %v4049, %v4048
  %v4051 = vrot.slane %v2758, 7
  %v4052 = vsel %vm3289, %v4051, %v2757
  %v4053 = vrot.slane %v2759, 6
  %v4054 = vsel %vm3292, %v4053, %v4052
  %v4055 = vrot.slane %v2760, 5
  %v4056 = vsel %vm3295, %v4055, %v4054
  %v4057 = vrot.slane %v2761, 4
  %v4058 = vsel %vm3298, %v4057, %v4056
  %v4059 = vrot.slane %v2762, 3
  %v4060 = vsel %vm3301, %v4059, %v4058
  %v4061 = vrot.slane %v2763, 2
  %v4062 = vsel %vm3304, %v4061, %v4060
  %v4063 = vrot.slane %v2764, 1
  %v4064 = vsel %vm3307, %v4063, %v4062
  %v4065 = vrot.slane %v2766, 7
  %v4066 = vsel %vm3289, %v4065, %v2765
  %v4067 = vrot.slane %v2767, 6
  %v4068 = vsel %vm3292, %v4067, %v4066
  %v4069 = vrot.slane %v2768, 5
  %v4070 = vsel %vm3295, %v4069, %v4068
  %v4071 = vrot.slane %v2769, 4
  %v4072 = vsel %vm3298, %v4071, %v4070
  %v4073 = vrot.slane %v2770, 3
  %v4074 = vsel %vm3301, %v4073, %v4072
  %v4075 = vrot.slane %v2771, 2
  %v4076 = vsel %vm3304, %v4075, %v4074
  %v4077 = vrot.slane %v2772, 1
  %v4078 = vsel %vm3307, %v4077, %v4076
  %v4079 = vrot.slane %v2774, 7
  %v4080 = vsel %vm3289, %v4079, %v2773
  %v4081 = vrot.slane %v2775, 6
  %v4082 = vsel %vm3292, %v4081, %v4080
  %v4083 = vrot.slane %v2776, 5
  %v4084 = vsel %vm3295, %v4083, %v4082
  %v4085 = vrot.slane %v2777, 4
  %v4086 = vsel %vm3298, %v4085, %v4084
  %v4087 = vrot.slane %v2778, 3
  %v4088 = vsel %vm3301, %v4087, %v4086
  %v4089 = vrot.slane %v2779, 2
  %v4090 = vsel %vm3304, %v4089, %v4088
  %v4091 = vrot.slane %v2780, 1
  %v4092 = vsel %vm3307, %v4091, %v4090
  %v4093 = vrot.slane %v2782, 7
  %v4094 = vsel %vm3289, %v4093, %v2781
  %v4095 = vrot.slane %v2783, 6
  %v4096 = vsel %vm3292, %v4095, %v4094
  %v4097 = vrot.slane %v2784, 5
  %v4098 = vsel %vm3295, %v4097, %v4096
  %v4099 = vrot.slane %v2785, 4
  %v4100 = vsel %vm3298, %v4099, %v4098
  %v4101 = vrot.slane %v2786, 3
  %v4102 = vsel %vm3301, %v4101, %v4100
  %v4103 = vrot.slane %v2787, 2
  %v4104 = vsel %vm3304, %v4103, %v4102
  %v4105 = vrot.slane %v2788, 1
  %v4106 = vsel %vm3307, %v4105, %v4104
  %v4107 = vrot.slane %v2790, 7
  %v4108 = vsel %vm3289, %v4107, %v2789
  %v4109 = vrot.slane %v2791, 6
  %v4110 = vsel %vm3292, %v4109, %v4108
  %v4111 = vrot.slane %v2792, 5
  %v4112 = vsel %vm3295, %v4111, %v4110
  %v4113 = vrot.slane %v2793, 4
  %v4114 = vsel %vm3298, %v4113, %v4112
  %v4115 = vrot.slane %v2794, 3
  %v4116 = vsel %vm3301, %v4115, %v4114
  %v4117 = vrot.slane %v2795, 2
  %v4118 = vsel %vm3304, %v4117, %v4116
  %v4119 = vrot.slane %v2796, 1
  %v4120 = vsel %vm3307, %v4119, %v4118
  %v4121 = vrot.slane %v2798, 7
  %v4122 = vsel %vm3289, %v4121, %v2797
  %v4123 = vrot.slane %v2799, 6
  %v4124 = vsel %vm3292, %v4123, %v4122
  %v4125 = vrot.slane %v2800, 5
  %v4126 = vsel %vm3295, %v4125, %v4124
  %v4127 = vrot.slane %v2801, 4
  %v4128 = vsel %vm3298, %v4127, %v4126
  %v4129 = vrot.slane %v2802, 3
  %v4130 = vsel %vm3301, %v4129, %v4128
  %v4131 = vrot.slane %v2803, 2
  %v4132 = vsel %vm3304, %v4131, %v4130
  %v4133 = vrot.slane %v2804, 1
  %v4134 = vsel %vm3307, %v4133, %v4132
  %4195 = vxpose.xlu0.b32.start [1/16] %v3308, 128
  %4196 = vxpose.xlu0.b32.cont [2/16] %v3322, 128
  %4197 = vxpose.xlu0.b32.cont [3/16] %v3336, 128
  %4198 = vxpose.xlu0.b32.cont [4/16] %v3350, 128
  %4199 = vxpose.xlu0.b32.cont [5/16] %v3364, 128
  %4200 = vxpose.xlu0.b32.cont [6/16] %v3378, 128
  %4201 = vxpose.xlu0.b32.cont [7/16] %v3392, 128
  %4202 = vxpose.xlu0.b32.cont [8/16] %v3406, 128
  %4203 = vxpose.xlu0.b32.cont [9/16] %v3420, 128
  %4204 = vxpose.xlu0.b32.cont [10/16] %v3434, 128
  %4205 = vxpose.xlu0.b32.cont [11/16] %v3448, 128
  %4206 = vxpose.xlu0.b32.cont [12/16] %v3462, 128
  %4207 = vxpose.xlu0.b32.cont [13/16] %v3476, 128
  %4208 = vxpose.xlu0.b32.cont [14/16] %v3490, 128
  %4209 = vxpose.xlu0.b32.cont [15/16] %v3504, 128
  %4210 = vxpose.xlu0.b32.end [16/16] %v3518, 128
  %v4211 = vpop.trf.xlu0
  %v4212 = vpop.trf.xlu0
  %v4213 = vpop.trf.xlu0
  %v4214 = vpop.trf.xlu0
  %v4215 = vpop.trf.xlu0
  %v4216 = vpop.trf.xlu0
  %v4217 = vpop.trf.xlu0
  %v4218 = vpop.trf.xlu0
  %v4219 = vpop.trf.xlu0
  %v4220 = vpop.trf.xlu0
  %v4221 = vpop.trf.xlu0
  %v4222 = vpop.trf.xlu0
  %v4223 = vpop.trf.xlu0
  %v4224 = vpop.trf.xlu0
  %v4225 = vpop.trf.xlu0
  %v4226 = vpop.trf.xlu0
  %4227 = vxpose.xlu0.b32.start [1/16] %v3532, 128
  %4228 = vxpose.xlu0.b32.cont [2/16] %v3546, 128
  %4229 = vxpose.xlu0.b32.cont [3/16] %v3560, 128
  %4230 = vxpose.xlu0.b32.cont [4/16] %v3574, 128
  %4231 = vxpose.xlu0.b32.cont [5/16] %v3588, 128
  %4232 = vxpose.xlu0.b32.cont [6/16] %v3602, 128
  %4233 = vxpose.xlu0.b32.cont [7/16] %v3616, 128
  %4234 = vxpose.xlu0.b32.cont [8/16] %v3630, 128
  %4235 = vxpose.xlu0.b32.cont [9/16] %v3644, 128
  %4236 = vxpose.xlu0.b32.cont [10/16] %v3658, 128
  %4237 = vxpose.xlu0.b32.cont [11/16] %v3672, 128
  %4238 = vxpose.xlu0.b32.cont [12/16] %v3686, 128
  %4239 = vxpose.xlu0.b32.cont [13/16] %v3700, 128
  %4240 = vxpose.xlu0.b32.cont [14/16] %v3714, 128
  %4241 = vxpose.xlu0.b32.cont [15/16] %v3728, 128
  %4242 = vxpose.xlu0.b32.end [16/16] %v3742, 128
  %v4243 = vpop.trf.xlu0
  %v4244 = vpop.trf.xlu0
  %v4245 = vpop.trf.xlu0
  %v4246 = vpop.trf.xlu0
  %v4247 = vpop.trf.xlu0
  %v4248 = vpop.trf.xlu0
  %v4249 = vpop.trf.xlu0
  %v4250 = vpop.trf.xlu0
  %v4251 = vpop.trf.xlu0
  %v4252 = vpop.trf.xlu0
  %v4253 = vpop.trf.xlu0
  %v4254 = vpop.trf.xlu0
  %v4255 = vpop.trf.xlu0
  %v4256 = vpop.trf.xlu0
  %v4257 = vpop.trf.xlu0
  %v4258 = vpop.trf.xlu0
  %4259 = vxpose.xlu0.b32.start [1/16] %v3756, 128
  %4260 = vxpose.xlu0.b32.cont [2/16] %v3770, 128
  %4261 = vxpose.xlu0.b32.cont [3/16] %v3784, 128
  %4262 = vxpose.xlu0.b32.cont [4/16] %v3798, 128
  %4263 = vxpose.xlu0.b32.cont [5/16] %v3812, 128
  %4264 = vxpose.xlu0.b32.cont [6/16] %v3826, 128
  %4265 = vxpose.xlu0.b32.cont [7/16] %v3840, 128
  %4266 = vxpose.xlu0.b32.cont [8/16] %v3854, 128
  %4267 = vxpose.xlu0.b32.cont [9/16] %v3868, 128
  %4268 = vxpose.xlu0.b32.cont [10/16] %v3882, 128
  %4269 = vxpose.xlu0.b32.cont [11/16] %v3896, 128
  %4270 = vxpose.xlu0.b32.cont [12/16] %v3910, 128
  %4271 = vxpose.xlu0.b32.cont [13/16] %v3924, 128
  %4272 = vxpose.xlu0.b32.cont [14/16] %v3938, 128
  %4273 = vxpose.xlu0.b32.cont [15/16] %v3952, 128
  %4274 = vxpose.xlu0.b32.end [16/16] %v3966, 128
  %v4275 = vpop.trf.xlu0
  %v4276 = vpop.trf.xlu0
  %v4277 = vpop.trf.xlu0
  %v4278 = vpop.trf.xlu0
  %v4279 = vpop.trf.xlu0
  %v4280 = vpop.trf.xlu0
  %v4281 = vpop.trf.xlu0
  %v4282 = vpop.trf.xlu0
  %v4283 = vpop.trf.xlu0
  %v4284 = vpop.trf.xlu0
  %v4285 = vpop.trf.xlu0
  %v4286 = vpop.trf.xlu0
  %v4287 = vpop.trf.xlu0
  %v4288 = vpop.trf.xlu0
  %v4289 = vpop.trf.xlu0
  %v4290 = vpop.trf.xlu0
  %4291 = vxpose.xlu0.b32.start [1/16] %v3980, 128
  %4292 = vxpose.xlu0.b32.cont [2/16] %v3994, 128
  %4293 = vxpose.xlu0.b32.cont [3/16] %v4008, 128
  %4294 = vxpose.xlu0.b32.cont [4/16] %v4022, 128
  %4295 = vxpose.xlu0.b32.cont [5/16] %v4036, 128
  %4296 = vxpose.xlu0.b32.cont [6/16] %v4050, 128
  %4297 = vxpose.xlu0.b32.cont [7/16] %v4064, 128
  %4298 = vxpose.xlu0.b32.cont [8/16] %v4078, 128
  %4299 = vxpose.xlu0.b32.cont [9/16] %v4092, 128
  %4300 = vxpose.xlu0.b32.cont [10/16] %v4106, 128
  %4301 = vxpose.xlu0.b32.cont [11/16] %v4120, 128
  %4302 = vxpose.xlu0.b32.cont [12/16] %v4134, 128
  %4303 = vxpose.xlu0.b32.cont [13/16] 0.0, 128
  %4304 = vxpose.xlu0.b32.cont [14/16] 0.0, 128
  %4305 = vxpose.xlu0.b32.cont [15/16] 0.0, 128
  %4306 = vxpose.xlu0.b32.end [16/16] 0.0, 128
  %v4307 = vpop.trf.xlu0
  %v4308 = vpop.trf.xlu0
  %v4309 = vpop.trf.xlu0
  %v4310 = vpop.trf.xlu0
  %v4311 = vpop.trf.xlu0
  %v4312 = vpop.trf.xlu0
  %v4313 = vpop.trf.xlu0
  %v4314 = vpop.trf.xlu0
  %v4315 = vpop.trf.xlu0
  %v4316 = vpop.trf.xlu0
  %v4317 = vpop.trf.xlu0
  %v4318 = vpop.trf.xlu0
  %v4319 = vpop.trf.xlu0
  %v4320 = vpop.trf.xlu0
  %v4321 = vpop.trf.xlu0
  %v4322 = vpop.trf.xlu0
  %vm4323 = vcmask 785408
  %v4325 = vsel %vm4323, %v4307, 0
  %4327 = vmatpush.msra.mxu0 %v2279
  %4328 = vmatpush.msra.mxu0 %v2278
  %4329 = vmatpush.msra.mxu0 %v2277
  %4330 = vmatpush.msra.mxu0 %v2276
  %4331 = vmatpush.msra.mxu0 %v2275
  %4332 = vmatpush.msra.mxu0 %v2274
  %4333 = vmatpush.msra.mxu0 %v2273
  %4334 = vmatpush.msra.mxu0 %v2272
  %4335 = vmatpush.msra.mxu0 %v2271
  %4336 = vmatpush.msra.mxu0 %v2270
  %4337 = vmatpush.msra.mxu0 %v2269
  %4338 = vmatpush.msra.mxu0 %v2268
  %4339 = vmatpush.msra.mxu0 %v2267
  %4340 = vmatpush.msra.mxu0 %v2266
  %4341 = vmatpush.msra.mxu0 %v2265
  %4342 = vmatpush.msra.mxu0 %v2264
  %4343 = vmatmul.f32.gmra.mxu0 %v4211
  %v4344 = vpop.f32.mrf.mxu0
  %v4345 = vadd.f32 %v2806, %v4344
  %4346 = vdwg.mxu0
  %4347 = vmatpush.msra.mxu0 %v2295
  %4348 = vmatpush.msra.mxu0 %v2294
  %4349 = vmatpush.msra.mxu0 %v2293
  %4350 = vmatpush.msra.mxu0 %v2292
  %4351 = vmatpush.msra.mxu0 %v2291
  %4352 = vmatpush.msra.mxu0 %v2290
  %4353 = vmatpush.msra.mxu0 %v2289
  %4354 = vmatpush.msra.mxu0 %v2288
  %4355 = vmatpush.msra.mxu0 %v2287
  %4356 = vmatpush.msra.mxu0 %v2286
  %4357 = vmatpush.msra.mxu0 %v2285
  %4358 = vmatpush.msra.mxu0 %v2284
  %4359 = vmatpush.msra.mxu0 %v2283
  %4360 = vmatpush.msra.mxu0 %v2282
  %4361 = vmatpush.msra.mxu0 %v2281
  %4362 = vmatpush.msra.mxu0 %v2280
  %4363 = vmatmul.f32.gmra.mxu0 %v4243
  %v4364 = vpop.f32.mrf.mxu0
  %v4365 = vadd.f32 %v4345, %v4364
  %4366 = vdwg.mxu0
  %4367 = vmatpush.msra.mxu0 %v2311
  %4368 = vmatpush.msra.mxu0 %v2310
  %4369 = vmatpush.msra.mxu0 %v2309
  %4370 = vmatpush.msra.mxu0 %v2308
  %4371 = vmatpush.msra.mxu0 %v2307
  %4372 = vmatpush.msra.mxu0 %v2306
  %4373 = vmatpush.msra.mxu0 %v2305
  %4374 = vmatpush.msra.mxu0 %v2304
  %4375 = vmatpush.msra.mxu0 %v2303
  %4376 = vmatpush.msra.mxu0 %v2302
  %4377 = vmatpush.msra.mxu0 %v2301
  %4378 = vmatpush.msra.mxu0 %v2300
  %4379 = vmatpush.msra.mxu0 %v2299
  %4380 = vmatpush.msra.mxu0 %v2298
  %4381 = vmatpush.msra.mxu0 %v2297
  %4382 = vmatpush.msra.mxu0 %v2296
  %4383 = vmatmul.f32.gmra.mxu0 %v4275
  %v4384 = vpop.f32.mrf.mxu0
  %v4385 = vadd.f32 %v4365, %v4384
  %4386 = vdwg.mxu0
  %4387 = vmatpush.msra.mxu0 0.0
  %4388 = vmatpush.msra.mxu0 0.0
  %4389 = vmatpush.msra.mxu0 0.0
  %4390 = vmatpush.msra.mxu0 0.0
  %4391 = vmatpush.msra.mxu0 %v2323
  %4392 = vmatpush.msra.mxu0 %v2322
  %4393 = vmatpush.msra.mxu0 %v2321
  %4394 = vmatpush.msra.mxu0 %v2320
  %4395 = vmatpush.msra.mxu0 %v2319
  %4396 = vmatpush.msra.mxu0 %v2318
  %4397 = vmatpush.msra.mxu0 %v2317
  %4398 = vmatpush.msra.mxu0 %v2316
  %4399 = vmatpush.msra.mxu0 %v2315
  %4400 = vmatpush.msra.mxu0 %v2314
  %4401 = vmatpush.msra.mxu0 %v2313
  %4402 = vmatpush.msra.mxu0 %v2312
  %4403 = vmatmul.f32.gmra.mxu0 %v4325
  %v4404 = vpop.f32.mrf.mxu0
  %v4405 = vadd.f32 %v4385, %v4404
  %4406 = vdwg.mxu0
  %4407 = vst [vmem:[%s7] sm:$0xff] %v4405
  %v4408 = vld [vmem:[#allocation3 + $0x1] sm:$0x1]
  %v4409 = vld [vmem:[#allocation3 + $0x3] sm:$0x1]
  %v4410 = vld [vmem:[#allocation3 + $0x5] sm:$0x1]
  %v4411 = vld [vmem:[#allocation3 + $0x7] sm:$0x1]
  %v4412 = vld [vmem:[#allocation3 + $0x9] sm:$0x1]
  %v4413 = vld [vmem:[#allocation3 + $0xb] sm:$0x1]
  %v4414 = vld [vmem:[#allocation3 + $0xd] sm:$0x1]
  %v4415 = vld [vmem:[#allocation3 + $0xf] sm:$0x1]
  %v4416 = vld [vmem:[#allocation3 + $0x11] sm:$0x1]
  %v4417 = vld [vmem:[#allocation3 + $0x13] sm:$0x1]
  %v4418 = vld [vmem:[#allocation3 + $0x15] sm:$0x1]
  %v4419 = vld [vmem:[#allocation3 + $0x17] sm:$0x1]
  %v4420 = vld [vmem:[#allocation3 + $0x19] sm:$0x1]
  %v4421 = vld [vmem:[#allocation3 + $0x1b] sm:$0x1]
  %v4422 = vld [vmem:[#allocation3 + $0x1d] sm:$0x1]
  %v4423 = vld [vmem:[#allocation3 + $0x1f] sm:$0x1]
  %v4424 = vld [vmem:[#allocation3 + $0x21] sm:$0x1]
  %v4425 = vld [vmem:[#allocation3 + $0x23] sm:$0x1]
  %v4426 = vld [vmem:[#allocation3 + $0x25] sm:$0x1]
  %v4427 = vld [vmem:[#allocation3 + $0x27] sm:$0x1]
  %v4428 = vld [vmem:[#allocation3 + $0x29] sm:$0x1]
  %v4429 = vld [vmem:[#allocation3 + $0x2b] sm:$0x1]
  %v4430 = vld [vmem:[#allocation3 + $0x2d] sm:$0x1]
  %v4431 = vld [vmem:[#allocation3 + $0x2f] sm:$0x1]
  %v4432 = vld [vmem:[#allocation3 + $0x31] sm:$0x1]
  %v4433 = vld [vmem:[#allocation3 + $0x33] sm:$0x1]
  %v4434 = vld [vmem:[#allocation3 + $0x35] sm:$0x1]
  %v4435 = vld [vmem:[#allocation3 + $0x37] sm:$0x1]
  %v4436 = vld [vmem:[#allocation3 + $0x39] sm:$0x1]
  %v4437 = vld [vmem:[#allocation3 + $0x3b] sm:$0x1]
  %v4438 = vld [vmem:[#allocation3 + $0x3d] sm:$0x1]
  %v4439 = vld [vmem:[#allocation3 + $0x3f] sm:$0x1]
  %v4440 = vld [vmem:[#allocation3 + $0x41] sm:$0x1]
  %v4441 = vld [vmem:[#allocation3 + $0x43] sm:$0x1]
  %v4442 = vld [vmem:[#allocation3 + $0x45] sm:$0x1]
  %v4443 = vld [vmem:[#allocation3 + $0x47] sm:$0x1]
  %v4444 = vld [vmem:[#allocation3 + $0x49] sm:$0x1]
  %v4445 = vld [vmem:[#allocation3 + $0x4b] sm:$0x1]
  %v4446 = vld [vmem:[#allocation3 + $0x4d] sm:$0x1]
  %v4447 = vld [vmem:[#allocation3 + $0x4f] sm:$0x1]
  %v4448 = vld [vmem:[#allocation3 + $0x51] sm:$0x1]
  %v4449 = vld [vmem:[#allocation3 + $0x53] sm:$0x1]
  %v4450 = vld [vmem:[#allocation3 + $0x55] sm:$0x1]
  %v4451 = vld [vmem:[#allocation3 + $0x57] sm:$0x1]
  %v4452 = vld [vmem:[#allocation3 + $0x59] sm:$0x1]
  %v4453 = vld [vmem:[#allocation3 + $0x5b] sm:$0x1]
  %v4454 = vld [vmem:[#allocation3 + $0x5d] sm:$0x1]
  %v4455 = vld [vmem:[#allocation3 + $0x5f] sm:$0x1]
  %v4456 = vld [vmem:[#allocation3 + $0x61] sm:$0x1]
  %v4457 = vld [vmem:[#allocation3 + $0x63] sm:$0x1]
  %v4458 = vld [vmem:[#allocation3 + $0x65] sm:$0x1]
  %v4459 = vld [vmem:[#allocation3 + $0x67] sm:$0x1]
  %v4460 = vld [vmem:[#allocation3 + $0x69] sm:$0x1]
  %v4461 = vld [vmem:[#allocation3 + $0x6b] sm:$0x1]
  %v4462 = vld [vmem:[#allocation3 + $0x6d] sm:$0x1]
  %v4463 = vld [vmem:[#allocation3 + $0x6f] sm:$0x1]
  %v4464 = vld [vmem:[#allocation3 + $0x71] sm:$0x1]
  %v4465 = vld [vmem:[#allocation3 + $0x73] sm:$0x1]
  %v4466 = vld [vmem:[#allocation3 + $0x75] sm:$0x1]
  %v4467 = vld [vmem:[#allocation3 + $0x77] sm:$0x1]
  %v4468 = vld [vmem:[#allocation3 + $0x79] sm:$0x1]
  %v4469 = vld [vmem:[#allocation3 + $0x7b] sm:$0x1]
  %v4470 = vld [vmem:[#allocation3 + $0x7d] sm:$0x1]
  %v4471 = vld [vmem:[#allocation3 + $0x7f] sm:$0x1]
  %v4472 = vld [vmem:[#allocation3 + $0x81] sm:$0x1]
  %v4473 = vld [vmem:[#allocation3 + $0x83] sm:$0x1]
  %v4474 = vld [vmem:[#allocation3 + $0x85] sm:$0x1]
  %v4475 = vld [vmem:[#allocation3 + $0x87] sm:$0x1]
  %v4476 = vld [vmem:[#allocation3 + $0x89] sm:$0x1]
  %v4477 = vld [vmem:[#allocation3 + $0x8b] sm:$0x1]
  %v4478 = vld [vmem:[#allocation3 + $0x8d] sm:$0x1]
  %v4479 = vld [vmem:[#allocation3 + $0x8f] sm:$0x1]
  %v4480 = vld [vmem:[#allocation3 + $0x91] sm:$0x1]
  %v4481 = vld [vmem:[#allocation3 + $0x93] sm:$0x1]
  %v4482 = vld [vmem:[#allocation3 + $0x95] sm:$0x1]
  %v4483 = vld [vmem:[#allocation3 + $0x97] sm:$0x1]
  %v4484 = vld [vmem:[#allocation3 + $0x99] sm:$0x1]
  %v4485 = vld [vmem:[#allocation3 + $0x9b] sm:$0x1]
  %v4486 = vld [vmem:[#allocation3 + $0x9d] sm:$0x1]
  %v4487 = vld [vmem:[#allocation3 + $0x9f] sm:$0x1]
  %v4488 = vld [vmem:[#allocation3 + $0xa1] sm:$0x1]
  %v4489 = vld [vmem:[#allocation3 + $0xa3] sm:$0x1]
  %v4490 = vld [vmem:[#allocation3 + $0xa5] sm:$0x1]
  %v4491 = vld [vmem:[#allocation3 + $0xa7] sm:$0x1]
  %v4492 = vld [vmem:[#allocation3 + $0xa9] sm:$0x1]
  %v4493 = vld [vmem:[#allocation3 + $0xab] sm:$0x1]
  %v4494 = vld [vmem:[#allocation3 + $0xad] sm:$0x1]
  %v4495 = vld [vmem:[#allocation3 + $0xaf] sm:$0x1]
  %v4496 = vld [vmem:[#allocation3 + $0xb1] sm:$0x1]
  %v4497 = vld [vmem:[#allocation3 + $0xb3] sm:$0x1]
  %v4498 = vld [vmem:[#allocation3 + $0xb5] sm:$0x1]
  %v4499 = vld [vmem:[#allocation3 + $0xb7] sm:$0x1]
  %v4500 = vld [vmem:[#allocation3 + $0xb9] sm:$0x1]
  %v4501 = vld [vmem:[#allocation3 + $0xbb] sm:$0x1]
  %v4502 = vld [vmem:[#allocation3 + $0xbd] sm:$0x1]
  %v4503 = vld [vmem:[#allocation3 + $0xbf] sm:$0x1]
  %v4504 = vld [vmem:[#allocation3 + $0xc1] sm:$0x1]
  %v4505 = vld [vmem:[#allocation3 + $0xc3] sm:$0x1]
  %v4506 = vld [vmem:[#allocation3 + $0xc5] sm:$0x1]
  %v4507 = vld [vmem:[#allocation3 + $0xc7] sm:$0x1]
  %v4508 = vld [vmem:[#allocation3 + $0xc9] sm:$0x1]
  %v4509 = vld [vmem:[#allocation3 + $0xcb] sm:$0x1]
  %v4510 = vld [vmem:[#allocation3 + $0xcd] sm:$0x1]
  %v4511 = vld [vmem:[#allocation3 + $0xcf] sm:$0x1]
  %v4512 = vld [vmem:[#allocation3 + $0xd1] sm:$0x1]
  %v4513 = vld [vmem:[#allocation3 + $0xd3] sm:$0x1]
  %v4514 = vld [vmem:[#allocation3 + $0xd5] sm:$0x1]
  %v4515 = vld [vmem:[#allocation3 + $0xd7] sm:$0x1]
  %v4516 = vld [vmem:[#allocation3 + $0xd9] sm:$0x1]
  %v4517 = vld [vmem:[#allocation3 + $0xdb] sm:$0x1]
  %v4518 = vld [vmem:[#allocation3 + $0xdd] sm:$0x1]
  %v4519 = vld [vmem:[#allocation3 + $0xdf] sm:$0x1]
  %v4520 = vld [vmem:[#allocation3 + $0xe1] sm:$0x1]
  %v4521 = vld [vmem:[#allocation3 + $0xe3] sm:$0x1]
  %v4522 = vld [vmem:[#allocation3 + $0xe5] sm:$0x1]
  %v4523 = vld [vmem:[#allocation3 + $0xe7] sm:$0x1]
  %v4524 = vld [vmem:[#allocation3 + $0xe9] sm:$0x1]
  %v4525 = vld [vmem:[#allocation3 + $0xeb] sm:$0x1]
  %v4526 = vld [vmem:[#allocation3 + $0xed] sm:$0x1]
  %v4527 = vld [vmem:[#allocation3 + $0xef] sm:$0x1]
  %v4528 = vld [vmem:[#allocation3 + $0xf1] sm:$0x1]
  %v4529 = vld [vmem:[#allocation3 + $0xf3] sm:$0x1]
  %v4530 = vld [vmem:[#allocation3 + $0xf5] sm:$0x1]
  %v4531 = vld [vmem:[#allocation3 + $0xf7] sm:$0x1]
  %v4532 = vld [vmem:[#allocation3 + $0xf9] sm:$0x1]
  %v4533 = vld [vmem:[#allocation3 + $0xfb] sm:$0x1]
  %v4534 = vld [vmem:[#allocation3 + $0xfd] sm:$0x1]
  %v4535 = vld [vmem:[#allocation3 + $0xff] sm:$0x1]
  %v4536 = vld [vmem:[#allocation3 + $0x101] sm:$0x1]
  %v4537 = vld [vmem:[#allocation3 + $0x103] sm:$0x1]
  %v4538 = vld [vmem:[#allocation3 + $0x105] sm:$0x1]
  %v4539 = vld [vmem:[#allocation3 + $0x107] sm:$0x1]
  %v4540 = vld [vmem:[#allocation3 + $0x109] sm:$0x1]
  %v4541 = vld [vmem:[#allocation3 + $0x10b] sm:$0x1]
  %v4542 = vld [vmem:[#allocation3 + $0x10d] sm:$0x1]
  %v4543 = vld [vmem:[#allocation3 + $0x10f] sm:$0x1]
  %v4544 = vld [vmem:[#allocation3 + $0x111] sm:$0x1]
  %v4545 = vld [vmem:[#allocation3 + $0x113] sm:$0x1]
  %v4546 = vld [vmem:[#allocation3 + $0x115] sm:$0x1]
  %v4547 = vld [vmem:[#allocation3 + $0x117] sm:$0x1]
  %v4548 = vld [vmem:[#allocation3 + $0x119] sm:$0x1]
  %v4549 = vld [vmem:[#allocation3 + $0x11b] sm:$0x1]
  %v4550 = vld [vmem:[#allocation3 + $0x11d] sm:$0x1]
  %v4551 = vld [vmem:[#allocation3 + $0x11f] sm:$0x1]
  %v4552 = vld [vmem:[#allocation3 + $0x121] sm:$0x1]
  %v4553 = vld [vmem:[#allocation3 + $0x123] sm:$0x1]
  %v4554 = vld [vmem:[#allocation3 + $0x125] sm:$0x1]
  %v4555 = vld [vmem:[#allocation3 + $0x127] sm:$0x1]
  %v4556 = vld [vmem:[#allocation3 + $0x129] sm:$0x1]
  %v4557 = vld [vmem:[#allocation3 + $0x12b] sm:$0x1]
  %v4558 = vld [vmem:[#allocation3 + $0x12d] sm:$0x1]
  %v4559 = vld [vmem:[#allocation3 + $0x12f] sm:$0x1]
  %v4560 = vld [vmem:[#allocation3 + $0x131] sm:$0x1]
  %v4561 = vld [vmem:[#allocation3 + $0x133] sm:$0x1]
  %v4562 = vld [vmem:[#allocation3 + $0x135] sm:$0x1]
  %v4563 = vld [vmem:[#allocation3 + $0x137] sm:$0x1]
  %v4564 = vld [vmem:[#allocation3 + $0x139] sm:$0x1]
  %v4565 = vld [vmem:[#allocation3 + $0x13b] sm:$0x1]
  %v4566 = vld [vmem:[#allocation3 + $0x13d] sm:$0x1]
  %v4567 = vld [vmem:[#allocation3 + $0x13f] sm:$0x1]
  %v4568 = vld [vmem:[#allocation3 + $0x141] sm:$0x1]
  %v4569 = vld [vmem:[#allocation3 + $0x143] sm:$0x1]
  %v4570 = vld [vmem:[#allocation3 + $0x145] sm:$0x1]
  %v4571 = vld [vmem:[#allocation3 + $0x147] sm:$0x1]
  %v4572 = vld [vmem:[#allocation3 + $0x149] sm:$0x1]
  %v4573 = vld [vmem:[#allocation3 + $0x14b] sm:$0x1]
  %v4574 = vld [vmem:[#allocation3 + $0x14d] sm:$0x1]
  %v4575 = vld [vmem:[#allocation3 + $0x14f] sm:$0x1]
  %v4576 = vld [vmem:[#allocation3 + $0x151] sm:$0x1]
  %v4577 = vld [vmem:[#allocation3 + $0x153] sm:$0x1]
  %v4578 = vld [vmem:[#allocation3 + $0x155] sm:$0x1]
  %v4579 = vld [vmem:[#allocation3 + $0x157] sm:$0x1]
  %v4580 = vld [vmem:[#allocation3 + $0x159] sm:$0x1]
  %v4581 = vld [vmem:[#allocation3 + $0x15b] sm:$0x1]
  %v4582 = vld [vmem:[#allocation3 + $0x15d] sm:$0x1]
  %v4583 = vld [vmem:[#allocation3 + $0x15f] sm:$0x1]
  %v4584 = vld [vmem:[#allocation3 + $0x161] sm:$0x1]
  %v4585 = vld [vmem:[#allocation3 + $0x163] sm:$0x1]
  %v4586 = vld [vmem:[#allocation3 + $0x165] sm:$0x1]
  %v4587 = vld [vmem:[#allocation3 + $0x167] sm:$0x1]
  %v4588 = vld [vmem:[#allocation3 + $0x169] sm:$0x1]
  %v4589 = vld [vmem:[#allocation3 + $0x16b] sm:$0x1]
  %v4590 = vld [vmem:[#allocation3 + $0x16d] sm:$0x1]
  %v4591 = vld [vmem:[#allocation3 + $0x16f] sm:$0x1]
  %v4592 = vld [vmem:[#allocation3 + $0x171] sm:$0x1]
  %v4593 = vld [vmem:[#allocation3 + $0x173] sm:$0x1]
  %v4594 = vld [vmem:[#allocation3 + $0x175] sm:$0x1]
  %v4595 = vld [vmem:[#allocation3 + $0x177] sm:$0x1]
  %v4596 = vld [vmem:[#allocation3 + $0x179] sm:$0x1]
  %v4597 = vld [vmem:[#allocation3 + $0x17b] sm:$0x1]
  %v4598 = vld [vmem:[#allocation3 + $0x17d] sm:$0x1]
  %v4599 = vld [vmem:[#allocation3 + $0x17f] sm:$0x1]
  %v4600 = vld [vmem:[#allocation3 + $0x181] sm:$0x1]
  %v4601 = vld [vmem:[#allocation3 + $0x183] sm:$0x1]
  %v4602 = vld [vmem:[#allocation3 + $0x185] sm:$0x1]
  %v4603 = vld [vmem:[#allocation3 + $0x187] sm:$0x1]
  %v4604 = vld [vmem:[#allocation3 + $0x189] sm:$0x1]
  %v4605 = vld [vmem:[#allocation3 + $0x18b] sm:$0x1]
  %v4606 = vld [vmem:[#allocation3 + $0x18d] sm:$0x1]
  %v4607 = vld [vmem:[#allocation3 + $0x18f] sm:$0x1]
  %v4608 = vld [vmem:[#allocation3 + $0x191] sm:$0x1]
  %v4609 = vld [vmem:[#allocation3 + $0x193] sm:$0x1]
  %v4610 = vld [vmem:[#allocation3 + $0x195] sm:$0x1]
  %v4611 = vld [vmem:[#allocation3 + $0x197] sm:$0x1]
  %v4612 = vld [vmem:[#allocation3 + $0x199] sm:$0x1]
  %v4613 = vld [vmem:[#allocation3 + $0x19b] sm:$0x1]
  %v4614 = vld [vmem:[#allocation3 + $0x19d] sm:$0x1]
  %v4615 = vld [vmem:[#allocation3 + $0x19f] sm:$0x1]
  %v4616 = vld [vmem:[#allocation3 + $0x1a1] sm:$0x1]
  %v4617 = vld [vmem:[#allocation3 + $0x1a3] sm:$0x1]
  %v4618 = vld [vmem:[#allocation3 + $0x1a5] sm:$0x1]
  %v4619 = vld [vmem:[#allocation3 + $0x1a7] sm:$0x1]
  %v4620 = vld [vmem:[#allocation3 + $0x1a9] sm:$0x1]
  %v4621 = vld [vmem:[#allocation3 + $0x1ab] sm:$0x1]
  %v4622 = vld [vmem:[#allocation3 + $0x1ad] sm:$0x1]
  %v4623 = vld [vmem:[#allocation3 + $0x1af] sm:$0x1]
  %v4624 = vld [vmem:[#allocation3 + $0x1b1] sm:$0x1]
  %v4625 = vld [vmem:[#allocation3 + $0x1b3] sm:$0x1]
  %v4626 = vld [vmem:[#allocation3 + $0x1b5] sm:$0x1]
  %v4627 = vld [vmem:[#allocation3 + $0x1b7] sm:$0x1]
  %v4628 = vld [vmem:[#allocation3 + $0x1b9] sm:$0x1]
  %v4629 = vld [vmem:[#allocation3 + $0x1bb] sm:$0x1]
  %v4630 = vld [vmem:[#allocation3 + $0x1bd] sm:$0x1]
  %v4631 = vld [vmem:[#allocation3 + $0x1bf] sm:$0x1]
  %v4632 = vld [vmem:[#allocation3 + $0x1c1] sm:$0x1]
  %v4633 = vld [vmem:[#allocation3 + $0x1c3] sm:$0x1]
  %v4634 = vld [vmem:[#allocation3 + $0x1c5] sm:$0x1]
  %v4635 = vld [vmem:[#allocation3 + $0x1c7] sm:$0x1]
  %v4636 = vld [vmem:[#allocation3 + $0x1c9] sm:$0x1]
  %v4637 = vld [vmem:[#allocation3 + $0x1cb] sm:$0x1]
  %v4638 = vld [vmem:[#allocation3 + $0x1cd] sm:$0x1]
  %v4639 = vld [vmem:[#allocation3 + $0x1cf] sm:$0x1]
  %v4640 = vld [vmem:[#allocation3 + $0x1d1] sm:$0x1]
  %v4641 = vld [vmem:[#allocation3 + $0x1d3] sm:$0x1]
  %v4642 = vld [vmem:[#allocation3 + $0x1d5] sm:$0x1]
  %v4643 = vld [vmem:[#allocation3 + $0x1d7] sm:$0x1]
  %v4644 = vld [vmem:[#allocation3 + $0x1d9] sm:$0x1]
  %v4645 = vld [vmem:[#allocation3 + $0x1db] sm:$0x1]
  %v4646 = vld [vmem:[#allocation3 + $0x1dd] sm:$0x1]
  %v4647 = vld [vmem:[#allocation3 + $0x1df] sm:$0x1]
  %v4648 = vld [vmem:[#allocation3 + $0x1e1] sm:$0x1]
  %v4649 = vld [vmem:[#allocation3 + $0x1e3] sm:$0x1]
  %v4650 = vld [vmem:[#allocation3 + $0x1e5] sm:$0x1]
  %v4651 = vld [vmem:[#allocation3 + $0x1e7] sm:$0x1]
  %v4652 = vld [vmem:[#allocation3 + $0x1e9] sm:$0x1]
  %v4653 = vld [vmem:[#allocation3 + $0x1eb] sm:$0x1]
  %v4654 = vld [vmem:[#allocation3 + $0x1ed] sm:$0x1]
  %v4655 = vld [vmem:[#allocation3 + $0x1ef] sm:$0x1]
  %v4656 = vld [vmem:[#allocation3 + $0x1f1] sm:$0x1]
  %v4657 = vld [vmem:[#allocation3 + $0x1f3] sm:$0x1]
  %v4658 = vld [vmem:[#allocation3 + $0x1f5] sm:$0x1]
  %v4659 = vld [vmem:[#allocation3 + $0x1f7] sm:$0x1]
  %v4660 = vld [vmem:[#allocation3 + $0x1f9] sm:$0x1]
  %v4661 = vld [vmem:[#allocation3 + $0x1fb] sm:$0x1]
  %v4662 = vld [vmem:[#allocation3 + $0x1fd] sm:$0x1]
  %v4663 = vld [vmem:[#allocation3 + $0x1ff] sm:$0x1]
  %v4664 = vld [vmem:[#allocation3 + $0x201] sm:$0x1]
  %v4665 = vld [vmem:[#allocation3 + $0x203] sm:$0x1]
  %v4666 = vld [vmem:[#allocation3 + $0x205] sm:$0x1]
  %v4667 = vld [vmem:[#allocation3 + $0x207] sm:$0x1]
  %v4668 = vld [vmem:[#allocation3 + $0x209] sm:$0x1]
  %v4669 = vld [vmem:[#allocation3 + $0x20b] sm:$0x1]
  %v4670 = vld [vmem:[#allocation3 + $0x20d] sm:$0x1]
  %v4671 = vld [vmem:[#allocation3 + $0x20f] sm:$0x1]
  %v4672 = vld [vmem:[#allocation3 + $0x211] sm:$0x1]
  %v4673 = vld [vmem:[#allocation3 + $0x213] sm:$0x1]
  %v4674 = vld [vmem:[#allocation3 + $0x215] sm:$0x1]
  %v4675 = vld [vmem:[#allocation3 + $0x217] sm:$0x1]
  %v4676 = vld [vmem:[#allocation3 + $0x219] sm:$0x1]
  %v4677 = vld [vmem:[#allocation3 + $0x21b] sm:$0x1]
  %v4678 = vld [vmem:[#allocation3 + $0x21d] sm:$0x1]
  %v4679 = vld [vmem:[#allocation3 + $0x21f] sm:$0x1]
  %v4680 = vld [vmem:[#allocation3 + $0x221] sm:$0x1]
  %v4681 = vld [vmem:[#allocation3 + $0x223] sm:$0x1]
  %v4682 = vld [vmem:[#allocation3 + $0x225] sm:$0x1]
  %v4683 = vld [vmem:[#allocation3 + $0x227] sm:$0x1]
  %v4684 = vld [vmem:[#allocation3 + $0x229] sm:$0x1]
  %v4685 = vld [vmem:[#allocation3 + $0x22b] sm:$0x1]
  %v4686 = vld [vmem:[#allocation3 + $0x22d] sm:$0x1]
  %v4687 = vld [vmem:[#allocation3 + $0x22f] sm:$0x1]
  %v4688 = vld [vmem:[#allocation3 + $0x231] sm:$0x1]
  %v4689 = vld [vmem:[#allocation3 + $0x233] sm:$0x1]
  %v4690 = vld [vmem:[#allocation3 + $0x235] sm:$0x1]
  %v4691 = vld [vmem:[#allocation3 + $0x237] sm:$0x1]
  %v4692 = vld [vmem:[#allocation3 + $0x239] sm:$0x1]
  %v4693 = vld [vmem:[#allocation3 + $0x23b] sm:$0x1]
  %v4694 = vld [vmem:[#allocation3 + $0x23d] sm:$0x1]
  %v4695 = vld [vmem:[#allocation3 + $0x23f] sm:$0x1]
  %v4696 = vld [vmem:[#allocation3 + $0x241] sm:$0x1]
  %v4697 = vld [vmem:[#allocation3 + $0x243] sm:$0x1]
  %v4698 = vld [vmem:[#allocation3 + $0x245] sm:$0x1]
  %v4699 = vld [vmem:[#allocation3 + $0x247] sm:$0x1]
  %v4700 = vld [vmem:[#allocation3 + $0x249] sm:$0x1]
  %v4701 = vld [vmem:[#allocation3 + $0x24b] sm:$0x1]
  %v4702 = vld [vmem:[#allocation3 + $0x24d] sm:$0x1]
  %v4703 = vld [vmem:[#allocation3 + $0x24f] sm:$0x1]
  %v4704 = vld [vmem:[#allocation3 + $0x251] sm:$0x1]
  %v4705 = vld [vmem:[#allocation3 + $0x253] sm:$0x1]
  %v4706 = vld [vmem:[#allocation3 + $0x255] sm:$0x1]
  %v4707 = vld [vmem:[#allocation3 + $0x257] sm:$0x1]
  %v4708 = vld [vmem:[#allocation3 + $0x259] sm:$0x1]
  %v4709 = vld [vmem:[#allocation3 + $0x25b] sm:$0x1]
  %v4710 = vld [vmem:[#allocation3 + $0x25d] sm:$0x1]
  %v4711 = vld [vmem:[#allocation3 + $0x25f] sm:$0x1]
  %v4712 = vld [vmem:[#allocation3 + $0x261] sm:$0x1]
  %v4713 = vld [vmem:[#allocation3 + $0x263] sm:$0x1]
  %v4714 = vld [vmem:[#allocation3 + $0x265] sm:$0x1]
  %v4715 = vld [vmem:[#allocation3 + $0x267] sm:$0x1]
  %v4716 = vld [vmem:[#allocation3 + $0x269] sm:$0x1]
  %v4717 = vld [vmem:[#allocation3 + $0x26b] sm:$0x1]
  %v4718 = vld [vmem:[#allocation3 + $0x26d] sm:$0x1]
  %v4719 = vld [vmem:[#allocation3 + $0x26f] sm:$0x1]
  %v4720 = vld [vmem:[#allocation3 + $0x271] sm:$0x1]
  %v4721 = vld [vmem:[#allocation3 + $0x273] sm:$0x1]
  %v4722 = vld [vmem:[#allocation3 + $0x275] sm:$0x1]
  %v4723 = vld [vmem:[#allocation3 + $0x277] sm:$0x1]
  %v4724 = vld [vmem:[#allocation3 + $0x279] sm:$0x1]
  %v4725 = vld [vmem:[#allocation3 + $0x27b] sm:$0x1]
  %v4726 = vld [vmem:[#allocation3 + $0x27d] sm:$0x1]
  %v4727 = vld [vmem:[#allocation3 + $0x27f] sm:$0x1]
  %v4728 = vld [vmem:[#allocation3 + $0x281] sm:$0x1]
  %v4729 = vld [vmem:[#allocation3 + $0x283] sm:$0x1]
  %v4730 = vld [vmem:[#allocation3 + $0x285] sm:$0x1]
  %v4731 = vld [vmem:[#allocation3 + $0x287] sm:$0x1]
  %v4732 = vld [vmem:[#allocation3 + $0x289] sm:$0x1]
  %v4733 = vld [vmem:[#allocation3 + $0x28b] sm:$0x1]
  %v4734 = vld [vmem:[#allocation3 + $0x28d] sm:$0x1]
  %v4735 = vld [vmem:[#allocation3 + $0x28f] sm:$0x1]
  %v4736 = vld [vmem:[#allocation3 + $0x291] sm:$0x1]
  %v4737 = vld [vmem:[#allocation3 + $0x293] sm:$0x1]
  %v4738 = vld [vmem:[#allocation3 + $0x295] sm:$0x1]
  %v4739 = vld [vmem:[#allocation3 + $0x297] sm:$0x1]
  %v4740 = vld [vmem:[#allocation3 + $0x299] sm:$0x1]
  %v4741 = vld [vmem:[#allocation3 + $0x29b] sm:$0x1]
  %v4742 = vld [vmem:[#allocation3 + $0x29d] sm:$0x1]
  %v4743 = vld [vmem:[#allocation3 + $0x29f] sm:$0x1]
  %v4744 = vld [vmem:[#allocation3 + $0x2a1] sm:$0x1]
  %v4745 = vld [vmem:[#allocation3 + $0x2a3] sm:$0x1]
  %v4746 = vld [vmem:[#allocation3 + $0x2a5] sm:$0x1]
  %v4747 = vld [vmem:[#allocation3 + $0x2a7] sm:$0x1]
  %v4748 = vld [vmem:[#allocation3 + $0x2a9] sm:$0x1]
  %v4749 = vld [vmem:[#allocation3 + $0x2ab] sm:$0x1]
  %v4750 = vld [vmem:[#allocation3 + $0x2ad] sm:$0x1]
  %v4751 = vld [vmem:[#allocation3 + $0x2af] sm:$0x1]
  %v4752 = vld [vmem:[#allocation3 + $0x2b1] sm:$0x1]
  %v4753 = vld [vmem:[#allocation3 + $0x2b3] sm:$0x1]
  %v4754 = vld [vmem:[#allocation3 + $0x2b5] sm:$0x1]
  %v4755 = vld [vmem:[#allocation3 + $0x2b7] sm:$0x1]
  %v4756 = vld [vmem:[#allocation3 + $0x2b9] sm:$0x1]
  %v4757 = vld [vmem:[#allocation3 + $0x2bb] sm:$0x1]
  %v4758 = vld [vmem:[#allocation3 + $0x2bd] sm:$0x1]
  %v4759 = vld [vmem:[#allocation3 + $0x2bf] sm:$0x1]
  %v4760 = vld [vmem:[#allocation3 + $0x2c1] sm:$0x1]
  %v4761 = vld [vmem:[#allocation3 + $0x2c3] sm:$0x1]
  %v4762 = vld [vmem:[#allocation3 + $0x2c5] sm:$0x1]
  %v4763 = vld [vmem:[#allocation3 + $0x2c7] sm:$0x1]
  %v4764 = vld [vmem:[#allocation3 + $0x2c9] sm:$0x1]
  %v4765 = vld [vmem:[#allocation3 + $0x2cb] sm:$0x1]
  %v4766 = vld [vmem:[#allocation3 + $0x2cd] sm:$0x1]
  %v4767 = vld [vmem:[#allocation3 + $0x2cf] sm:$0x1]
  %v4768 = vld [vmem:[#allocation3 + $0x2d1] sm:$0x1]
  %v4769 = vld [vmem:[#allocation3 + $0x2d3] sm:$0x1]
  %v4770 = vld [vmem:[#allocation3 + $0x2d5] sm:$0x1]
  %v4771 = vld [vmem:[#allocation3 + $0x2d7] sm:$0x1]
  %v4772 = vld [vmem:[#allocation3 + $0x2d9] sm:$0x1]
  %v4773 = vld [vmem:[#allocation3 + $0x2db] sm:$0x1]
  %v4774 = vld [vmem:[#allocation3 + $0x2dd] sm:$0x1]
  %v4775 = vld [vmem:[#allocation3 + $0x2df] sm:$0x1]
  %v4776 = vld [vmem:[#allocation3 + $0x2e1] sm:$0x1]
  %v4777 = vld [vmem:[#allocation3 + $0x2e3] sm:$0x1]
  %v4778 = vld [vmem:[#allocation3 + $0x2e5] sm:$0x1]
  %v4779 = vld [vmem:[#allocation3 + $0x2e7] sm:$0x1]
  %v4780 = vld [vmem:[#allocation3 + $0x2e9] sm:$0x1]
  %v4781 = vld [vmem:[#allocation3 + $0x2eb] sm:$0x1]
  %v4782 = vld [vmem:[#allocation3 + $0x2ed] sm:$0x1]
  %v4783 = vld [vmem:[#allocation3 + $0x2ef] sm:$0x1]
  %v4784 = vld [vmem:[#allocation3 + $0x2f1] sm:$0x1]
  %v4785 = vld [vmem:[#allocation3 + $0x2f3] sm:$0x1]
  %v4786 = vld [vmem:[#allocation3 + $0x2f5] sm:$0x1]
  %v4787 = vld [vmem:[#allocation3 + $0x2f7] sm:$0x1]
  %v4788 = vld [vmem:[#allocation3 + $0x2f9] sm:$0x1]
  %v4789 = vld [vmem:[#allocation3 + $0x2fb] sm:$0x1]
  %v4790 = vld [vmem:[#allocation3 + $0x2fd] sm:$0x1]
  %v4791 = vld [vmem:[#allocation3 + $0x2ff] sm:$0x1]
  %v4792 = vld [vmem:[#allocation3 + $0x301] sm:$0x1]
  %v4793 = vld [vmem:[#allocation3 + $0x303] sm:$0x1]
  %v4794 = vld [vmem:[#allocation3 + $0x305] sm:$0x1]
  %v4795 = vld [vmem:[#allocation3 + $0x307] sm:$0x1]
  %v4796 = vld [vmem:[#allocation3 + $0x309] sm:$0x1]
  %v4797 = vld [vmem:[#allocation3 + $0x30b] sm:$0x1]
  %v4798 = vld [vmem:[#allocation3 + $0x30d] sm:$0x1]
  %v4799 = vld [vmem:[#allocation3 + $0x30f] sm:$0x1]
  %v4800 = vld [vmem:[#allocation3 + $0x311] sm:$0x1]
  %v4801 = vld [vmem:[#allocation3 + $0x313] sm:$0x1]
  %v4802 = vld [vmem:[#allocation3 + $0x315] sm:$0x1]
  %v4803 = vld [vmem:[#allocation3 + $0x317] sm:$0x1]
  %v4804 = vld [vmem:[#allocation3 + $0x319] sm:$0x1]
  %v4805 = vld [vmem:[#allocation3 + $0x31b] sm:$0x1]
  %v4806 = vld [vmem:[#allocation3 + $0x31d] sm:$0x1]
  %v4807 = vld [vmem:[#allocation3 + $0x31f] sm:$0x1]
  %v4808 = vld [vmem:[#allocation3 + $0x321] sm:$0x1]
  %v4809 = vld [vmem:[#allocation3 + $0x323] sm:$0x1]
  %v4810 = vld [vmem:[#allocation3 + $0x325] sm:$0x1]
  %v4811 = vld [vmem:[#allocation3 + $0x327] sm:$0x1]
  %v4812 = vld [vmem:[#allocation3 + $0x329] sm:$0x1]
  %v4813 = vld [vmem:[#allocation3 + $0x32b] sm:$0x1]
  %v4814 = vld [vmem:[#allocation3 + $0x32d] sm:$0x1]
  %v4815 = vld [vmem:[#allocation3 + $0x32f] sm:$0x1]
  %v4816 = vld [vmem:[#allocation3 + $0x331] sm:$0x1]
  %v4817 = vld [vmem:[#allocation3 + $0x333] sm:$0x1]
  %v4818 = vld [vmem:[#allocation3 + $0x335] sm:$0x1]
  %v4819 = vld [vmem:[#allocation3 + $0x337] sm:$0x1]
  %v4820 = vld [vmem:[#allocation3 + $0x339] sm:$0x1]
  %v4821 = vld [vmem:[#allocation3 + $0x33b] sm:$0x1]
  %v4822 = vld [vmem:[#allocation3 + $0x33d] sm:$0x1]
  %v4823 = vld [vmem:[#allocation3 + $0x33f] sm:$0x1]
  %v4824 = vld [vmem:[#allocation3 + $0x341] sm:$0x1]
  %v4825 = vld [vmem:[#allocation3 + $0x343] sm:$0x1]
  %v4826 = vld [vmem:[#allocation3 + $0x345] sm:$0x1]
  %v4827 = vld [vmem:[#allocation3 + $0x347] sm:$0x1]
  %v4828 = vld [vmem:[#allocation3 + $0x349] sm:$0x1]
  %v4829 = vld [vmem:[#allocation3 + $0x34b] sm:$0x1]
  %v4830 = vld [vmem:[#allocation3 + $0x34d] sm:$0x1]
  %v4831 = vld [vmem:[#allocation3 + $0x34f] sm:$0x1]
  %v4832 = vld [vmem:[#allocation3 + $0x351] sm:$0x1]
  %v4833 = vld [vmem:[#allocation3 + $0x353] sm:$0x1]
  %v4834 = vld [vmem:[#allocation3 + $0x355] sm:$0x1]
  %v4835 = vld [vmem:[#allocation3 + $0x357] sm:$0x1]
  %v4836 = vld [vmem:[#allocation3 + $0x359] sm:$0x1]
  %v4837 = vld [vmem:[#allocation3 + $0x35b] sm:$0x1]
  %v4838 = vld [vmem:[#allocation3 + $0x35d] sm:$0x1]
  %v4839 = vld [vmem:[#allocation3 + $0x35f] sm:$0x1]
  %v4840 = vld [vmem:[#allocation3 + $0x361] sm:$0x1]
  %v4841 = vld [vmem:[#allocation3 + $0x363] sm:$0x1]
  %v4842 = vld [vmem:[#allocation3 + $0x365] sm:$0x1]
  %v4843 = vld [vmem:[#allocation3 + $0x367] sm:$0x1]
  %v4844 = vld [vmem:[#allocation3 + $0x369] sm:$0x1]
  %v4845 = vld [vmem:[#allocation3 + $0x36b] sm:$0x1]
  %v4846 = vld [vmem:[#allocation3 + $0x36d] sm:$0x1]
  %v4847 = vld [vmem:[#allocation3 + $0x36f] sm:$0x1]
  %v4848 = vld [vmem:[#allocation3 + $0x371] sm:$0x1]
  %v4849 = vld [vmem:[#allocation3 + $0x373] sm:$0x1]
  %v4850 = vld [vmem:[#allocation3 + $0x375] sm:$0x1]
  %v4851 = vld [vmem:[#allocation3 + $0x377] sm:$0x1]
  %v4852 = vld [vmem:[#allocation3 + $0x379] sm:$0x1]
  %v4853 = vld [vmem:[#allocation3 + $0x37b] sm:$0x1]
  %v4854 = vld [vmem:[#allocation3 + $0x37d] sm:$0x1]
  %v4855 = vld [vmem:[#allocation3 + $0x37f] sm:$0x1]
  %v4856 = vld [vmem:[#allocation3 + $0x381] sm:$0x1]
  %v4857 = vld [vmem:[#allocation3 + $0x383] sm:$0x1]
  %v4858 = vld [vmem:[#allocation3 + $0x385] sm:$0x1]
  %v4859 = vld [vmem:[#allocation3 + $0x387] sm:$0x1]
  %v4860 = vld [vmem:[#allocation3 + $0x389] sm:$0x1]
  %v4861 = vld [vmem:[#allocation3 + $0x38b] sm:$0x1]
  %v4862 = vld [vmem:[#allocation3 + $0x38d] sm:$0x1]
  %v4863 = vld [vmem:[#allocation3 + $0x38f] sm:$0x1]
  %v4864 = vld [vmem:[#allocation3 + $0x391] sm:$0x1]
  %v4865 = vld [vmem:[#allocation3 + $0x393] sm:$0x1]
  %v4866 = vld [vmem:[#allocation3 + $0x395] sm:$0x1]
  %v4867 = vld [vmem:[#allocation3 + $0x397] sm:$0x1]
  %v4868 = vld [vmem:[#allocation3 + $0x399] sm:$0x1]
  %v4869 = vld [vmem:[#allocation3 + $0x39b] sm:$0x1]
  %v4870 = vld [vmem:[#allocation3 + $0x39d] sm:$0x1]
  %v4871 = vld [vmem:[#allocation3 + $0x39f] sm:$0x1]
  %v4872 = vld [vmem:[#allocation3 + $0x3a1] sm:$0x1]
  %v4873 = vld [vmem:[#allocation3 + $0x3a3] sm:$0x1]
  %v4874 = vld [vmem:[#allocation3 + $0x3a5] sm:$0x1]
  %v4875 = vld [vmem:[#allocation3 + $0x3a7] sm:$0x1]
  %v4876 = vld [vmem:[#allocation3 + $0x3a9] sm:$0x1]
  %v4877 = vld [vmem:[#allocation3 + $0x3ab] sm:$0x1]
  %v4878 = vld [vmem:[#allocation3 + $0x3ad] sm:$0x1]
  %v4879 = vld [vmem:[#allocation3 + $0x3af] sm:$0x1]
  %v4880 = vld [vmem:[#allocation3 + $0x3b1] sm:$0x1]
  %v4881 = vld [vmem:[#allocation3 + $0x3b3] sm:$0x1]
  %v4882 = vld [vmem:[#allocation3 + $0x3b5] sm:$0x1]
  %v4883 = vld [vmem:[#allocation3 + $0x3b7] sm:$0x1]
  %v4884 = vld [vmem:[#allocation3 + $0x3b9] sm:$0x1]
  %v4885 = vld [vmem:[#allocation3 + $0x3bb] sm:$0x1]
  %v4886 = vld [vmem:[#allocation3 + $0x3bd] sm:$0x1]
  %v4887 = vld [vmem:[#allocation3 + $0x3bf] sm:$0x1]
  %v5368 = vrot.slane %v4409, 7
  %v5369 = vsel %vm3289, %v5368, %v4408
  %v5370 = vrot.slane %v4410, 6
  %v5371 = vsel %vm3292, %v5370, %v5369
  %v5372 = vrot.slane %v4411, 5
  %v5373 = vsel %vm3295, %v5372, %v5371
  %v5374 = vrot.slane %v4412, 4
  %v5375 = vsel %vm3298, %v5374, %v5373
  %v5376 = vrot.slane %v4413, 3
  %v5377 = vsel %vm3301, %v5376, %v5375
  %v5378 = vrot.slane %v4414, 2
  %v5379 = vsel %vm3304, %v5378, %v5377
  %v5380 = vrot.slane %v4415, 1
  %v5381 = vsel %vm3307, %v5380, %v5379
  %v5382 = vrot.slane %v4417, 7
  %v5383 = vsel %vm3289, %v5382, %v4416
  %v5384 = vrot.slane %v4418, 6
  %v5385 = vsel %vm3292, %v5384, %v5383
  %v5386 = vrot.slane %v4419, 5
  %v5387 = vsel %vm3295, %v5386, %v5385
  %v5388 = vrot.slane %v4420, 4
  %v5389 = vsel %vm3298, %v5388, %v5387
  %v5390 = vrot.slane %v4421, 3
  %v5391 = vsel %vm3301, %v5390, %v5389
  %v5392 = vrot.slane %v4422, 2
  %v5393 = vsel %vm3304, %v5392, %v5391
  %v5394 = vrot.slane %v4423, 1
  %v5395 = vsel %vm3307, %v5394, %v5393
  %v5396 = vrot.slane %v4425, 7
  %v5397 = vsel %vm3289, %v5396, %v4424
  %v5398 = vrot.slane %v4426, 6
  %v5399 = vsel %vm3292, %v5398, %v5397
  %v5400 = vrot.slane %v4427, 5
  %v5401 = vsel %vm3295, %v5400, %v5399
  %v5402 = vrot.slane %v4428, 4
  %v5403 = vsel %vm3298, %v5402, %v5401
  %v5404 = vrot.slane %v4429, 3
  %v5405 = vsel %vm3301, %v5404, %v5403
  %v5406 = vrot.slane %v4430, 2
  %v5407 = vsel %vm3304, %v5406, %v5405
  %v5408 = vrot.slane %v4431, 1
  %v5409 = vsel %vm3307, %v5408, %v5407
  %v5410 = vrot.slane %v4433, 7
  %v5411 = vsel %vm3289, %v5410, %v4432
  %v5412 = vrot.slane %v4434, 6
  %v5413 = vsel %vm3292, %v5412, %v5411
  %v5414 = vrot.slane %v4435, 5
  %v5415 = vsel %vm3295, %v5414, %v5413
  %v5416 = vrot.slane %v4436, 4
  %v5417 = vsel %vm3298, %v5416, %v5415
  %v5418 = vrot.slane %v4437, 3
  %v5419 = vsel %vm3301, %v5418, %v5417
  %v5420 = vrot.slane %v4438, 2
  %v5421 = vsel %vm3304, %v5420, %v5419
  %v5422 = vrot.slane %v4439, 1
  %v5423 = vsel %vm3307, %v5422, %v5421
  %v5424 = vrot.slane %v4441, 7
  %v5425 = vsel %vm3289, %v5424, %v4440
  %v5426 = vrot.slane %v4442, 6
  %v5427 = vsel %vm3292, %v5426, %v5425
  %v5428 = vrot.slane %v4443, 5
  %v5429 = vsel %vm3295, %v5428, %v5427
  %v5430 = vrot.slane %v4444, 4
  %v5431 = vsel %vm3298, %v5430, %v5429
  %v5432 = vrot.slane %v4445, 3
  %v5433 = vsel %vm3301, %v5432, %v5431
  %v5434 = vrot.slane %v4446, 2
  %v5435 = vsel %vm3304, %v5434, %v5433
  %v5436 = vrot.slane %v4447, 1
  %v5437 = vsel %vm3307, %v5436, %v5435
  %v5438 = vrot.slane %v4449, 7
  %v5439 = vsel %vm3289, %v5438, %v4448
  %v5440 = vrot.slane %v4450, 6
  %v5441 = vsel %vm3292, %v5440, %v5439
  %v5442 = vrot.slane %v4451, 5
  %v5443 = vsel %vm3295, %v5442, %v5441
  %v5444 = vrot.slane %v4452, 4
  %v5445 = vsel %vm3298, %v5444, %v5443
  %v5446 = vrot.slane %v4453, 3
  %v5447 = vsel %vm3301, %v5446, %v5445
  %v5448 = vrot.slane %v4454, 2
  %v5449 = vsel %vm3304, %v5448, %v5447
  %v5450 = vrot.slane %v4455, 1
  %v5451 = vsel %vm3307, %v5450, %v5449
  %v5452 = vrot.slane %v4457, 7
  %v5453 = vsel %vm3289, %v5452, %v4456
  %v5454 = vrot.slane %v4458, 6
  %v5455 = vsel %vm3292, %v5454, %v5453
  %v5456 = vrot.slane %v4459, 5
  %v5457 = vsel %vm3295, %v5456, %v5455
  %v5458 = vrot.slane %v4460, 4
  %v5459 = vsel %vm3298, %v5458, %v5457
  %v5460 = vrot.slane %v4461, 3
  %v5461 = vsel %vm3301, %v5460, %v5459
  %v5462 = vrot.slane %v4462, 2
  %v5463 = vsel %vm3304, %v5462, %v5461
  %v5464 = vrot.slane %v4463, 1
  %v5465 = vsel %vm3307, %v5464, %v5463
  %v5466 = vrot.slane %v4465, 7
  %v5467 = vsel %vm3289, %v5466, %v4464
  %v5468 = vrot.slane %v4466, 6
  %v5469 = vsel %vm3292, %v5468, %v5467
  %v5470 = vrot.slane %v4467, 5
  %v5471 = vsel %vm3295, %v5470, %v5469
  %v5472 = vrot.slane %v4468, 4
  %v5473 = vsel %vm3298, %v5472, %v5471
  %v5474 = vrot.slane %v4469, 3
  %v5475 = vsel %vm3301, %v5474, %v5473
  %v5476 = vrot.slane %v4470, 2
  %v5477 = vsel %vm3304, %v5476, %v5475
  %v5478 = vrot.slane %v4471, 1
  %v5479 = vsel %vm3307, %v5478, %v5477
  %v5480 = vrot.slane %v4473, 7
  %v5481 = vsel %vm3289, %v5480, %v4472
  %v5482 = vrot.slane %v4474, 6
  %v5483 = vsel %vm3292, %v5482, %v5481
  %v5484 = vrot.slane %v4475, 5
  %v5485 = vsel %vm3295, %v5484, %v5483
  %v5486 = vrot.slane %v4476, 4
  %v5487 = vsel %vm3298, %v5486, %v5485
  %v5488 = vrot.slane %v4477, 3
  %v5489 = vsel %vm3301, %v5488, %v5487
  %v5490 = vrot.slane %v4478, 2
  %v5491 = vsel %vm3304, %v5490, %v5489
  %v5492 = vrot.slane %v4479, 1
  %v5493 = vsel %vm3307, %v5492, %v5491
  %v5494 = vrot.slane %v4481, 7
  %v5495 = vsel %vm3289, %v5494, %v4480
  %v5496 = vrot.slane %v4482, 6
  %v5497 = vsel %vm3292, %v5496, %v5495
  %v5498 = vrot.slane %v4483, 5
  %v5499 = vsel %vm3295, %v5498, %v5497
  %v5500 = vrot.slane %v4484, 4
  %v5501 = vsel %vm3298, %v5500, %v5499
  %v5502 = vrot.slane %v4485, 3
  %v5503 = vsel %vm3301, %v5502, %v5501
  %v5504 = vrot.slane %v4486, 2
  %v5505 = vsel %vm3304, %v5504, %v5503
  %v5506 = vrot.slane %v4487, 1
  %v5507 = vsel %vm3307, %v5506, %v5505
  %v5508 = vrot.slane %v4489, 7
  %v5509 = vsel %vm3289, %v5508, %v4488
  %v5510 = vrot.slane %v4490, 6
  %v5511 = vsel %vm3292, %v5510, %v5509
  %v5512 = vrot.slane %v4491, 5
  %v5513 = vsel %vm3295, %v5512, %v5511
  %v5514 = vrot.slane %v4492, 4
  %v5515 = vsel %vm3298, %v5514, %v5513
  %v5516 = vrot.slane %v4493, 3
  %v5517 = vsel %vm3301, %v5516, %v5515
  %v5518 = vrot.slane %v4494, 2
  %v5519 = vsel %vm3304, %v5518, %v5517
  %v5520 = vrot.slane %v4495, 1
  %v5521 = vsel %vm3307, %v5520, %v5519
  %v5522 = vrot.slane %v4497, 7
  %v5523 = vsel %vm3289, %v5522, %v4496
  %v5524 = vrot.slane %v4498, 6
  %v5525 = vsel %vm3292, %v5524, %v5523
  %v5526 = vrot.slane %v4499, 5
  %v5527 = vsel %vm3295, %v5526, %v5525
  %v5528 = vrot.slane %v4500, 4
  %v5529 = vsel %vm3298, %v5528, %v5527
  %v5530 = vrot.slane %v4501, 3
  %v5531 = vsel %vm3301, %v5530, %v5529
  %v5532 = vrot.slane %v4502, 2
  %v5533 = vsel %vm3304, %v5532, %v5531
  %v5534 = vrot.slane %v4503, 1
  %v5535 = vsel %vm3307, %v5534, %v5533
  %v5536 = vrot.slane %v4505, 7
  %v5537 = vsel %vm3289, %v5536, %v4504
  %v5538 = vrot.slane %v4506, 6
  %v5539 = vsel %vm3292, %v5538, %v5537
  %v5540 = vrot.slane %v4507, 5
  %v5541 = vsel %vm3295, %v5540, %v5539
  %v5542 = vrot.slane %v4508, 4
  %v5543 = vsel %vm3298, %v5542, %v5541
  %v5544 = vrot.slane %v4509, 3
  %v5545 = vsel %vm3301, %v5544, %v5543
  %v5546 = vrot.slane %v4510, 2
  %v5547 = vsel %vm3304, %v5546, %v5545
  %v5548 = vrot.slane %v4511, 1
  %v5549 = vsel %vm3307, %v5548, %v5547
  %v5550 = vrot.slane %v4513, 7
  %v5551 = vsel %vm3289, %v5550, %v4512
  %v5552 = vrot.slane %v4514, 6
  %v5553 = vsel %vm3292, %v5552, %v5551
  %v5554 = vrot.slane %v4515, 5
  %v5555 = vsel %vm3295, %v5554, %v5553
  %v5556 = vrot.slane %v4516, 4
  %v5557 = vsel %vm3298, %v5556, %v5555
  %v5558 = vrot.slane %v4517, 3
  %v5559 = vsel %vm3301, %v5558, %v5557
  %v5560 = vrot.slane %v4518, 2
  %v5561 = vsel %vm3304, %v5560, %v5559
  %v5562 = vrot.slane %v4519, 1
  %v5563 = vsel %vm3307, %v5562, %v5561
  %v5564 = vrot.slane %v4521, 7
  %v5565 = vsel %vm3289, %v5564, %v4520
  %v5566 = vrot.slane %v4522, 6
  %v5567 = vsel %vm3292, %v5566, %v5565
  %v5568 = vrot.slane %v4523, 5
  %v5569 = vsel %vm3295, %v5568, %v5567
  %v5570 = vrot.slane %v4524, 4
  %v5571 = vsel %vm3298, %v5570, %v5569
  %v5572 = vrot.slane %v4525, 3
  %v5573 = vsel %vm3301, %v5572, %v5571
  %v5574 = vrot.slane %v4526, 2
  %v5575 = vsel %vm3304, %v5574, %v5573
  %v5576 = vrot.slane %v4527, 1
  %v5577 = vsel %vm3307, %v5576, %v5575
  %v5578 = vrot.slane %v4529, 7
  %v5579 = vsel %vm3289, %v5578, %v4528
  %v5580 = vrot.slane %v4530, 6
  %v5581 = vsel %vm3292, %v5580, %v5579
  %v5582 = vrot.slane %v4531, 5
  %v5583 = vsel %vm3295, %v5582, %v5581
  %v5584 = vrot.slane %v4532, 4
  %v5585 = vsel %vm3298, %v5584, %v5583
  %v5586 = vrot.slane %v4533, 3
  %v5587 = vsel %vm3301, %v5586, %v5585
  %v5588 = vrot.slane %v4534, 2
  %v5589 = vsel %vm3304, %v5588, %v5587
  %v5590 = vrot.slane %v4535, 1
  %v5591 = vsel %vm3307, %v5590, %v5589
  %v5592 = vrot.slane %v4537, 7
  %v5593 = vsel %vm3289, %v5592, %v4536
  %v5594 = vrot.slane %v4538, 6
  %v5595 = vsel %vm3292, %v5594, %v5593
  %v5596 = vrot.slane %v4539, 5
  %v5597 = vsel %vm3295, %v5596, %v5595
  %v5598 = vrot.slane %v4540, 4
  %v5599 = vsel %vm3298, %v5598, %v5597
  %v5600 = vrot.slane %v4541, 3
  %v5601 = vsel %vm3301, %v5600, %v5599
  %v5602 = vrot.slane %v4542, 2
  %v5603 = vsel %vm3304, %v5602, %v5601
  %v5604 = vrot.slane %v4543, 1
  %v5605 = vsel %vm3307, %v5604, %v5603
  %v5606 = vrot.slane %v4545, 7
  %v5607 = vsel %vm3289, %v5606, %v4544
  %v5608 = vrot.slane %v4546, 6
  %v5609 = vsel %vm3292, %v5608, %v5607
  %v5610 = vrot.slane %v4547, 5
  %v5611 = vsel %vm3295, %v5610, %v5609
  %v5612 = vrot.slane %v4548, 4
  %v5613 = vsel %vm3298, %v5612, %v5611
  %v5614 = vrot.slane %v4549, 3
  %v5615 = vsel %vm3301, %v5614, %v5613
  %v5616 = vrot.slane %v4550, 2
  %v5617 = vsel %vm3304, %v5616, %v5615
  %v5618 = vrot.slane %v4551, 1
  %v5619 = vsel %vm3307, %v5618, %v5617
  %v5620 = vrot.slane %v4553, 7
  %v5621 = vsel %vm3289, %v5620, %v4552
  %v5622 = vrot.slane %v4554, 6
  %v5623 = vsel %vm3292, %v5622, %v5621
  %v5624 = vrot.slane %v4555, 5
  %v5625 = vsel %vm3295, %v5624, %v5623
  %v5626 = vrot.slane %v4556, 4
  %v5627 = vsel %vm3298, %v5626, %v5625
  %v5628 = vrot.slane %v4557, 3
  %v5629 = vsel %vm3301, %v5628, %v5627
  %v5630 = vrot.slane %v4558, 2
  %v5631 = vsel %vm3304, %v5630, %v5629
  %v5632 = vrot.slane %v4559, 1
  %v5633 = vsel %vm3307, %v5632, %v5631
  %v5634 = vrot.slane %v4561, 7
  %v5635 = vsel %vm3289, %v5634, %v4560
  %v5636 = vrot.slane %v4562, 6
  %v5637 = vsel %vm3292, %v5636, %v5635
  %v5638 = vrot.slane %v4563, 5
  %v5639 = vsel %vm3295, %v5638, %v5637
  %v5640 = vrot.slane %v4564, 4
  %v5641 = vsel %vm3298, %v5640, %v5639
  %v5642 = vrot.slane %v4565, 3
  %v5643 = vsel %vm3301, %v5642, %v5641
  %v5644 = vrot.slane %v4566, 2
  %v5645 = vsel %vm3304, %v5644, %v5643
  %v5646 = vrot.slane %v4567, 1
  %v5647 = vsel %vm3307, %v5646, %v5645
  %v5648 = vrot.slane %v4569, 7
  %v5649 = vsel %vm3289, %v5648, %v4568
  %v5650 = vrot.slane %v4570, 6
  %v5651 = vsel %vm3292, %v5650, %v5649
  %v5652 = vrot.slane %v4571, 5
  %v5653 = vsel %vm3295, %v5652, %v5651
  %v5654 = vrot.slane %v4572, 4
  %v5655 = vsel %vm3298, %v5654, %v5653
  %v5656 = vrot.slane %v4573, 3
  %v5657 = vsel %vm3301, %v5656, %v5655
  %v5658 = vrot.slane %v4574, 2
  %v5659 = vsel %vm3304, %v5658, %v5657
  %v5660 = vrot.slane %v4575, 1
  %v5661 = vsel %vm3307, %v5660, %v5659
  %v5662 = vrot.slane %v4577, 7
  %v5663 = vsel %vm3289, %v5662, %v4576
  %v5664 = vrot.slane %v4578, 6
  %v5665 = vsel %vm3292, %v5664, %v5663
  %v5666 = vrot.slane %v4579, 5
  %v5667 = vsel %vm3295, %v5666, %v5665
  %v5668 = vrot.slane %v4580, 4
  %v5669 = vsel %vm3298, %v5668, %v5667
  %v5670 = vrot.slane %v4581, 3
  %v5671 = vsel %vm3301, %v5670, %v5669
  %v5672 = vrot.slane %v4582, 2
  %v5673 = vsel %vm3304, %v5672, %v5671
  %v5674 = vrot.slane %v4583, 1
  %v5675 = vsel %vm3307, %v5674, %v5673
  %v5676 = vrot.slane %v4585, 7
  %v5677 = vsel %vm3289, %v5676, %v4584
  %v5678 = vrot.slane %v4586, 6
  %v5679 = vsel %vm3292, %v5678, %v5677
  %v5680 = vrot.slane %v4587, 5
  %v5681 = vsel %vm3295, %v5680, %v5679
  %v5682 = vrot.slane %v4588, 4
  %v5683 = vsel %vm3298, %v5682, %v5681
  %v5684 = vrot.slane %v4589, 3
  %v5685 = vsel %vm3301, %v5684, %v5683
  %v5686 = vrot.slane %v4590, 2
  %v5687 = vsel %vm3304, %v5686, %v5685
  %v5688 = vrot.slane %v4591, 1
  %v5689 = vsel %vm3307, %v5688, %v5687
  %v5690 = vrot.slane %v4593, 7
  %v5691 = vsel %vm3289, %v5690, %v4592
  %v5692 = vrot.slane %v4594, 6
  %v5693 = vsel %vm3292, %v5692, %v5691
  %v5694 = vrot.slane %v4595, 5
  %v5695 = vsel %vm3295, %v5694, %v5693
  %v5696 = vrot.slane %v4596, 4
  %v5697 = vsel %vm3298, %v5696, %v5695
  %v5698 = vrot.slane %v4597, 3
  %v5699 = vsel %vm3301, %v5698, %v5697
  %v5700 = vrot.slane %v4598, 2
  %v5701 = vsel %vm3304, %v5700, %v5699
  %v5702 = vrot.slane %v4599, 1
  %v5703 = vsel %vm3307, %v5702, %v5701
  %v5704 = vrot.slane %v4601, 7
  %v5705 = vsel %vm3289, %v5704, %v4600
  %v5706 = vrot.slane %v4602, 6
  %v5707 = vsel %vm3292, %v5706, %v5705
  %v5708 = vrot.slane %v4603, 5
  %v5709 = vsel %vm3295, %v5708, %v5707
  %v5710 = vrot.slane %v4604, 4
  %v5711 = vsel %vm3298, %v5710, %v5709
  %v5712 = vrot.slane %v4605, 3
  %v5713 = vsel %vm3301, %v5712, %v5711
  %v5714 = vrot.slane %v4606, 2
  %v5715 = vsel %vm3304, %v5714, %v5713
  %v5716 = vrot.slane %v4607, 1
  %v5717 = vsel %vm3307, %v5716, %v5715
  %v5718 = vrot.slane %v4609, 7
  %v5719 = vsel %vm3289, %v5718, %v4608
  %v5720 = vrot.slane %v4610, 6
  %v5721 = vsel %vm3292, %v5720, %v5719
  %v5722 = vrot.slane %v4611, 5
  %v5723 = vsel %vm3295, %v5722, %v5721
  %v5724 = vrot.slane %v4612, 4
  %v5725 = vsel %vm3298, %v5724, %v5723
  %v5726 = vrot.slane %v4613, 3
  %v5727 = vsel %vm3301, %v5726, %v5725
  %v5728 = vrot.slane %v4614, 2
  %v5729 = vsel %vm3304, %v5728, %v5727
  %v5730 = vrot.slane %v4615, 1
  %v5731 = vsel %vm3307, %v5730, %v5729
  %v5732 = vrot.slane %v4617, 7
  %v5733 = vsel %vm3289, %v5732, %v4616
  %v5734 = vrot.slane %v4618, 6
  %v5735 = vsel %vm3292, %v5734, %v5733
  %v5736 = vrot.slane %v4619, 5
  %v5737 = vsel %vm3295, %v5736, %v5735
  %v5738 = vrot.slane %v4620, 4
  %v5739 = vsel %vm3298, %v5738, %v5737
  %v5740 = vrot.slane %v4621, 3
  %v5741 = vsel %vm3301, %v5740, %v5739
  %v5742 = vrot.slane %v4622, 2
  %v5743 = vsel %vm3304, %v5742, %v5741
  %v5744 = vrot.slane %v4623, 1
  %v5745 = vsel %vm3307, %v5744, %v5743
  %v5746 = vrot.slane %v4625, 7
  %v5747 = vsel %vm3289, %v5746, %v4624
  %v5748 = vrot.slane %v4626, 6
  %v5749 = vsel %vm3292, %v5748, %v5747
  %v5750 = vrot.slane %v4627, 5
  %v5751 = vsel %vm3295, %v5750, %v5749
  %v5752 = vrot.slane %v4628, 4
  %v5753 = vsel %vm3298, %v5752, %v5751
  %v5754 = vrot.slane %v4629, 3
  %v5755 = vsel %vm3301, %v5754, %v5753
  %v5756 = vrot.slane %v4630, 2
  %v5757 = vsel %vm3304, %v5756, %v5755
  %v5758 = vrot.slane %v4631, 1
  %v5759 = vsel %vm3307, %v5758, %v5757
  %v5760 = vrot.slane %v4633, 7
  %v5761 = vsel %vm3289, %v5760, %v4632
  %v5762 = vrot.slane %v4634, 6
  %v5763 = vsel %vm3292, %v5762, %v5761
  %v5764 = vrot.slane %v4635, 5
  %v5765 = vsel %vm3295, %v5764, %v5763
  %v5766 = vrot.slane %v4636, 4
  %v5767 = vsel %vm3298, %v5766, %v5765
  %v5768 = vrot.slane %v4637, 3
  %v5769 = vsel %vm3301, %v5768, %v5767
  %v5770 = vrot.slane %v4638, 2
  %v5771 = vsel %vm3304, %v5770, %v5769
  %v5772 = vrot.slane %v4639, 1
  %v5773 = vsel %vm3307, %v5772, %v5771
  %v5774 = vrot.slane %v4641, 7
  %v5775 = vsel %vm3289, %v5774, %v4640
  %v5776 = vrot.slane %v4642, 6
  %v5777 = vsel %vm3292, %v5776, %v5775
  %v5778 = vrot.slane %v4643, 5
  %v5779 = vsel %vm3295, %v5778, %v5777
  %v5780 = vrot.slane %v4644, 4
  %v5781 = vsel %vm3298, %v5780, %v5779
  %v5782 = vrot.slane %v4645, 3
  %v5783 = vsel %vm3301, %v5782, %v5781
  %v5784 = vrot.slane %v4646, 2
  %v5785 = vsel %vm3304, %v5784, %v5783
  %v5786 = vrot.slane %v4647, 1
  %v5787 = vsel %vm3307, %v5786, %v5785
  %v5788 = vrot.slane %v4649, 7
  %v5789 = vsel %vm3289, %v5788, %v4648
  %v5790 = vrot.slane %v4650, 6
  %v5791 = vsel %vm3292, %v5790, %v5789
  %v5792 = vrot.slane %v4651, 5
  %v5793 = vsel %vm3295, %v5792, %v5791
  %v5794 = vrot.slane %v4652, 4
  %v5795 = vsel %vm3298, %v5794, %v5793
  %v5796 = vrot.slane %v4653, 3
  %v5797 = vsel %vm3301, %v5796, %v5795
  %v5798 = vrot.slane %v4654, 2
  %v5799 = vsel %vm3304, %v5798, %v5797
  %v5800 = vrot.slane %v4655, 1
  %v5801 = vsel %vm3307, %v5800, %v5799
  %v5802 = vrot.slane %v4657, 7
  %v5803 = vsel %vm3289, %v5802, %v4656
  %v5804 = vrot.slane %v4658, 6
  %v5805 = vsel %vm3292, %v5804, %v5803
  %v5806 = vrot.slane %v4659, 5
  %v5807 = vsel %vm3295, %v5806, %v5805
  %v5808 = vrot.slane %v4660, 4
  %v5809 = vsel %vm3298, %v5808, %v5807
  %v5810 = vrot.slane %v4661, 3
  %v5811 = vsel %vm3301, %v5810, %v5809
  %v5812 = vrot.slane %v4662, 2
  %v5813 = vsel %vm3304, %v5812, %v5811
  %v5814 = vrot.slane %v4663, 1
  %v5815 = vsel %vm3307, %v5814, %v5813
  %v5816 = vrot.slane %v4665, 7
  %v5817 = vsel %vm3289, %v5816, %v4664
  %v5818 = vrot.slane %v4666, 6
  %v5819 = vsel %vm3292, %v5818, %v5817
  %v5820 = vrot.slane %v4667, 5
  %v5821 = vsel %vm3295, %v5820, %v5819
  %v5822 = vrot.slane %v4668, 4
  %v5823 = vsel %vm3298, %v5822, %v5821
  %v5824 = vrot.slane %v4669, 3
  %v5825 = vsel %vm3301, %v5824, %v5823
  %v5826 = vrot.slane %v4670, 2
  %v5827 = vsel %vm3304, %v5826, %v5825
  %v5828 = vrot.slane %v4671, 1
  %v5829 = vsel %vm3307, %v5828, %v5827
  %v5830 = vrot.slane %v4673, 7
  %v5831 = vsel %vm3289, %v5830, %v4672
  %v5832 = vrot.slane %v4674, 6
  %v5833 = vsel %vm3292, %v5832, %v5831
  %v5834 = vrot.slane %v4675, 5
  %v5835 = vsel %vm3295, %v5834, %v5833
  %v5836 = vrot.slane %v4676, 4
  %v5837 = vsel %vm3298, %v5836, %v5835
  %v5838 = vrot.slane %v4677, 3
  %v5839 = vsel %vm3301, %v5838, %v5837
  %v5840 = vrot.slane %v4678, 2
  %v5841 = vsel %vm3304, %v5840, %v5839
  %v5842 = vrot.slane %v4679, 1
  %v5843 = vsel %vm3307, %v5842, %v5841
  %v5844 = vrot.slane %v4681, 7
  %v5845 = vsel %vm3289, %v5844, %v4680
  %v5846 = vrot.slane %v4682, 6
  %v5847 = vsel %vm3292, %v5846, %v5845
  %v5848 = vrot.slane %v4683, 5
  %v5849 = vsel %vm3295, %v5848, %v5847
  %v5850 = vrot.slane %v4684, 4
  %v5851 = vsel %vm3298, %v5850, %v5849
  %v5852 = vrot.slane %v4685, 3
  %v5853 = vsel %vm3301, %v5852, %v5851
  %v5854 = vrot.slane %v4686, 2
  %v5855 = vsel %vm3304, %v5854, %v5853
  %v5856 = vrot.slane %v4687, 1
  %v5857 = vsel %vm3307, %v5856, %v5855
  %v5858 = vrot.slane %v4689, 7
  %v5859 = vsel %vm3289, %v5858, %v4688
  %v5860 = vrot.slane %v4690, 6
  %v5861 = vsel %vm3292, %v5860, %v5859
  %v5862 = vrot.slane %v4691, 5
  %v5863 = vsel %vm3295, %v5862, %v5861
  %v5864 = vrot.slane %v4692, 4
  %v5865 = vsel %vm3298, %v5864, %v5863
  %v5866 = vrot.slane %v4693, 3
  %v5867 = vsel %vm3301, %v5866, %v5865
  %v5868 = vrot.slane %v4694, 2
  %v5869 = vsel %vm3304, %v5868, %v5867
  %v5870 = vrot.slane %v4695, 1
  %v5871 = vsel %vm3307, %v5870, %v5869
  %v5872 = vrot.slane %v4697, 7
  %v5873 = vsel %vm3289, %v5872, %v4696
  %v5874 = vrot.slane %v4698, 6
  %v5875 = vsel %vm3292, %v5874, %v5873
  %v5876 = vrot.slane %v4699, 5
  %v5877 = vsel %vm3295, %v5876, %v5875
  %v5878 = vrot.slane %v4700, 4
  %v5879 = vsel %vm3298, %v5878, %v5877
  %v5880 = vrot.slane %v4701, 3
  %v5881 = vsel %vm3301, %v5880, %v5879
  %v5882 = vrot.slane %v4702, 2
  %v5883 = vsel %vm3304, %v5882, %v5881
  %v5884 = vrot.slane %v4703, 1
  %v5885 = vsel %vm3307, %v5884, %v5883
  %v5886 = vrot.slane %v4705, 7
  %v5887 = vsel %vm3289, %v5886, %v4704
  %v5888 = vrot.slane %v4706, 6
  %v5889 = vsel %vm3292, %v5888, %v5887
  %v5890 = vrot.slane %v4707, 5
  %v5891 = vsel %vm3295, %v5890, %v5889
  %v5892 = vrot.slane %v4708, 4
  %v5893 = vsel %vm3298, %v5892, %v5891
  %v5894 = vrot.slane %v4709, 3
  %v5895 = vsel %vm3301, %v5894, %v5893
  %v5896 = vrot.slane %v4710, 2
  %v5897 = vsel %vm3304, %v5896, %v5895
  %v5898 = vrot.slane %v4711, 1
  %v5899 = vsel %vm3307, %v5898, %v5897
  %v5900 = vrot.slane %v4713, 7
  %v5901 = vsel %vm3289, %v5900, %v4712
  %v5902 = vrot.slane %v4714, 6
  %v5903 = vsel %vm3292, %v5902, %v5901
  %v5904 = vrot.slane %v4715, 5
  %v5905 = vsel %vm3295, %v5904, %v5903
  %v5906 = vrot.slane %v4716, 4
  %v5907 = vsel %vm3298, %v5906, %v5905
  %v5908 = vrot.slane %v4717, 3
  %v5909 = vsel %vm3301, %v5908, %v5907
  %v5910 = vrot.slane %v4718, 2
  %v5911 = vsel %vm3304, %v5910, %v5909
  %v5912 = vrot.slane %v4719, 1
  %v5913 = vsel %vm3307, %v5912, %v5911
  %v5914 = vrot.slane %v4721, 7
  %v5915 = vsel %vm3289, %v5914, %v4720
  %v5916 = vrot.slane %v4722, 6
  %v5917 = vsel %vm3292, %v5916, %v5915
  %v5918 = vrot.slane %v4723, 5
  %v5919 = vsel %vm3295, %v5918, %v5917
  %v5920 = vrot.slane %v4724, 4
  %v5921 = vsel %vm3298, %v5920, %v5919
  %v5922 = vrot.slane %v4725, 3
  %v5923 = vsel %vm3301, %v5922, %v5921
  %v5924 = vrot.slane %v4726, 2
  %v5925 = vsel %vm3304, %v5924, %v5923
  %v5926 = vrot.slane %v4727, 1
  %v5927 = vsel %vm3307, %v5926, %v5925
  %v5928 = vrot.slane %v4729, 7
  %v5929 = vsel %vm3289, %v5928, %v4728
  %v5930 = vrot.slane %v4730, 6
  %v5931 = vsel %vm3292, %v5930, %v5929
  %v5932 = vrot.slane %v4731, 5
  %v5933 = vsel %vm3295, %v5932, %v5931
  %v5934 = vrot.slane %v4732, 4
  %v5935 = vsel %vm3298, %v5934, %v5933
  %v5936 = vrot.slane %v4733, 3
  %v5937 = vsel %vm3301, %v5936, %v5935
  %v5938 = vrot.slane %v4734, 2
  %v5939 = vsel %vm3304, %v5938, %v5937
  %v5940 = vrot.slane %v4735, 1
  %v5941 = vsel %vm3307, %v5940, %v5939
  %v5942 = vrot.slane %v4737, 7
  %v5943 = vsel %vm3289, %v5942, %v4736
  %v5944 = vrot.slane %v4738, 6
  %v5945 = vsel %vm3292, %v5944, %v5943
  %v5946 = vrot.slane %v4739, 5
  %v5947 = vsel %vm3295, %v5946, %v5945
  %v5948 = vrot.slane %v4740, 4
  %v5949 = vsel %vm3298, %v5948, %v5947
  %v5950 = vrot.slane %v4741, 3
  %v5951 = vsel %vm3301, %v5950, %v5949
  %v5952 = vrot.slane %v4742, 2
  %v5953 = vsel %vm3304, %v5952, %v5951
  %v5954 = vrot.slane %v4743, 1
  %v5955 = vsel %vm3307, %v5954, %v5953
  %v5956 = vrot.slane %v4745, 7
  %v5957 = vsel %vm3289, %v5956, %v4744
  %v5958 = vrot.slane %v4746, 6
  %v5959 = vsel %vm3292, %v5958, %v5957
  %v5960 = vrot.slane %v4747, 5
  %v5961 = vsel %vm3295, %v5960, %v5959
  %v5962 = vrot.slane %v4748, 4
  %v5963 = vsel %vm3298, %v5962, %v5961
  %v5964 = vrot.slane %v4749, 3
  %v5965 = vsel %vm3301, %v5964, %v5963
  %v5966 = vrot.slane %v4750, 2
  %v5967 = vsel %vm3304, %v5966, %v5965
  %v5968 = vrot.slane %v4751, 1
  %v5969 = vsel %vm3307, %v5968, %v5967
  %v5970 = vrot.slane %v4753, 7
  %v5971 = vsel %vm3289, %v5970, %v4752
  %v5972 = vrot.slane %v4754, 6
  %v5973 = vsel %vm3292, %v5972, %v5971
  %v5974 = vrot.slane %v4755, 5
  %v5975 = vsel %vm3295, %v5974, %v5973
  %v5976 = vrot.slane %v4756, 4
  %v5977 = vsel %vm3298, %v5976, %v5975
  %v5978 = vrot.slane %v4757, 3
  %v5979 = vsel %vm3301, %v5978, %v5977
  %v5980 = vrot.slane %v4758, 2
  %v5981 = vsel %vm3304, %v5980, %v5979
  %v5982 = vrot.slane %v4759, 1
  %v5983 = vsel %vm3307, %v5982, %v5981
  %v5984 = vrot.slane %v4761, 7
  %v5985 = vsel %vm3289, %v5984, %v4760
  %v5986 = vrot.slane %v4762, 6
  %v5987 = vsel %vm3292, %v5986, %v5985
  %v5988 = vrot.slane %v4763, 5
  %v5989 = vsel %vm3295, %v5988, %v5987
  %v5990 = vrot.slane %v4764, 4
  %v5991 = vsel %vm3298, %v5990, %v5989
  %v5992 = vrot.slane %v4765, 3
  %v5993 = vsel %vm3301, %v5992, %v5991
  %v5994 = vrot.slane %v4766, 2
  %v5995 = vsel %vm3304, %v5994, %v5993
  %v5996 = vrot.slane %v4767, 1
  %v5997 = vsel %vm3307, %v5996, %v5995
  %v5998 = vrot.slane %v4769, 7
  %v5999 = vsel %vm3289, %v5998, %v4768
  %v6000 = vrot.slane %v4770, 6
  %v6001 = vsel %vm3292, %v6000, %v5999
  %v6002 = vrot.slane %v4771, 5
  %v6003 = vsel %vm3295, %v6002, %v6001
  %v6004 = vrot.slane %v4772, 4
  %v6005 = vsel %vm3298, %v6004, %v6003
  %v6006 = vrot.slane %v4773, 3
  %v6007 = vsel %vm3301, %v6006, %v6005
  %v6008 = vrot.slane %v4774, 2
  %v6009 = vsel %vm3304, %v6008, %v6007
  %v6010 = vrot.slane %v4775, 1
  %v6011 = vsel %vm3307, %v6010, %v6009
  %v6012 = vrot.slane %v4777, 7
  %v6013 = vsel %vm3289, %v6012, %v4776
  %v6014 = vrot.slane %v4778, 6
  %v6015 = vsel %vm3292, %v6014, %v6013
  %v6016 = vrot.slane %v4779, 5
  %v6017 = vsel %vm3295, %v6016, %v6015
  %v6018 = vrot.slane %v4780, 4
  %v6019 = vsel %vm3298, %v6018, %v6017
  %v6020 = vrot.slane %v4781, 3
  %v6021 = vsel %vm3301, %v6020, %v6019
  %v6022 = vrot.slane %v4782, 2
  %v6023 = vsel %vm3304, %v6022, %v6021
  %v6024 = vrot.slane %v4783, 1
  %v6025 = vsel %vm3307, %v6024, %v6023
  %v6026 = vrot.slane %v4785, 7
  %v6027 = vsel %vm3289, %v6026, %v4784
  %v6028 = vrot.slane %v4786, 6
  %v6029 = vsel %vm3292, %v6028, %v6027
  %v6030 = vrot.slane %v4787, 5
  %v6031 = vsel %vm3295, %v6030, %v6029
  %v6032 = vrot.slane %v4788, 4
  %v6033 = vsel %vm3298, %v6032, %v6031
  %v6034 = vrot.slane %v4789, 3
  %v6035 = vsel %vm3301, %v6034, %v6033
  %v6036 = vrot.slane %v4790, 2
  %v6037 = vsel %vm3304, %v6036, %v6035
  %v6038 = vrot.slane %v4791, 1
  %v6039 = vsel %vm3307, %v6038, %v6037
  %v6040 = vrot.slane %v4793, 7
  %v6041 = vsel %vm3289, %v6040, %v4792
  %v6042 = vrot.slane %v4794, 6
  %v6043 = vsel %vm3292, %v6042, %v6041
  %v6044 = vrot.slane %v4795, 5
  %v6045 = vsel %vm3295, %v6044, %v6043
  %v6046 = vrot.slane %v4796, 4
  %v6047 = vsel %vm3298, %v6046, %v6045
  %v6048 = vrot.slane %v4797, 3
  %v6049 = vsel %vm3301, %v6048, %v6047
  %v6050 = vrot.slane %v4798, 2
  %v6051 = vsel %vm3304, %v6050, %v6049
  %v6052 = vrot.slane %v4799, 1
  %v6053 = vsel %vm3307, %v6052, %v6051
  %v6054 = vrot.slane %v4801, 7
  %v6055 = vsel %vm3289, %v6054, %v4800
  %v6056 = vrot.slane %v4802, 6
  %v6057 = vsel %vm3292, %v6056, %v6055
  %v6058 = vrot.slane %v4803, 5
  %v6059 = vsel %vm3295, %v6058, %v6057
  %v6060 = vrot.slane %v4804, 4
  %v6061 = vsel %vm3298, %v6060, %v6059
  %v6062 = vrot.slane %v4805, 3
  %v6063 = vsel %vm3301, %v6062, %v6061
  %v6064 = vrot.slane %v4806, 2
  %v6065 = vsel %vm3304, %v6064, %v6063
  %v6066 = vrot.slane %v4807, 1
  %v6067 = vsel %vm3307, %v6066, %v6065
  %v6068 = vrot.slane %v4809, 7
  %v6069 = vsel %vm3289, %v6068, %v4808
  %v6070 = vrot.slane %v4810, 6
  %v6071 = vsel %vm3292, %v6070, %v6069
  %v6072 = vrot.slane %v4811, 5
  %v6073 = vsel %vm3295, %v6072, %v6071
  %v6074 = vrot.slane %v4812, 4
  %v6075 = vsel %vm3298, %v6074, %v6073
  %v6076 = vrot.slane %v4813, 3
  %v6077 = vsel %vm3301, %v6076, %v6075
  %v6078 = vrot.slane %v4814, 2
  %v6079 = vsel %vm3304, %v6078, %v6077
  %v6080 = vrot.slane %v4815, 1
  %v6081 = vsel %vm3307, %v6080, %v6079
  %v6082 = vrot.slane %v4817, 7
  %v6083 = vsel %vm3289, %v6082, %v4816
  %v6084 = vrot.slane %v4818, 6
  %v6085 = vsel %vm3292, %v6084, %v6083
  %v6086 = vrot.slane %v4819, 5
  %v6087 = vsel %vm3295, %v6086, %v6085
  %v6088 = vrot.slane %v4820, 4
  %v6089 = vsel %vm3298, %v6088, %v6087
  %v6090 = vrot.slane %v4821, 3
  %v6091 = vsel %vm3301, %v6090, %v6089
  %v6092 = vrot.slane %v4822, 2
  %v6093 = vsel %vm3304, %v6092, %v6091
  %v6094 = vrot.slane %v4823, 1
  %v6095 = vsel %vm3307, %v6094, %v6093
  %v6096 = vrot.slane %v4825, 7
  %v6097 = vsel %vm3289, %v6096, %v4824
  %v6098 = vrot.slane %v4826, 6
  %v6099 = vsel %vm3292, %v6098, %v6097
  %v6100 = vrot.slane %v4827, 5
  %v6101 = vsel %vm3295, %v6100, %v6099
  %v6102 = vrot.slane %v4828, 4
  %v6103 = vsel %vm3298, %v6102, %v6101
  %v6104 = vrot.slane %v4829, 3
  %v6105 = vsel %vm3301, %v6104, %v6103
  %v6106 = vrot.slane %v4830, 2
  %v6107 = vsel %vm3304, %v6106, %v6105
  %v6108 = vrot.slane %v4831, 1
  %v6109 = vsel %vm3307, %v6108, %v6107
  %v6110 = vrot.slane %v4833, 7
  %v6111 = vsel %vm3289, %v6110, %v4832
  %v6112 = vrot.slane %v4834, 6
  %v6113 = vsel %vm3292, %v6112, %v6111
  %v6114 = vrot.slane %v4835, 5
  %v6115 = vsel %vm3295, %v6114, %v6113
  %v6116 = vrot.slane %v4836, 4
  %v6117 = vsel %vm3298, %v6116, %v6115
  %v6118 = vrot.slane %v4837, 3
  %v6119 = vsel %vm3301, %v6118, %v6117
  %v6120 = vrot.slane %v4838, 2
  %v6121 = vsel %vm3304, %v6120, %v6119
  %v6122 = vrot.slane %v4839, 1
  %v6123 = vsel %vm3307, %v6122, %v6121
  %v6124 = vrot.slane %v4841, 7
  %v6125 = vsel %vm3289, %v6124, %v4840
  %v6126 = vrot.slane %v4842, 6
  %v6127 = vsel %vm3292, %v6126, %v6125
  %v6128 = vrot.slane %v4843, 5
  %v6129 = vsel %vm3295, %v6128, %v6127
  %v6130 = vrot.slane %v4844, 4
  %v6131 = vsel %vm3298, %v6130, %v6129
  %v6132 = vrot.slane %v4845, 3
  %v6133 = vsel %vm3301, %v6132, %v6131
  %v6134 = vrot.slane %v4846, 2
  %v6135 = vsel %vm3304, %v6134, %v6133
  %v6136 = vrot.slane %v4847, 1
  %v6137 = vsel %vm3307, %v6136, %v6135
  %v6138 = vrot.slane %v4849, 7
  %v6139 = vsel %vm3289, %v6138, %v4848
  %v6140 = vrot.slane %v4850, 6
  %v6141 = vsel %vm3292, %v6140, %v6139
  %v6142 = vrot.slane %v4851, 5
  %v6143 = vsel %vm3295, %v6142, %v6141
  %v6144 = vrot.slane %v4852, 4
  %v6145 = vsel %vm3298, %v6144, %v6143
  %v6146 = vrot.slane %v4853, 3
  %v6147 = vsel %vm3301, %v6146, %v6145
  %v6148 = vrot.slane %v4854, 2
  %v6149 = vsel %vm3304, %v6148, %v6147
  %v6150 = vrot.slane %v4855, 1
  %v6151 = vsel %vm3307, %v6150, %v6149
  %v6152 = vrot.slane %v4857, 7
  %v6153 = vsel %vm3289, %v6152, %v4856
  %v6154 = vrot.slane %v4858, 6
  %v6155 = vsel %vm3292, %v6154, %v6153
  %v6156 = vrot.slane %v4859, 5
  %v6157 = vsel %vm3295, %v6156, %v6155
  %v6158 = vrot.slane %v4860, 4
  %v6159 = vsel %vm3298, %v6158, %v6157
  %v6160 = vrot.slane %v4861, 3
  %v6161 = vsel %vm3301, %v6160, %v6159
  %v6162 = vrot.slane %v4862, 2
  %v6163 = vsel %vm3304, %v6162, %v6161
  %v6164 = vrot.slane %v4863, 1
  %v6165 = vsel %vm3307, %v6164, %v6163
  %v6166 = vrot.slane %v4865, 7
  %v6167 = vsel %vm3289, %v6166, %v4864
  %v6168 = vrot.slane %v4866, 6
  %v6169 = vsel %vm3292, %v6168, %v6167
  %v6170 = vrot.slane %v4867, 5
  %v6171 = vsel %vm3295, %v6170, %v6169
  %v6172 = vrot.slane %v4868, 4
  %v6173 = vsel %vm3298, %v6172, %v6171
  %v6174 = vrot.slane %v4869, 3
  %v6175 = vsel %vm3301, %v6174, %v6173
  %v6176 = vrot.slane %v4870, 2
  %v6177 = vsel %vm3304, %v6176, %v6175
  %v6178 = vrot.slane %v4871, 1
  %v6179 = vsel %vm3307, %v6178, %v6177
  %v6180 = vrot.slane %v4873, 7
  %v6181 = vsel %vm3289, %v6180, %v4872
  %v6182 = vrot.slane %v4874, 6
  %v6183 = vsel %vm3292, %v6182, %v6181
  %v6184 = vrot.slane %v4875, 5
  %v6185 = vsel %vm3295, %v6184, %v6183
  %v6186 = vrot.slane %v4876, 4
  %v6187 = vsel %vm3298, %v6186, %v6185
  %v6188 = vrot.slane %v4877, 3
  %v6189 = vsel %vm3301, %v6188, %v6187
  %v6190 = vrot.slane %v4878, 2
  %v6191 = vsel %vm3304, %v6190, %v6189
  %v6192 = vrot.slane %v4879, 1
  %v6193 = vsel %vm3307, %v6192, %v6191
  %v6194 = vrot.slane %v4881, 7
  %v6195 = vsel %vm3289, %v6194, %v4880
  %v6196 = vrot.slane %v4882, 6
  %v6197 = vsel %vm3292, %v6196, %v6195
  %v6198 = vrot.slane %v4883, 5
  %v6199 = vsel %vm3295, %v6198, %v6197
  %v6200 = vrot.slane %v4884, 4
  %v6201 = vsel %vm3298, %v6200, %v6199
  %v6202 = vrot.slane %v4885, 3
  %v6203 = vsel %vm3301, %v6202, %v6201
  %v6204 = vrot.slane %v4886, 2
  %v6205 = vsel %vm3304, %v6204, %v6203
  %v6206 = vrot.slane %v4887, 1
  %v6207 = vsel %vm3307, %v6206, %v6205
  %6268 = vxpose.xlu0.b32.start [1/16] %v5381, 128
  %6269 = vxpose.xlu0.b32.cont [2/16] %v5395, 128
  %6270 = vxpose.xlu0.b32.cont [3/16] %v5409, 128
  %6271 = vxpose.xlu0.b32.cont [4/16] %v5423, 128
  %6272 = vxpose.xlu0.b32.cont [5/16] %v5437, 128
  %6273 = vxpose.xlu0.b32.cont [6/16] %v5451, 128
  %6274 = vxpose.xlu0.b32.cont [7/16] %v5465, 128
  %6275 = vxpose.xlu0.b32.cont [8/16] %v5479, 128
  %6276 = vxpose.xlu0.b32.cont [9/16] %v5493, 128
  %6277 = vxpose.xlu0.b32.cont [10/16] %v5507, 128
  %6278 = vxpose.xlu0.b32.cont [11/16] %v5521, 128
  %6279 = vxpose.xlu0.b32.cont [12/16] %v5535, 128
  %6280 = vxpose.xlu0.b32.cont [13/16] %v5549, 128
  %6281 = vxpose.xlu0.b32.cont [14/16] %v5563, 128
  %6282 = vxpose.xlu0.b32.cont [15/16] %v5577, 128
  %6283 = vxpose.xlu0.b32.end [16/16] %v5591, 128
  %v6284 = vpop.trf.xlu0
  %v6285 = vpop.trf.xlu0
  %v6286 = vpop.trf.xlu0
  %v6287 = vpop.trf.xlu0
  %v6288 = vpop.trf.xlu0
  %v6289 = vpop.trf.xlu0
  %v6290 = vpop.trf.xlu0
  %v6291 = vpop.trf.xlu0
  %v6292 = vpop.trf.xlu0
  %v6293 = vpop.trf.xlu0
  %v6294 = vpop.trf.xlu0
  %v6295 = vpop.trf.xlu0
  %v6296 = vpop.trf.xlu0
  %v6297 = vpop.trf.xlu0
  %v6298 = vpop.trf.xlu0
  %v6299 = vpop.trf.xlu0
  %6300 = vxpose.xlu0.b32.start [1/16] %v5605, 128
  %6301 = vxpose.xlu0.b32.cont [2/16] %v5619, 128
  %6302 = vxpose.xlu0.b32.cont [3/16] %v5633, 128
  %6303 = vxpose.xlu0.b32.cont [4/16] %v5647, 128
  %6304 = vxpose.xlu0.b32.cont [5/16] %v5661, 128
  %6305 = vxpose.xlu0.b32.cont [6/16] %v5675, 128
  %6306 = vxpose.xlu0.b32.cont [7/16] %v5689, 128
  %6307 = vxpose.xlu0.b32.cont [8/16] %v5703, 128
  %6308 = vxpose.xlu0.b32.cont [9/16] %v5717, 128
  %6309 = vxpose.xlu0.b32.cont [10/16] %v5731, 128
  %6310 = vxpose.xlu0.b32.cont [11/16] %v5745, 128
  %6311 = vxpose.xlu0.b32.cont [12/16] %v5759, 128
  %6312 = vxpose.xlu0.b32.cont [13/16] %v5773, 128
  %6313 = vxpose.xlu0.b32.cont [14/16] %v5787, 128
  %6314 = vxpose.xlu0.b32.cont [15/16] %v5801, 128
  %6315 = vxpose.xlu0.b32.end [16/16] %v5815, 128
  %v6316 = vpop.trf.xlu0
  %v6317 = vpop.trf.xlu0
  %v6318 = vpop.trf.xlu0
  %v6319 = vpop.trf.xlu0
  %v6320 = vpop.trf.xlu0
  %v6321 = vpop.trf.xlu0
  %v6322 = vpop.trf.xlu0
  %v6323 = vpop.trf.xlu0
  %v6324 = vpop.trf.xlu0
  %v6325 = vpop.trf.xlu0
  %v6326 = vpop.trf.xlu0
  %v6327 = vpop.trf.xlu0
  %v6328 = vpop.trf.xlu0
  %v6329 = vpop.trf.xlu0
  %v6330 = vpop.trf.xlu0
  %v6331 = vpop.trf.xlu0
  %6332 = vxpose.xlu0.b32.start [1/16] %v5829, 128
  %6333 = vxpose.xlu0.b32.cont [2/16] %v5843, 128
  %6334 = vxpose.xlu0.b32.cont [3/16] %v5857, 128
  %6335 = vxpose.xlu0.b32.cont [4/16] %v5871, 128
  %6336 = vxpose.xlu0.b32.cont [5/16] %v5885, 128
  %6337 = vxpose.xlu0.b32.cont [6/16] %v5899, 128
  %6338 = vxpose.xlu0.b32.cont [7/16] %v5913, 128
  %6339 = vxpose.xlu0.b32.cont [8/16] %v5927, 128
  %6340 = vxpose.xlu0.b32.cont [9/16] %v5941, 128
  %6341 = vxpose.xlu0.b32.cont [10/16] %v5955, 128
  %6342 = vxpose.xlu0.b32.cont [11/16] %v5969, 128
  %6343 = vxpose.xlu0.b32.cont [12/16] %v5983, 128
  %6344 = vxpose.xlu0.b32.cont [13/16] %v5997, 128
  %6345 = vxpose.xlu0.b32.cont [14/16] %v6011, 128
  %6346 = vxpose.xlu0.b32.cont [15/16] %v6025, 128
  %6347 = vxpose.xlu0.b32.end [16/16] %v6039, 128
  %v6348 = vpop.trf.xlu0
  %v6349 = vpop.trf.xlu0
  %v6350 = vpop.trf.xlu0
  %v6351 = vpop.trf.xlu0
  %v6352 = vpop.trf.xlu0
  %v6353 = vpop.trf.xlu0
  %v6354 = vpop.trf.xlu0
  %v6355 = vpop.trf.xlu0
  %v6356 = vpop.trf.xlu0
  %v6357 = vpop.trf.xlu0
  %v6358 = vpop.trf.xlu0
  %v6359 = vpop.trf.xlu0
  %v6360 = vpop.trf.xlu0
  %v6361 = vpop.trf.xlu0
  %v6362 = vpop.trf.xlu0
  %v6363 = vpop.trf.xlu0
  %6364 = vxpose.xlu0.b32.start [1/16] %v6053, 128
  %6365 = vxpose.xlu0.b32.cont [2/16] %v6067, 128
  %6366 = vxpose.xlu0.b32.cont [3/16] %v6081, 128
  %6367 = vxpose.xlu0.b32.cont [4/16] %v6095, 128
  %6368 = vxpose.xlu0.b32.cont [5/16] %v6109, 128
  %6369 = vxpose.xlu0.b32.cont [6/16] %v6123, 128
  %6370 = vxpose.xlu0.b32.cont [7/16] %v6137, 128
  %6371 = vxpose.xlu0.b32.cont [8/16] %v6151, 128
  %6372 = vxpose.xlu0.b32.cont [9/16] %v6165, 128
  %6373 = vxpose.xlu0.b32.cont [10/16] %v6179, 128
  %6374 = vxpose.xlu0.b32.cont [11/16] %v6193, 128
  %6375 = vxpose.xlu0.b32.cont [12/16] %v6207, 128
  %6376 = vxpose.xlu0.b32.cont [13/16] 0.0, 128
  %6377 = vxpose.xlu0.b32.cont [14/16] 0.0, 128
  %6378 = vxpose.xlu0.b32.cont [15/16] 0.0, 128
  %6379 = vxpose.xlu0.b32.end [16/16] 0.0, 128
  %v6380 = vpop.trf.xlu0
  %v6381 = vpop.trf.xlu0
  %v6382 = vpop.trf.xlu0
  %v6383 = vpop.trf.xlu0
  %v6384 = vpop.trf.xlu0
  %v6385 = vpop.trf.xlu0
  %v6386 = vpop.trf.xlu0
  %v6387 = vpop.trf.xlu0
  %v6388 = vpop.trf.xlu0
  %v6389 = vpop.trf.xlu0
  %v6390 = vpop.trf.xlu0
  %v6391 = vpop.trf.xlu0
  %v6392 = vpop.trf.xlu0
  %v6393 = vpop.trf.xlu0
  %v6394 = vpop.trf.xlu0
  %v6395 = vpop.trf.xlu0
  %v6397 = vsel %vm4323, %v6380, 0
  %6399 = vmatpush.msra.mxu0 %v2279
  %6400 = vmatpush.msra.mxu0 %v2278
  %6401 = vmatpush.msra.mxu0 %v2277
  %6402 = vmatpush.msra.mxu0 %v2276
  %6403 = vmatpush.msra.mxu0 %v2275
  %6404 = vmatpush.msra.mxu0 %v2274
  %6405 = vmatpush.msra.mxu0 %v2273
  %6406 = vmatpush.msra.mxu0 %v2272
  %6407 = vmatpush.msra.mxu0 %v2271
  %6408 = vmatpush.msra.mxu0 %v2270
  %6409 = vmatpush.msra.mxu0 %v2269
  %6410 = vmatpush.msra.mxu0 %v2268
  %6411 = vmatpush.msra.mxu0 %v2267
  %6412 = vmatpush.msra.mxu0 %v2266
  %6413 = vmatpush.msra.mxu0 %v2265
  %6414 = vmatpush.msra.mxu0 %v2264
  %6415 = vmatmul.f32.gmra.mxu0 %v6284
  %v6416 = vpop.f32.mrf.mxu0
  %v6417 = vadd.f32 %v2806, %v6416
  %6418 = vdwg.mxu0
  %6419 = vmatpush.msra.mxu0 %v2295
  %6420 = vmatpush.msra.mxu0 %v2294
  %6421 = vmatpush.msra.mxu0 %v2293
  %6422 = vmatpush.msra.mxu0 %v2292
  %6423 = vmatpush.msra.mxu0 %v2291
  %6424 = vmatpush.msra.mxu0 %v2290
  %6425 = vmatpush.msra.mxu0 %v2289
  %6426 = vmatpush.msra.mxu0 %v2288
  %6427 = vmatpush.msra.mxu0 %v2287
  %6428 = vmatpush.msra.mxu0 %v2286
  %6429 = vmatpush.msra.mxu0 %v2285
  %6430 = vmatpush.msra.mxu0 %v2284
  %6431 = vmatpush.msra.mxu0 %v2283
  %6432 = vmatpush.msra.mxu0 %v2282
  %6433 = vmatpush.msra.mxu0 %v2281
  %6434 = vmatpush.msra.mxu0 %v2280
  %6435 = vmatmul.f32.gmra.mxu0 %v6316
  %v6436 = vpop.f32.mrf.mxu0
  %v6437 = vadd.f32 %v6417, %v6436
  %6438 = vdwg.mxu0
  %6439 = vmatpush.msra.mxu0 %v2311
  %6440 = vmatpush.msra.mxu0 %v2310
  %6441 = vmatpush.msra.mxu0 %v2309
  %6442 = vmatpush.msra.mxu0 %v2308
  %6443 = vmatpush.msra.mxu0 %v2307
  %6444 = vmatpush.msra.mxu0 %v2306
  %6445 = vmatpush.msra.mxu0 %v2305
  %6446 = vmatpush.msra.mxu0 %v2304
  %6447 = vmatpush.msra.mxu0 %v2303
  %6448 = vmatpush.msra.mxu0 %v2302
  %6449 = vmatpush.msra.mxu0 %v2301
  %6450 = vmatpush.msra.mxu0 %v2300
  %6451 = vmatpush.msra.mxu0 %v2299
  %6452 = vmatpush.msra.mxu0 %v2298
  %6453 = vmatpush.msra.mxu0 %v2297
  %6454 = vmatpush.msra.mxu0 %v2296
  %6455 = vmatmul.f32.gmra.mxu0 %v6348
  %v6456 = vpop.f32.mrf.mxu0
  %v6457 = vadd.f32 %v6437, %v6456
  %6458 = vdwg.mxu0
  %6459 = vmatpush.msra.mxu0 0.0
  %6460 = vmatpush.msra.mxu0 0.0
  %6461 = vmatpush.msra.mxu0 0.0
  %6462 = vmatpush.msra.mxu0 0.0
  %6463 = vmatpush.msra.mxu0 %v2323
  %6464 = vmatpush.msra.mxu0 %v2322
  %6465 = vmatpush.msra.mxu0 %v2321
  %6466 = vmatpush.msra.mxu0 %v2320
  %6467 = vmatpush.msra.mxu0 %v2319
  %6468 = vmatpush.msra.mxu0 %v2318
  %6469 = vmatpush.msra.mxu0 %v2317
  %6470 = vmatpush.msra.mxu0 %v2316
  %6471 = vmatpush.msra.mxu0 %v2315
  %6472 = vmatpush.msra.mxu0 %v2314
  %6473 = vmatpush.msra.mxu0 %v2313
  %6474 = vmatpush.msra.mxu0 %v2312
  %6475 = vmatmul.f32.gmra.mxu0 %v6397
  %v6476 = vpop.f32.mrf.mxu0
  %v6477 = vadd.f32 %v6457, %v6476
  %6478 = vdwg.mxu0
  %s6479 = scalar_lea.vmem %s7, 8
  %6480 = vst [vmem:[%s6479] sm:$0xff] %v6477
  // Predicated region
  $region37: #{mylstm_forward.1} parent=0 // pred_check
    _
  $region38: #{mylstm_forward.1} parent=0 // pred_check_branch
    %6482 = sbr.rel (0) target = $region40
  $region39: #{mylstm_forward.1} parent=0 // pred_region
    _
  $region40: #{mylstm_forward.1} parent=0 // pred_fallthru
    _
  // Predicated region
  $region41: #{mylstm_forward.1} parent=0 // pred_check
    _
  $region42: #{mylstm_forward.1} parent=0 // pred_check_branch
    %6484 = sbr.rel (0) target = $region44
  $region43: #{mylstm_forward.1} parent=0 // pred_region
    _
  $region44: #{mylstm_forward.1} parent=0 // pred_fallthru
    _

</llo_original>
